<compile_context>
chip_gen: v5e
topology: v5e:2x2
jax: 0.10.0
libtpu: 0.0.40
codegen_flags: <defaults>
</compile_context>

<pallas_src>
import numpy as np
import jax
import jax.numpy as jnp
from jax import lax
from jax.experimental import pallas as pl
from jax.experimental.pallas import tpu as pltpu


MAX_BLOCK_B = 256   # largest batch block per grid step (used only for very large batches)


# ---------------------------------------------------------------------------
# Constant (data-independent) packing helpers
# ---------------------------------------------------------------------------

def _build_sel(nx, no, k):
    """sel[x, xo, kx] = 1 if x == xo + kx else 0."""
    s = np.zeros((nx, no, k), np.float32)
    for o in range(no):
        for kk in range(k):
            s[o + kk, o, kk] = 1.0
    return s


def _build_pool1x():
    """P1X[xo*12+c, px*12+c] = 1/3 if px == xo//3 (x-direction of AvgPool2d(3))."""
    m = np.zeros((288, 96), np.float32)
    for xo in range(24):
        for c in range(12):
            m[xo * 12 + c, (xo // 3) * 12 + c] = 1.0 / 3.0
    return m


SEL1 = _build_sel(28, 24, 5)     # (28, 24, 5)
SEL2 = _build_sel(8, 4, 5)       # (8, 4, 5)
P1X = _build_pool1x()            # (288, 96)


def _pack_params(params):
    """Repack PyTorch-style parameters into banded / pool-folded bf16 forms."""
    # conv1 banded weights: w1b[ky, x, xo*12+c] = w1[c,0,ky,x-xo] (0 <= x-xo < 5)
    w1c = params["w1"].reshape(12, 5, 5)                               # [c, ky, kx]
    w1b = jnp.einsum("xok,cyk->yxoc", SEL1, w1c).reshape(5, 28, 288)
    w1b = w1b.astype(jnp.bfloat16)                                     # (5, 28, 288)
    b1t = jnp.tile(params["b1"], 24).reshape(1, 288)

    # conv2 banded weights with the x-direction AvgPool(3) folded in:
    #   wb2[ky, px*12+c, xo2*24+c2];  w2f[ky] = P1X @ wb2[ky]  -> (288, 96)
    wb2 = jnp.einsum("xok,dcyk->yxcod", SEL2, params["w2"]).reshape(5, 96, 96)
    w2f = jnp.einsum("jp,ypq->yjq", P1X, wb2).astype(jnp.bfloat16)     # (5, 288, 96)
    b2t = jnp.tile(params["b2"], 4).reshape(1, 96)

    # AvgPool2d(2) + C-major flatten + Linear(96,48) folded into (4, 96, 48):
    #   wfc1e[y2, x2*24+c2, j] = 0.25 * Wf1[j, c2*4 + (y2//2)*2 + (x2//2)]
    wf1r = params["wf1"].reshape(48, 24, 2, 2)                         # [j, c2, py, px]
    half = jnp.array([0, 0, 1, 1])
    wfc1e = (0.25 * jnp.transpose(wf1r[:, :, half, :][:, :, :, half],
                                  (2, 3, 1, 0)).reshape(4, 96, 48)).astype(jnp.bfloat16)
    bfc1 = params["bf1"].reshape(1, 48)

    # FC2 padded to 128 lanes: zero weights + very negative bias on pad lanes so the
    # log-softmax over the padded block equals the 10-class log-softmax.
    wfc2p = jnp.zeros((48, 128), jnp.float32).at[:, :10].set(params["wf2"].T)
    wfc2p = wfc2p.astype(jnp.bfloat16)                                 # (48, 128)
    bfc2p = jnp.full((1, 128), -1e9, jnp.float32).at[:, :10].set(params["bf2"])
    return w1b, b1t, w2f, b2t, wfc1e, bfc1, wfc2p, bfc2p


# ---------------------------------------------------------------------------
# Fused Pallas kernel
# ---------------------------------------------------------------------------

def convnet_kernel(x_ref, w1_ref, b1_ref, w2_ref, b2_ref,
                   wfc1_ref, bfc1_ref, wfc2_ref, bfc2_ref, o_ref):
    bsz = x_ref.shape[1]
    m1 = 24 * bsz
    m2 = 4 * bsz

    # conv1 + bias + ReLU: 5 banded matmuls with output rows folded into M (M = 24*B).
    # h1 rows are (yo, b), lanes are xo*12 + c.
    xb = x_ref[...].astype(jnp.bfloat16)                               # (28, B, 28)
    h1 = jnp.dot(xb[0:24].reshape(m1, 28), w1_ref[0],
                 preferred_element_type=jnp.float32)
    for ky in range(1, 5):
        h1 = h1 + jnp.dot(xb[ky:ky + 24].reshape(m1, 28), w1_ref[ky],
                          preferred_element_type=jnp.float32)
    h1 = jnp.maximum(h1 + b1_ref[...], 0.0)                            # (24B, 288)

    # AvgPool2d(3): only the y-direction here (triple-row average);
    # x-direction pooling is folded into the conv2 weights.
    h1r = h1.reshape(8, 3, bsz, 288)
    h1p = ((h1r[:, 0] + h1r[:, 1] + h1r[:, 2]) * (1.0 / 3.0)).astype(jnp.bfloat16)  # (8,B,288)

    # conv2 (+ folded x-pool) + bias + ReLU: 5 banded matmuls, M = 4*B, K = 288.
    h2 = jnp.dot(h1p[0:4].reshape(m2, 288), w2_ref[0],
                 preferred_element_type=jnp.float32)
    for ky in range(1, 5):
        h2 = h2 + jnp.dot(h1p[ky:ky + 4].reshape(m2, 288), w2_ref[ky],
                          preferred_element_type=jnp.float32)
    h2 = jnp.maximum(h2 + b2_ref[...], 0.0)                            # (4B, 96), rows = y2*B+b

    # AvgPool2d(2) + C-major flatten + Linear(96,48), all folded into wfc1e.
    h2b = h2.reshape(4, bsz, 96).astype(jnp.bfloat16)
    z = jnp.dot(h2b[0], wfc1_ref[0], preferred_element_type=jnp.float32)
    for y2 in range(1, 4):
        z = z + jnp.dot(h2b[y2], wfc1_ref[y2], preferred_element_type=jnp.float32)
    z = z + bfc1_ref[...]
    a = pl.reciprocal(1.0 + jnp.exp(-z), approx=True)                  # sigmoid via EUP

    # Linear(48,10) padded to 128 lanes + log-softmax; lane-dense (B,128) store.
    logits = jnp.dot(a.astype(jnp.bfloat16), wfc2_ref[...],
                     preferred_element_type=jnp.float32) + bfc2_ref[...]
    m = jnp.max(logits, axis=-1, keepdims=True)
    s = logits - m
    lse = jnp.log(jnp.sum(jnp.exp(s), axis=-1, keepdims=True))
    o_ref[...] = s - lse


# ---------------------------------------------------------------------------
# Host wrapper
# ---------------------------------------------------------------------------

def _choose_block(n):
    """Pick the batch block (multiple of 16) and padded batch size."""
    n16 = ((n + 15) // 16) * 16
    if n16 <= 128:
        bb = n16                 # single grid step
    elif n16 <= 2 * MAX_BLOCK_B:
        bb = 128                 # >= 2 grid steps so both v7x TensorCores get work
    else:
        bb = MAX_BLOCK_B         # 256: amortize per-step overhead for big batches
    n_pad = ((n16 + bb - 1) // bb) * bb
    return bb, n_pad


@jax.jit
def convnet_forward(x, params):
    n = x.shape[0]
    w1b, b1t, w2f, b2t, wfc1e, bfc1, wfc2p, bfc2p = _pack_params(params)
    bb, n_pad = _choose_block(n)

    # images in [y, batch, x] layout (cheap relayout of the raw 28x28 images)
    # TODO(synk): on v5e, fuse this transpose/pad into the upstream producer (or relayout
    # in-kernel) to avoid one extra HBM pass over the input at very large batch sizes.
    xT = jnp.transpose(x.reshape(n, 28, 28), (1, 0, 2))                # (28, n, 28)
    if n_pad != n:
        xT = jnp.pad(xT, ((0, 0), (0, n_pad - n), (0, 0)))

    out = pl.pallas_call(
        convnet_kernel,
        out_shape=jax.ShapeDtypeStruct((n_pad, 128), jnp.float32),
        grid=(n_pad // bb,),
        in_specs=[
            pl.BlockSpec((28, bb, 28), lambda i: (0, i, 0)),           # images (batch-blocked)
            pl.BlockSpec((5, 28, 288), lambda i: (0, 0, 0)),           # conv1 banded weights (bf16)
            pl.BlockSpec((1, 288), lambda i: (0, 0)),                  # conv1 bias (tiled)
            pl.BlockSpec((5, 288, 96), lambda i: (0, 0, 0)),           # conv2 weights + folded x-pool (bf16)
            pl.BlockSpec((1, 96), lambda i: (0, 0)),                   # conv2 bias (tiled)
            pl.BlockSpec((4, 96, 48), lambda i: (0, 0, 0)),            # pool2+flatten+FC1 weight (bf16)
            pl.BlockSpec((1, 48), lambda i: (0, 0)),                   # FC1 bias
            pl.BlockSpec((48, 128), lambda i: (0, 0)),                 # FC2 weight, lane-padded (bf16)
            pl.BlockSpec((1, 128), lambda i: (0, 0)),                  # FC2 bias, lane-padded
        ],
        out_specs=pl.BlockSpec((bb, 128), lambda i: (i, 0)),
        compiler_params=pltpu.CompilerParams(
            dimension_semantics=("parallel",),
            vmem_limit_bytes=48 * 1024 * 1024),
    )(xT, w1b, b1t, w2f, b2t, wfc1e, bfc1, wfc2p, bfc2p)
    return out[:n, :10]


# ---------------------------------------------------------------------------
# Parameter init + pure-JAX reference (replicates the PyTorch module exactly)
# ---------------------------------------------------------------------------

def init_params(key):
    ks = jax.random.split(key, 8)

    def u(k, shape, fan_in):
        bound = 1.0 / np.sqrt(fan_in)
        return jax.random.uniform(k, shape, jnp.float32, -bound, bound)

    return dict(
        w1=u(ks[0], (12, 1, 5, 5), 25),    b1=u(ks[1], (12,), 25),
        w2=u(ks[2], (24, 12, 5, 5), 300),  b2=u(ks[3], (24,), 300),
        wf1=u(ks[4], (48, 96), 96),        bf1=u(ks[5], (48,), 96),
        wf2=u(ks[6], (10, 48), 48),        bf2=u(ks[7], (10,), 48),
    )


def reference_forward(x, params):
    n = x.shape[0]
    y = lax.conv_general_dilated(x, params["w1"], (1, 1), "VALID",
                                 dimension_numbers=("NCHW", "OIHW", "NCHW"),
                                 precision=lax.Precision.HIGHEST)
    y = jax.nn.relu(y + params["b1"][None, :, None, None])
    y = y.reshape(n, 12, 8, 3, 8, 3).mean(axis=(3, 5))                 # AvgPool2d(3)
    y = lax.conv_general_dilated(y, params["w2"], (1, 1), "VALID",
                                 dimension_numbers=("NCHW", "OIHW", "NCHW"),
                                 precision=lax.Precision.HIGHEST)
    y = jax.nn.relu(y + params["b2"][None, :, None, None])
    y = y.reshape(n, 24, 2, 2, 2, 2).mean(axis=(3, 5))                 # AvgPool2d(2)
    y = y.reshape(n, 96)                                               # Flatten (C-major)
    y = jax.nn.sigmoid(y @ params["wf1"].T + params["bf1"])
    y = y @ params["wf2"].T + params["bf2"]
    return jax.nn.log_softmax(y, axis=1)


if __name__ == "__main__":
    key = jax.random.PRNGKey(0)
    kx, kp = jax.random.split(key)
    params = init_params(kp)

    # small batch (single grid step, batch padded to 16)
    x_small = jax.random.normal(kx, (2, 1, 28, 28), jnp.float32)
    out_small = jax.block_until_ready(convnet_forward(x_small, params))
    assert out_small.shape == (2, 10), out_small.shape
    ref_small = np.asarray(reference_forward(x_small, params))
    np.testing.assert_allclose(np.asarray(out_small), ref_small, atol=2e-2, rtol=2e-2)

    # larger batch: exercises batch padding + multi-step grid (blocks of 128 per step)
    x_big = jax.random.normal(kx, (300, 1, 28, 28), jnp.float32)
    out_big = jax.block_until_ready(convnet_forward(x_big, params))
    ref_big = np.asarray(reference_forward(x_big, params))
    np.testing.assert_allclose(np.asarray(out_big), ref_big, atol=2e-2, rtol=2e-2)

    print("KERNEL_OK")
</pallas_src>

<mosaic_0001>
module attributes {stable_mosaic.version = 11 : i64} {
  func.func @convnet_kernel(%arg0: i32, %arg1: memref<28x16x28xf32, #tpu.memory_space<vmem>>, %arg2: memref<5x28x288xbf16, #tpu.memory_space<vmem>>, %arg3: memref<1x288xf32, #tpu.memory_space<vmem>>, %arg4: memref<5x288x96xbf16, #tpu.memory_space<vmem>>, %arg5: memref<1x96xf32, #tpu.memory_space<vmem>>, %arg6: memref<4x96x48xbf16, #tpu.memory_space<vmem>>, %arg7: memref<1x48xf32, #tpu.memory_space<vmem>>, %arg8: memref<48x128xbf16, #tpu.memory_space<vmem>>, %arg9: memref<1x128xf32, #tpu.memory_space<vmem>>, %arg10: memref<16x128xf32, #tpu.memory_space<vmem>>) attributes {dimension_semantics = [#tpu.dimension_semantics<parallel>], iteration_bounds = array<i64: 1>, scalar_prefetch = 0 : i64, scratch_operands = 0 : i64, tpu.core_type = #tpu.core_type<tc>, window_params = [{transform_indices = @transform_0, window_bounds = array<i64: 28, 16, 28>}, {pipeline_mode = #tpu.pipeline_mode<synchronous>, transform_indices = @transform_1, window_bounds = array<i64: 5, 28, 288>}, {pipeline_mode = #tpu.pipeline_mode<synchronous>, transform_indices = @transform_2, window_bounds = array<i64: 1, 288>}, {pipeline_mode = #tpu.pipeline_mode<synchronous>, transform_indices = @transform_3, window_bounds = array<i64: 5, 288, 96>}, {pipeline_mode = #tpu.pipeline_mode<synchronous>, transform_indices = @transform_4, window_bounds = array<i64: 1, 96>}, {pipeline_mode = #tpu.pipeline_mode<synchronous>, transform_indices = @transform_5, window_bounds = array<i64: 4, 96, 48>}, {pipeline_mode = #tpu.pipeline_mode<synchronous>, transform_indices = @transform_6, window_bounds = array<i64: 1, 48>}, {pipeline_mode = #tpu.pipeline_mode<synchronous>, transform_indices = @transform_7, window_bounds = array<i64: 48, 128>}, {pipeline_mode = #tpu.pipeline_mode<synchronous>, transform_indices = @transform_8, window_bounds = array<i64: 1, 128>}, {transform_indices = @transform_9, window_bounds = array<i64: 16, 128>}]} {
    %c0 = arith.constant 0 : index
    %c0_0 = arith.constant 0 : index
    %c0_1 = arith.constant 0 : index
    %0 = vector.load %arg1[%c0, %c0_0, %c0_1] : memref<28x16x28xf32, #tpu.memory_space<vmem>>, vector<28x16x28xf32>
    %1 = arith.truncf %0 : vector<28x16x28xf32> to vector<28x16x28xbf16>
    %2 = vector.extract_strided_slice %1 {offsets = [0, 0, 0], sizes = [24, 16, 28], strides = [1, 1, 1]} : vector<28x16x28xbf16> to vector<24x16x28xbf16>
    %3 = vector.shape_cast %2 : vector<24x16x28xbf16> to vector<384x28xbf16>
    %c0_2 = arith.constant 0 : index
    %c0_3 = arith.constant 0 : index
    %c0_4 = arith.constant 0 : index
    %4 = vector.load %arg2[%c0_2, %c0_3, %c0_4] : memref<5x28x288xbf16, #tpu.memory_space<vmem>>, vector<1x28x288xbf16>
    %5 = vector.shape_cast %4 : vector<1x28x288xbf16> to vector<28x288xbf16>
    %cst = arith.constant dense<0.000000e+00> : vector<384x288xf32>
    %6 = tpu.matmul %3, %5, %cst {dimension_numbers = #tpu.dot_dimension_numbers<[1], [0], [0], [1], [0, 0, 1, 1], [], []>} : vector<384x28xbf16>, vector<28x288xbf16>, vector<384x288xf32> -> vector<384x288xf32>
    %7 = vector.extract_strided_slice %1 {offsets = [1, 0, 0], sizes = [24, 16, 28], strides = [1, 1, 1]} : vector<28x16x28xbf16> to vector<24x16x28xbf16>
    %8 = vector.shape_cast %7 : vector<24x16x28xbf16> to vector<384x28xbf16>
    %c1 = arith.constant 1 : index
    %c0_5 = arith.constant 0 : index
    %c0_6 = arith.constant 0 : index
    %9 = vector.load %arg2[%c1, %c0_5, %c0_6] : memref<5x28x288xbf16, #tpu.memory_space<vmem>>, vector<1x28x288xbf16>
    %10 = vector.shape_cast %9 : vector<1x28x288xbf16> to vector<28x288xbf16>
    %cst_7 = arith.constant dense<0.000000e+00> : vector<384x288xf32>
    %11 = tpu.matmul %8, %10, %cst_7 {dimension_numbers = #tpu.dot_dimension_numbers<[1], [0], [0], [1], [0, 0, 1, 1], [], []>} : vector<384x28xbf16>, vector<28x288xbf16>, vector<384x288xf32> -> vector<384x288xf32>
    %12 = arith.addf %6, %11 : vector<384x288xf32>
    %13 = vector.extract_strided_slice %1 {offsets = [2, 0, 0], sizes = [24, 16, 28], strides = [1, 1, 1]} : vector<28x16x28xbf16> to vector<24x16x28xbf16>
    %14 = vector.shape_cast %13 : vector<24x16x28xbf16> to vector<384x28xbf16>
    %c2 = arith.constant 2 : index
    %c0_8 = arith.constant 0 : index
    %c0_9 = arith.constant 0 : index
    %15 = vector.load %arg2[%c2, %c0_8, %c0_9] : memref<5x28x288xbf16, #tpu.memory_space<vmem>>, vector<1x28x288xbf16>
    %16 = vector.shape_cast %15 : vector<1x28x288xbf16> to vector<28x288xbf16>
    %cst_10 = arith.constant dense<0.000000e+00> : vector<384x288xf32>
    %17 = tpu.matmul %14, %16, %cst_10 {dimension_numbers = #tpu.dot_dimension_numbers<[1], [0], [0], [1], [0, 0, 1, 1], [], []>} : vector<384x28xbf16>, vector<28x288xbf16>, vector<384x288xf32> -> vector<384x288xf32>
    %18 = arith.addf %12, %17 : vector<384x288xf32>
    %19 = vector.extract_strided_slice %1 {offsets = [3, 0, 0], sizes = [24, 16, 28], strides = [1, 1, 1]} : vector<28x16x28xbf16> to vector<24x16x28xbf16>
    %20 = vector.shape_cast %19 : vector<24x16x28xbf16> to vector<384x28xbf16>
    %c3 = arith.constant 3 : index
    %c0_11 = arith.constant 0 : index
    %c0_12 = arith.constant 0 : index
    %21 = vector.load %arg2[%c3, %c0_11, %c0_12] : memref<5x28x288xbf16, #tpu.memory_space<vmem>>, vector<1x28x288xbf16>
    %22 = vector.shape_cast %21 : vector<1x28x288xbf16> to vector<28x288xbf16>
    %cst_13 = arith.constant dense<0.000000e+00> : vector<384x288xf32>
    %23 = tpu.matmul %20, %22, %cst_13 {dimension_numbers = #tpu.dot_dimension_numbers<[1], [0], [0], [1], [0, 0, 1, 1], [], []>} : vector<384x28xbf16>, vector<28x288xbf16>, vector<384x288xf32> -> vector<384x288xf32>
    %24 = arith.addf %18, %23 : vector<384x288xf32>
    %25 = vector.extract_strided_slice %1 {offsets = [4, 0, 0], sizes = [24, 16, 28], strides = [1, 1, 1]} : vector<28x16x28xbf16> to vector<24x16x28xbf16>
    %26 = vector.shape_cast %25 : vector<24x16x28xbf16> to vector<384x28xbf16>
    %c4 = arith.constant 4 : index
    %c0_14 = arith.constant 0 : index
    %c0_15 = arith.constant 0 : index
    %27 = vector.load %arg2[%c4, %c0_14, %c0_15] : memref<5x28x288xbf16, #tpu.memory_space<vmem>>, vector<1x28x288xbf16>
    %28 = vector.shape_cast %27 : vector<1x28x288xbf16> to vector<28x288xbf16>
    %cst_16 = arith.constant dense<0.000000e+00> : vector<384x288xf32>
    %29 = tpu.matmul %26, %28, %cst_16 {dimension_numbers = #tpu.dot_dimension_numbers<[1], [0], [0], [1], [0, 0, 1, 1], [], []>} : vector<384x28xbf16>, vector<28x288xbf16>, vector<384x288xf32> -> vector<384x288xf32>
    %30 = arith.addf %24, %29 : vector<384x288xf32>
    %c0_17 = arith.constant 0 : index
    %c0_18 = arith.constant 0 : index
    %31 = vector.load %arg3[%c0_17, %c0_18] : memref<1x288xf32, #tpu.memory_space<vmem>>, vector<1x288xf32>
    %32 = vector.broadcast %31 : vector<1x288xf32> to vector<384x288xf32>
    %33 = arith.addf %30, %32 : vector<384x288xf32>
    %cst_19 = arith.constant 0.000000e+00 : f32
    %34 = vector.broadcast %cst_19 : f32 to vector<384x288xf32>
    %35 = arith.maximumf %33, %34 : vector<384x288xf32>
    %36 = vector.shape_cast %35 : vector<384x288xf32> to vector<8x3x16x288xf32>
    %37 = vector.extract_strided_slice %36 {offsets = [0, 0, 0, 0], sizes = [8, 1, 16, 288], strides = [1, 1, 1, 1]} : vector<8x3x16x288xf32> to vector<8x1x16x288xf32>
    %38 = vector.shape_cast %37 : vector<8x1x16x288xf32> to vector<8x16x288xf32>
    %39 = vector.extract_strided_slice %36 {offsets = [0, 1, 0, 0], sizes = [8, 1, 16, 288], strides = [1, 1, 1, 1]} : vector<8x3x16x288xf32> to vector<8x1x16x288xf32>
    %40 = vector.shape_cast %39 : vector<8x1x16x288xf32> to vector<8x16x288xf32>
    %41 = arith.addf %38, %40 : vector<8x16x288xf32>
    %42 = vector.extract_strided_slice %36 {offsets = [0, 2, 0, 0], sizes = [8, 1, 16, 288], strides = [1, 1, 1, 1]} : vector<8x3x16x288xf32> to vector<8x1x16x288xf32>
    %43 = vector.shape_cast %42 : vector<8x1x16x288xf32> to vector<8x16x288xf32>
    %44 = arith.addf %41, %43 : vector<8x16x288xf32>
    %cst_20 = arith.constant 0.333333343 : f32
    %45 = vector.broadcast %cst_20 : f32 to vector<8x16x288xf32>
    %46 = arith.mulf %44, %45 : vector<8x16x288xf32>
    %47 = arith.truncf %46 : vector<8x16x288xf32> to vector<8x16x288xbf16>
    %48 = vector.extract_strided_slice %47 {offsets = [0, 0, 0], sizes = [4, 16, 288], strides = [1, 1, 1]} : vector<8x16x288xbf16> to vector<4x16x288xbf16>
    %49 = vector.shape_cast %48 : vector<4x16x288xbf16> to vector<64x288xbf16>
    %c0_21 = arith.constant 0 : index
    %c0_22 = arith.constant 0 : index
    %c0_23 = arith.constant 0 : index
    %50 = vector.load %arg4[%c0_21, %c0_22, %c0_23] : memref<5x288x96xbf16, #tpu.memory_space<vmem>>, vector<1x288x96xbf16>
    %51 = vector.shape_cast %50 : vector<1x288x96xbf16> to vector<288x96xbf16>
    %cst_24 = arith.constant dense<0.000000e+00> : vector<64x96xf32>
    %52 = tpu.matmul %49, %51, %cst_24 {dimension_numbers = #tpu.dot_dimension_numbers<[1], [0], [0], [1], [0, 0, 1, 1], [], []>} : vector<64x288xbf16>, vector<288x96xbf16>, vector<64x96xf32> -> vector<64x96xf32>
    %53 = vector.extract_strided_slice %47 {offsets = [1, 0, 0], sizes = [4, 16, 288], strides = [1, 1, 1]} : vector<8x16x288xbf16> to vector<4x16x288xbf16>
    %54 = vector.shape_cast %53 : vector<4x16x288xbf16> to vector<64x288xbf16>
    %c1_25 = arith.constant 1 : index
    %c0_26 = arith.constant 0 : index
    %c0_27 = arith.constant 0 : index
    %55 = vector.load %arg4[%c1_25, %c0_26, %c0_27] : memref<5x288x96xbf16, #tpu.memory_space<vmem>>, vector<1x288x96xbf16>
    %56 = vector.shape_cast %55 : vector<1x288x96xbf16> to vector<288x96xbf16>
    %cst_28 = arith.constant dense<0.000000e+00> : vector<64x96xf32>
    %57 = tpu.matmul %54, %56, %cst_28 {dimension_numbers = #tpu.dot_dimension_numbers<[1], [0], [0], [1], [0, 0, 1, 1], [], []>} : vector<64x288xbf16>, vector<288x96xbf16>, vector<64x96xf32> -> vector<64x96xf32>
    %58 = arith.addf %52, %57 : vector<64x96xf32>
    %59 = vector.extract_strided_slice %47 {offsets = [2, 0, 0], sizes = [4, 16, 288], strides = [1, 1, 1]} : vector<8x16x288xbf16> to vector<4x16x288xbf16>
    %60 = vector.shape_cast %59 : vector<4x16x288xbf16> to vector<64x288xbf16>
    %c2_29 = arith.constant 2 : index
    %c0_30 = arith.constant 0 : index
    %c0_31 = arith.constant 0 : index
    %61 = vector.load %arg4[%c2_29, %c0_30, %c0_31] : memref<5x288x96xbf16, #tpu.memory_space<vmem>>, vector<1x288x96xbf16>
    %62 = vector.shape_cast %61 : vector<1x288x96xbf16> to vector<288x96xbf16>
    %cst_32 = arith.constant dense<0.000000e+00> : vector<64x96xf32>
    %63 = tpu.matmul %60, %62, %cst_32 {dimension_numbers = #tpu.dot_dimension_numbers<[1], [0], [0], [1], [0, 0, 1, 1], [], []>} : vector<64x288xbf16>, vector<288x96xbf16>, vector<64x96xf32> -> vector<64x96xf32>
    %64 = arith.addf %58, %63 : vector<64x96xf32>
    %65 = vector.extract_strided_slice %47 {offsets = [3, 0, 0], sizes = [4, 16, 288], strides = [1, 1, 1]} : vector<8x16x288xbf16> to vector<4x16x288xbf16>
    %66 = vector.shape_cast %65 : vector<4x16x288xbf16> to vector<64x288xbf16>
    %c3_33 = arith.constant 3 : index
    %c0_34 = arith.constant 0 : index
    %c0_35 = arith.constant 0 : index
    %67 = vector.load %arg4[%c3_33, %c0_34, %c0_35] : memref<5x288x96xbf16, #tpu.memory_space<vmem>>, vector<1x288x96xbf16>
    %68 = vector.shape_cast %67 : vector<1x288x96xbf16> to vector<288x96xbf16>
    %cst_36 = arith.constant dense<0.000000e+00> : vector<64x96xf32>
    %69 = tpu.matmul %66, %68, %cst_36 {dimension_numbers = #tpu.dot_dimension_numbers<[1], [0], [0], [1], [0, 0, 1, 1], [], []>} : vector<64x288xbf16>, vector<288x96xbf16>, vector<64x96xf32> -> vector<64x96xf32>
    %70 = arith.addf %64, %69 : vector<64x96xf32>
    %71 = vector.extract_strided_slice %47 {offsets = [4, 0, 0], sizes = [4, 16, 288], strides = [1, 1, 1]} : vector<8x16x288xbf16> to vector<4x16x288xbf16>
    %72 = vector.shape_cast %71 : vector<4x16x288xbf16> to vector<64x288xbf16>
    %c4_37 = arith.constant 4 : index
    %c0_38 = arith.constant 0 : index
    %c0_39 = arith.constant 0 : index
    %73 = vector.load %arg4[%c4_37, %c0_38, %c0_39] : memref<5x288x96xbf16, #tpu.memory_space<vmem>>, vector<1x288x96xbf16>
    %74 = vector.shape_cast %73 : vector<1x288x96xbf16> to vector<288x96xbf16>
    %cst_40 = arith.constant dense<0.000000e+00> : vector<64x96xf32>
    %75 = tpu.matmul %72, %74, %cst_40 {dimension_numbers = #tpu.dot_dimension_numbers<[1], [0], [0], [1], [0, 0, 1, 1], [], []>} : vector<64x288xbf16>, vector<288x96xbf16>, vector<64x96xf32> -> vector<64x96xf32>
    %76 = arith.addf %70, %75 : vector<64x96xf32>
    %c0_41 = arith.constant 0 : index
    %c0_42 = arith.constant 0 : index
    %77 = vector.load %arg5[%c0_41, %c0_42] : memref<1x96xf32, #tpu.memory_space<vmem>>, vector<1x96xf32>
    %78 = vector.broadcast %77 : vector<1x96xf32> to vector<64x96xf32>
    %79 = arith.addf %76, %78 : vector<64x96xf32>
    %cst_43 = arith.constant 0.000000e+00 : f32
    %80 = vector.broadcast %cst_43 : f32 to vector<64x96xf32>
    %81 = arith.maximumf %79, %80 : vector<64x96xf32>
    %82 = vector.shape_cast %81 : vector<64x96xf32> to vector<4x16x96xf32>
    %83 = arith.truncf %82 : vector<4x16x96xf32> to vector<4x16x96xbf16>
    %84 = vector.extract_strided_slice %83 {offsets = [0, 0, 0], sizes = [1, 16, 96], strides = [1, 1, 1]} : vector<4x16x96xbf16> to vector<1x16x96xbf16>
    %85 = vector.shape_cast %84 : vector<1x16x96xbf16> to vector<16x96xbf16>
    %c0_44 = arith.constant 0 : index
    %c0_45 = arith.constant 0 : index
    %c0_46 = arith.constant 0 : index
    %86 = vector.load %arg6[%c0_44, %c0_45, %c0_46] : memref<4x96x48xbf16, #tpu.memory_space<vmem>>, vector<1x96x48xbf16>
    %87 = vector.shape_cast %86 : vector<1x96x48xbf16> to vector<96x48xbf16>
    %cst_47 = arith.constant dense<0.000000e+00> : vector<16x48xf32>
    %88 = tpu.matmul %85, %87, %cst_47 {dimension_numbers = #tpu.dot_dimension_numbers<[1], [0], [0], [1], [0, 0, 1, 1], [], []>} : vector<16x96xbf16>, vector<96x48xbf16>, vector<16x48xf32> -> vector<16x48xf32>
    %89 = vector.extract_strided_slice %83 {offsets = [1, 0, 0], sizes = [1, 16, 96], strides = [1, 1, 1]} : vector<4x16x96xbf16> to vector<1x16x96xbf16>
    %90 = vector.shape_cast %89 : vector<1x16x96xbf16> to vector<16x96xbf16>
    %c1_48 = arith.constant 1 : index
    %c0_49 = arith.constant 0 : index
    %c0_50 = arith.constant 0 : index
    %91 = vector.load %arg6[%c1_48, %c0_49, %c0_50] : memref<4x96x48xbf16, #tpu.memory_space<vmem>>, vector<1x96x48xbf16>
    %92 = vector.shape_cast %91 : vector<1x96x48xbf16> to vector<96x48xbf16>
    %cst_51 = arith.constant dense<0.000000e+00> : vector<16x48xf32>
    %93 = tpu.matmul %90, %92, %cst_51 {dimension_numbers = #tpu.dot_dimension_numbers<[1], [0], [0], [1], [0, 0, 1, 1], [], []>} : vector<16x96xbf16>, vector<96x48xbf16>, vector<16x48xf32> -> vector<16x48xf32>
    %94 = arith.addf %88, %93 : vector<16x48xf32>
    %95 = vector.extract_strided_slice %83 {offsets = [2, 0, 0], sizes = [1, 16, 96], strides = [1, 1, 1]} : vector<4x16x96xbf16> to vector<1x16x96xbf16>
    %96 = vector.shape_cast %95 : vector<1x16x96xbf16> to vector<16x96xbf16>
    %c2_52 = arith.constant 2 : index
    %c0_53 = arith.constant 0 : index
    %c0_54 = arith.constant 0 : index
    %97 = vector.load %arg6[%c2_52, %c0_53, %c0_54] : memref<4x96x48xbf16, #tpu.memory_space<vmem>>, vector<1x96x48xbf16>
    %98 = vector.shape_cast %97 : vector<1x96x48xbf16> to vector<96x48xbf16>
    %cst_55 = arith.constant dense<0.000000e+00> : vector<16x48xf32>
    %99 = tpu.matmul %96, %98, %cst_55 {dimension_numbers = #tpu.dot_dimension_numbers<[1], [0], [0], [1], [0, 0, 1, 1], [], []>} : vector<16x96xbf16>, vector<96x48xbf16>, vector<16x48xf32> -> vector<16x48xf32>
    %100 = arith.addf %94, %99 : vector<16x48xf32>
    %101 = vector.extract_strided_slice %83 {offsets = [3, 0, 0], sizes = [1, 16, 96], strides = [1, 1, 1]} : vector<4x16x96xbf16> to vector<1x16x96xbf16>
    %102 = vector.shape_cast %101 : vector<1x16x96xbf16> to vector<16x96xbf16>
    %c3_56 = arith.constant 3 : index
    %c0_57 = arith.constant 0 : index
    %c0_58 = arith.constant 0 : index
    %103 = vector.load %arg6[%c3_56, %c0_57, %c0_58] : memref<4x96x48xbf16, #tpu.memory_space<vmem>>, vector<1x96x48xbf16>
    %104 = vector.shape_cast %103 : vector<1x96x48xbf16> to vector<96x48xbf16>
    %cst_59 = arith.constant dense<0.000000e+00> : vector<16x48xf32>
    %105 = tpu.matmul %102, %104, %cst_59 {dimension_numbers = #tpu.dot_dimension_numbers<[1], [0], [0], [1], [0, 0, 1, 1], [], []>} : vector<16x96xbf16>, vector<96x48xbf16>, vector<16x48xf32> -> vector<16x48xf32>
    %106 = arith.addf %100, %105 : vector<16x48xf32>
    %c0_60 = arith.constant 0 : index
    %c0_61 = arith.constant 0 : index
    %107 = vector.load %arg7[%c0_60, %c0_61] : memref<1x48xf32, #tpu.memory_space<vmem>>, vector<1x48xf32>
    %108 = vector.broadcast %107 : vector<1x48xf32> to vector<16x48xf32>
    %109 = arith.addf %106, %108 : vector<16x48xf32>
    %cst_62 = arith.constant 0.000000e+00 : f32
    %110 = vector.broadcast %cst_62 : f32 to vector<16x48xf32>
    %111 = arith.subf %110, %109 : vector<16x48xf32>
    %112 = math.exp %111 : vector<16x48xf32>
    %cst_63 = arith.constant 1.000000e+00 : f32
    %113 = vector.broadcast %cst_63 : f32 to vector<16x48xf32>
    %114 = arith.addf %113, %112 : vector<16x48xf32>
    %115 = tpu.reciprocal %114 {approx = true} : vector<16x48xf32> -> vector<16x48xf32>
    %116 = arith.truncf %115 : vector<16x48xf32> to vector<16x48xbf16>
    %c0_64 = arith.constant 0 : index
    %c0_65 = arith.constant 0 : index
    %117 = vector.load %arg8[%c0_64, %c0_65] : memref<48x128xbf16, #tpu.memory_space<vmem>>, vector<48x128xbf16>
    %cst_66 = arith.constant dense<0.000000e+00> : vector<16x128xf32>
    %118 = tpu.matmul %116, %117, %cst_66 {dimension_numbers = #tpu.dot_dimension_numbers<[1], [0], [0], [1], [0, 0, 1, 1], [], []>} : vector<16x48xbf16>, vector<48x128xbf16>, vector<16x128xf32> -> vector<16x128xf32>
    %c0_67 = arith.constant 0 : index
    %c0_68 = arith.constant 0 : index
    %119 = vector.load %arg9[%c0_67, %c0_68] : memref<1x128xf32, #tpu.memory_space<vmem>>, vector<1x128xf32>
    %120 = vector.broadcast %119 : vector<1x128xf32> to vector<16x128xf32>
    %121 = arith.addf %118, %120 : vector<16x128xf32>
    %cst_69 = arith.constant dense<0xFF800000> : vector<16xf32>
    %122 = vector.multi_reduction <maximumf>, %121, %cst_69 [1] : vector<16x128xf32> to vector<16xf32>
    %123 = vector.shape_cast %122 : vector<16xf32> to vector<16x1xf32>
    %124 = vector.broadcast %123 : vector<16x1xf32> to vector<16x128xf32>
    %125 = arith.subf %121, %124 : vector<16x128xf32>
    %126 = math.exp %125 : vector<16x128xf32>
    %cst_70 = arith.constant dense<0.000000e+00> : vector<16xf32>
    %127 = vector.multi_reduction <add>, %126, %cst_70 [1] : vector<16x128xf32> to vector<16xf32>
    %128 = vector.shape_cast %127 : vector<16xf32> to vector<16x1xf32>
    %129 = math.log %128 : vector<16x1xf32>
    %130 = vector.broadcast %129 : vector<16x1xf32> to vector<16x128xf32>
    %131 = arith.subf %125, %130 : vector<16x128xf32>
    %c0_71 = arith.constant 0 : index
    %c0_72 = arith.constant 0 : index
    %132 = vector.load %arg10[%c0_71, %c0_72] : memref<16x128xf32, #tpu.memory_space<vmem>>, vector<16x128xf32>
    tpu.vector_store %arg10[%c0_71, %c0_72], %131 {strides = array<i32>} : memref<16x128xf32, #tpu.memory_space<vmem>>, vector<16x128xf32>,
    return
  }
  func.func @transform_0(%arg0: i32) -> (i32, i32, i32) {
    %c0_i32 = arith.constant 0 : i32
    %c0_i32_0 = arith.constant 0 : i32
    %c0_i32_1 = arith.constant 0 : i32
    return %c0_i32, %arg0, %c0_i32_0 : i32, i32, i32
  }
  func.func @transform_1(%arg0: i32) -> (i32, i32, i32) {
    %c0_i32 = arith.constant 0 : i32
    %c0_i32_0 = arith.constant 0 : i32
    %c0_i32_1 = arith.constant 0 : i32
    %c0_i32_2 = arith.constant 0 : i32
    return %c0_i32, %c0_i32_0, %c0_i32_1 : i32, i32, i32
  }
  func.func @transform_2(%arg0: i32) -> (i32, i32) {
    %c0_i32 = arith.constant 0 : i32
    %c0_i32_0 = arith.constant 0 : i32
    %c0_i32_1 = arith.constant 0 : i32
    return %c0_i32, %c0_i32_0 : i32, i32
  }
  func.func @transform_3(%arg0: i32) -> (i32, i32, i32) {
    %c0_i32 = arith.constant 0 : i32
    %c0_i32_0 = arith.constant 0 : i32
    %c0_i32_1 = arith.constant 0 : i32
    %c0_i32_2 = arith.constant 0 : i32
    return %c0_i32, %c0_i32_0, %c0_i32_1 : i32, i32, i32
  }
  func.func @transform_4(%arg0: i32) -> (i32, i32) {
    %c0_i32 = arith.constant 0 : i32
    %c0_i32_0 = arith.constant 0 : i32
    %c0_i32_1 = arith.constant 0 : i32
    return %c0_i32, %c0_i32_0 : i32, i32
  }
  func.func @transform_5(%arg0: i32) -> (i32, i32, i32) {
    %c0_i32 = arith.constant 0 : i32
    %c0_i32_0 = arith.constant 0 : i32
    %c0_i32_1 = arith.constant 0 : i32
    %c0_i32_2 = arith.constant 0 : i32
    return %c0_i32, %c0_i32_0, %c0_i32_1 : i32, i32, i32
  }
  func.func @transform_6(%arg0: i32) -> (i32, i32) {
    %c0_i32 = arith.constant 0 : i32
    %c0_i32_0 = arith.constant 0 : i32
    %c0_i32_1 = arith.constant 0 : i32
    return %c0_i32, %c0_i32_0 : i32, i32
  }
  func.func @transform_7(%arg0: i32) -> (i32, i32) {
    %c0_i32 = arith.constant 0 : i32
    %c0_i32_0 = arith.constant 0 : i32
    %c0_i32_1 = arith.constant 0 : i32
    return %c0_i32, %c0_i32_0 : i32, i32
  }
  func.func @transform_8(%arg0: i32) -> (i32, i32) {
    %c0_i32 = arith.constant 0 : i32
    %c0_i32_0 = arith.constant 0 : i32
    %c0_i32_1 = arith.constant 0 : i32
    return %c0_i32, %c0_i32_0 : i32, i32
  }
  func.func @transform_9(%arg0: i32) -> (i32, i32) {
    %c0_i32 = arith.constant 0 : i32
    %c0_i32_0 = arith.constant 0 : i32
    return %arg0, %c0_i32 : i32, i32
  }
}

</mosaic_0001>

<llo_original>
// kernel: tile.13
$region0: #{tile.13}
  #allocation0 [shape = 's32[1]{0}', space=sflag, size = 0x4, scoped, tag = 'scoped memory for tile.13']
  %s0 = inlined_call_operand.vmem [shape: f32[12], index: 0, kind: input, shape index: {}]
  %s1 = inlined_call_operand.vmem [shape: f32[24,12], index: 1, kind: output, shape index: {}]
  // Predicated region
  $region2: #{tile.13} parent=0 // pred_check
    _
  $region3: #{tile.13} parent=0 // pred_check_branch
    %3 = sbr.rel (0) target = $region5
  $region4: #{tile.13} parent=0 // pred_region
    _
  $region5: #{tile.13} parent=0 // pred_fallthru
    _
  %v4 = vld [vmem:[%s0] ss:$0 sm:$0xff]
  %5 = vst [vmem:[%s1] sm:$0xff] %v4
  %s6 = scalar_lea.vmem %s1, 8
  %7 = vst [vmem:[%s6] sm:$0xff] %v4
  %s8 = scalar_lea.vmem %s1, 16
  %9 = vst [vmem:[%s8] sm:$0xff] %v4

// kernel: tile.14
$region0: #{tile.14}
  %s0 = inlined_call_operand.vmem [shape: f32[24,12], index: 0, kind: input, shape index: {}]
  %s1 = inlined_call_operand.vmem [shape: f32[1,288], index: 1, kind: output, shape index: {}]
  $region1: #{tile.14} parent=0
    #allocation0 [shape = 'u8[12288]{0}', space=vmem, size = 0x3000, scoped, tag = 'scoped mem for output reshape']
    %v2 = vld [vmem:[%s0] sm:$0x1]
    %vm3 = vcmask 97280
    %4 = vst.msk [vmem:[#allocation0] sm:$0x1] %vm3, %v2
    %s5 = scalar_lea.vmem %s0, 21
    %v6 = vld [vmem:[%s5] sm:$0x1]
    %s7 = scalar_lea.vmem %s0, 21
    %v8 = vld [vmem:[%s7] sm:$0x1]
    %vm9 = vcmask 31744
    %v10 = vsel %vm9, %v8, %v6
    %11 = vrot.lane.b32.xlu0 %v10, 124
    %v12 = vpop.permute.xlu0 %11
    %vm13 = vcmask 64512
    %s14 = scalar_lea.vmem [#allocation0], 16
    %15 = vst.msk [vmem:[%s14] sm:$0x1] %vm13, %v12
    %vm16 = vcmask 1048544
    %s17 = scalar_lea.vmem [#allocation0], 8
    %18 = vst.msk [vmem:[%s17] sm:$0x1] %vm16, %v12
    %s19 = scalar_lea.vmem %s0, 10
    %v20 = vld [vmem:[%s19] sm:$0x1]
    %s21 = scalar_lea.vmem %s0, 10
    %v22 = vld [vmem:[%s21] sm:$0x1]
    %vm23 = vcmask 64512
    %v24 = vsel %vm23, %v22, %v20
    %25 = vrot.lane.b32.xlu0 %v24, 120
    %v26 = vpop.permute.xlu0 %25
    %vm27 = vcmask 31744
    %s28 = scalar_lea.vmem [#allocation0], 8
    %29 = vst.msk [vmem:[%s28] sm:$0x1] %vm27, %v26
    %vm30 = vcmask 1048512
    %31 = vst.msk [vmem:[#allocation0] sm:$0x1] %vm30, %v26
    %s32 = scalar_lea.vmem %s0, 20
    %v33 = vld [vmem:[%s32] sm:$0x1]
    %34 = vrot.lane.b32.xlu0 %v33, 112
    %v35 = vpop.permute.xlu0 %34
    %vm36 = vcmask 1015680
    %s37 = scalar_lea.vmem [#allocation0], 8
    %38 = vst.msk [vmem:[%s37] sm:$0x1] %vm36, %v35
    %s39 = scalar_lea.vmem %s0, 9
    %v40 = vld [vmem:[%s39] sm:$0x1]
    %41 = vrot.lane.b32.xlu0 %v40, 108
    %v42 = vpop.permute.xlu0 %41
    %vm43 = vcmask 982880
    %44 = vst.msk [vmem:[#allocation0] sm:$0x1] %vm43, %v42
    %s45 = scalar_lea.vmem %s0, 19
    %v46 = vld [vmem:[%s45] sm:$0x1]
    %47 = vrot.lane.b32.xlu0 %v46, 100
    %v48 = vpop.permute.xlu0 %47
    %vm49 = vcmask 917280
    %s50 = scalar_lea.vmem [#allocation0], 8
    %51 = vst.msk [vmem:[%s50] sm:$0x1] %vm49, %v48
    %s52 = scalar_lea.vmem %s0, 8
    %v53 = vld [vmem:[%s52] sm:$0x1]
    %54 = vrot.lane.b32.xlu0 %v53, 96
    %v55 = vpop.permute.xlu0 %54
    %vm56 = vcmask 884480
    %57 = vst.msk [vmem:[#allocation0] sm:$0x1] %vm56, %v55
    %s58 = scalar_lea.vmem %s0, 18
    %v59 = vld [vmem:[%s58] sm:$0x1]
    %60 = vrot.lane.b32.xlu0 %v59, 88
    %v61 = vpop.permute.xlu0 %60
    %vm62 = vcmask 818880
    %s63 = scalar_lea.vmem [#allocation0], 8
    %64 = vst.msk [vmem:[%s63] sm:$0x1] %vm62, %v61
    %s65 = scalar_lea.vmem %s0, 7
    %v66 = vld [vmem:[%s65] sm:$0x1]
    %67 = vrot.lane.b32.xlu0 %v66, 84
    %v68 = vpop.permute.xlu0 %67
    %vm69 = vcmask 786080
    %70 = vst.msk [vmem:[#allocation0] sm:$0x1] %vm69, %v68
    %s71 = scalar_lea.vmem %s0, 17
    %v72 = vld [vmem:[%s71] sm:$0x1]
    %73 = vrot.lane.b32.xlu0 %v72, 76
    %v74 = vpop.permute.xlu0 %73
    %vm75 = vcmask 720480
    %s76 = scalar_lea.vmem [#allocation0], 8
    %77 = vst.msk [vmem:[%s76] sm:$0x1] %vm75, %v74
    %s78 = scalar_lea.vmem %s0, 6
    %v79 = vld [vmem:[%s78] sm:$0x1]
    %80 = vrot.lane.b32.xlu0 %v79, 72
    %v81 = vpop.permute.xlu0 %80
    %vm82 = vcmask 687680
    %83 = vst.msk [vmem:[#allocation0] sm:$0x1] %vm82, %v81
    %s84 = scalar_lea.vmem %s0, 16
    %v85 = vld [vmem:[%s84] sm:$0x1]
    %86 = vrot.lane.b32.xlu0 %v85, 64
    %v87 = vpop.permute.xlu0 %86
    %vm88 = vcmask 622080
    %s89 = scalar_lea.vmem [#allocation0], 8
    %90 = vst.msk [vmem:[%s89] sm:$0x1] %vm88, %v87
    %s91 = scalar_lea.vmem %s0, 5
    %v92 = vld [vmem:[%s91] sm:$0x1]
    %93 = vrot.lane.b32.xlu0 %v92, 60
    %v94 = vpop.permute.xlu0 %93
    %vm95 = vcmask 589280
    %96 = vst.msk [vmem:[#allocation0] sm:$0x1] %vm95, %v94
    %s97 = scalar_lea.vmem %s0, 15
    %v98 = vld [vmem:[%s97] sm:$0x1]
    %99 = vrot.lane.b32.xlu0 %v98, 52
    %v100 = vpop.permute.xlu0 %99
    %vm101 = vcmask 523680
    %s102 = scalar_lea.vmem [#allocation0], 8
    %103 = vst.msk [vmem:[%s102] sm:$0x1] %vm101, %v100
    %s104 = scalar_lea.vmem %s0, 4
    %v105 = vld [vmem:[%s104] sm:$0x1]
    %106 = vrot.lane.b32.xlu0 %v105, 48
    %v107 = vpop.permute.xlu0 %106
    %vm108 = vcmask 490880
    %109 = vst.msk [vmem:[#allocation0] sm:$0x1] %vm108, %v107
    %s110 = scalar_lea.vmem %s0, 14
    %v111 = vld [vmem:[%s110] sm:$0x1]
    %112 = vrot.lane.b32.xlu0 %v111, 40
    %v113 = vpop.permute.xlu0 %112
    %vm114 = vcmask 425280
    %s115 = scalar_lea.vmem [#allocation0], 8
    %116 = vst.msk [vmem:[%s115] sm:$0x1] %vm114, %v113
    %s117 = scalar_lea.vmem %s0, 3
    %v118 = vld [vmem:[%s117] sm:$0x1]
    %119 = vrot.lane.b32.xlu0 %v118, 36
    %v120 = vpop.permute.xlu0 %119
    %vm121 = vcmask 392480
    %122 = vst.msk [vmem:[#allocation0] sm:$0x1] %vm121, %v120
    %s123 = scalar_lea.vmem %s0, 13
    %v124 = vld [vmem:[%s123] sm:$0x1]
    %125 = vrot.lane.b32.xlu0 %v124, 28
    %v126 = vpop.permute.xlu0 %125
    %vm127 = vcmask 326880
    %s128 = scalar_lea.vmem [#allocation0], 8
    %129 = vst.msk [vmem:[%s128] sm:$0x1] %vm127, %v126
    %s130 = scalar_lea.vmem %s0, 2
    %v131 = vld [vmem:[%s130] sm:$0x1]
    %132 = vrot.lane.b32.xlu0 %v131, 24
    %v133 = vpop.permute.xlu0 %132
    %vm134 = vcmask 294080
    %135 = vst.msk [vmem:[#allocation0] sm:$0x1] %vm134, %v133
    %s136 = scalar_lea.vmem %s0, 23
    %v137 = vld [vmem:[%s136] sm:$0x1]
    %138 = vrot.lane.b32.xlu0 %v137, 20
    %v139 = vpop.permute.xlu0 %138
    %vm140 = vcmask 261280
    %s141 = scalar_lea.vmem [#allocation0], 16
    %142 = vst.msk [vmem:[%s141] sm:$0x1] %vm140, %v139
    %s143 = scalar_lea.vmem %s0, 12
    %v144 = vld [vmem:[%s143] sm:$0x1]
    %145 = vrot.lane.b32.xlu0 %v144, 16
    %v146 = vpop.permute.xlu0 %145
    %vm147 = vcmask 228480
    %s148 = scalar_lea.vmem [#allocation0], 8
    %149 = vst.msk [vmem:[%s148] sm:$0x1] %vm147, %v146
    %s150 = scalar_lea.vmem %s0, 1
    %v151 = vld [vmem:[%s150] sm:$0x1]
    %152 = vrot.lane.b32.xlu0 %v151, 12
    %v153 = vpop.permute.xlu0 %152
    %vm154 = vcmask 195680
    %155 = vst.msk [vmem:[#allocation0] sm:$0x1] %vm154, %v153
    %s156 = scalar_lea.vmem %s0, 22
    %v157 = vld [vmem:[%s156] sm:$0x1]
    %158 = vrot.lane.b32.xlu0 %v157, 8
    %v159 = vpop.permute.xlu0 %158
    %vm160 = vcmask 162880
    %s161 = scalar_lea.vmem [#allocation0], 16
    %162 = vst.msk [vmem:[%s161] sm:$0x1] %vm160, %v159
    %s163 = scalar_lea.vmem %s0, 11
    %v164 = vld [vmem:[%s163] sm:$0x1]
    %165 = vrot.lane.b32.xlu0 %v164, 4
    %v166 = vpop.permute.xlu0 %165
    %vm167 = vcmask 130080
    %s168 = scalar_lea.vmem [#allocation0], 8
    %169 = vst.msk [vmem:[%s168] sm:$0x1] %vm167, %v166
    %s171 = ssub.s32 2, 1
    %v172 = vld [vmem:[#allocation0] sm:%s171]
    %s174 = ssub.s32 2, 1
    %175 = vst [vmem:[%s1] sm:%s174] %v172
    %s176 = scalar_lea.vmem [#allocation0], 8
    %v177 = vld [vmem:[%s176] sm:%s171]
    %s179 = ssub.s32 2, 1
    %s180 = scalar_lea.vmem %s1, 1
    %181 = vst [vmem:[%s180] sm:%s179] %v177
    %s182 = scalar_lea.vmem [#allocation0], 16
    %v183 = vld [vmem:[%s182] sm:%s171]
    %s185 = ssub.s32 2, 1
    %s186 = scalar_lea.vmem %s1, 2
    %187 = vst [vmem:[%s186] sm:%s185] %v183

// kernel: tile.18
$region0: #{tile.18}
  #allocation0 [shape = 's32[1]{0}', space=sflag, size = 0x4, scoped, tag = 'scoped memory for tile.18']
  %s0 = inlined_call_operand.vmem [shape: f32[24], index: 0, kind: input, shape index: {}]
  %s1 = inlined_call_operand.vmem [shape: f32[4,24], index: 1, kind: output, shape index: {}]
  // Predicated region
  $region2: #{tile.18} parent=0 // pred_check
    _
  $region3: #{tile.18} parent=0 // pred_check_branch
    %3 = sbr.rel (0) target = $region5
  $region4: #{tile.18} parent=0 // pred_region
    _
  $region5: #{tile.18} parent=0 // pred_fallthru
    _
  %v4 = vld [vmem:[%s0] ss:$0 sm:$0xff]
  %5 = vst [vmem:[%s1] sm:$0xf] %v4

// kernel: tile.19
$region0: #{tile.19}
  %s0 = inlined_call_operand.vmem [shape: f32[4,24], index: 0, kind: input, shape index: {}]
  %s1 = inlined_call_operand.vmem [shape: f32[1,96], index: 1, kind: output, shape index: {}]
  $region1: #{tile.19} parent=0
    #allocation0 [shape = 'u8[4096]{0}', space=vmem, size = 0x1000, scoped, tag = 'scoped mem for output reshape']
    #allocation1 [shape = 'u8[4096]{0}', space=vmem, size = 0x1000, scoped, tag = 'scoped mem for input reshape']
    %s3 = ssub.s32 16, 1
    %v4 = vld [vmem:[%s0] sm:%s3]
    %5 = vst [vmem:[#allocation1] sm:%s3] %v4
    %v6 = vld [vmem:[#allocation1] sm:$0x1]
    %vm7 = vcmask 195584
    %8 = vst.msk [vmem:[#allocation0] sm:$0x1] %vm7, %v6
    %s9 = scalar_lea.vmem [#allocation1], 3
    %v10 = vld [vmem:[%s9] sm:$0x1]
    %11 = vrot.lane.b32.xlu0 %v10, 72
    %v12 = vpop.permute.xlu0 %11
    %vm13 = vcmask 785984
    %14 = vst.msk [vmem:[#allocation0] sm:$0x1] %vm13, %v12
    %s15 = scalar_lea.vmem [#allocation1], 2
    %v16 = vld [vmem:[%s15] sm:$0x1]
    %17 = vrot.lane.b32.xlu0 %v16, 48
    %v18 = vpop.permute.xlu0 %17
    %vm19 = vcmask 589184
    %20 = vst.msk [vmem:[#allocation0] sm:$0x1] %vm19, %v18
    %s21 = scalar_lea.vmem [#allocation1], 1
    %v22 = vld [vmem:[%s21] sm:$0x1]
    %23 = vrot.lane.b32.xlu0 %v22, 24
    %v24 = vpop.permute.xlu0 %23
    %vm25 = vcmask 392384
    %26 = vst.msk [vmem:[#allocation0] sm:$0x1] %vm25, %v24
    %s28 = ssub.s32 2, 1
    %v29 = vld [vmem:[#allocation0] sm:%s28]
    %s31 = ssub.s32 2, 1
    %32 = vst [vmem:[%s1] sm:%s31] %v29

// kernel: convnet_forward.1
$region0: #{convnet_forward.1}
  #allocation0 [shape = 'u32[]', space=smem, size = 0x4, offset = 0x4, fixed_abs, tag = 'smem constant byte address 0x4 - core index']
  #allocation1 [shape = 'u32[72,128]{1,0:T(1,128)}', space=vmem, size = 0x9000, scoped, tag = 'internal scratch']
  %s0 = inlined_call_operand.vmem [shape: f32[28,16,28], index: 0, kind: input, shape index: {}]
  %s1 = inlined_call_operand.vmem [shape: bf16[5,28,288], index: 1, kind: input, shape index: {}]
  %s2 = inlined_call_operand.vmem [shape: f32[1,288], index: 2, kind: input, shape index: {}]
  %s3 = inlined_call_operand.vmem [shape: bf16[5,288,96], index: 3, kind: input, shape index: {}]
  %s4 = inlined_call_operand.vmem [shape: f32[1,96], index: 4, kind: input, shape index: {}]
  %s5 = inlined_call_operand.vmem [shape: bf16[4,96,48], index: 5, kind: input, shape index: {}]
  %s6 = inlined_call_operand.vmem [shape: f32[1,48], index: 6, kind: input, shape index: {}]
  %s7 = inlined_call_operand.vmem [shape: bf16[48,128], index: 7, kind: input, shape index: {}]
  %s8 = inlined_call_operand.vmem [shape: f32[1,128], index: 8, kind: input, shape index: {}]
  %s9 = inlined_call_operand.vmem [shape: f32[16,128], index: 9, kind: output, shape index: {}]
  %s10 = sld [smem:[#allocation0]]
  $region46: #{convnet_forward.1} parent=0
    _
  %s12 = ssub.s32 1, %s10
  %s13 = scalar_select 0, %s12, %s10
  // Predicated region
  $region2: #{convnet_forward.1} parent=0 // pred_check
    _
  $region3: #{convnet_forward.1} parent=0 // pred_check_branch
    %15 = sbr.rel (0) target = $region5
  $region4: #{convnet_forward.1} parent=0 // pred_region
    _
  $region5: #{convnet_forward.1} parent=0 // pred_fallthru
    _
  // Predicated region
  $region6: #{convnet_forward.1} parent=0 // pred_check
    _
  $region7: #{convnet_forward.1} parent=0 // pred_check_branch
    %17 = sbr.rel (0) target = $region9
  $region8: #{convnet_forward.1} parent=0 // pred_region
    _
  $region9: #{convnet_forward.1} parent=0 // pred_fallthru
    _
  // Predicated region
  $region10: #{convnet_forward.1} parent=0 // pred_check
    _
  $region11: #{convnet_forward.1} parent=0 // pred_check_branch
    %19 = sbr.rel (0) target = $region13
  $region12: #{convnet_forward.1} parent=0 // pred_region
    _
  $region13: #{convnet_forward.1} parent=0 // pred_fallthru
    _
  // Predicated region
  $region14: #{convnet_forward.1} parent=0 // pred_check
    _
  $region15: #{convnet_forward.1} parent=0 // pred_check_branch
    %21 = sbr.rel (0) target = $region17
  $region16: #{convnet_forward.1} parent=0 // pred_region
    _
  $region17: #{convnet_forward.1} parent=0 // pred_fallthru
    _
  // Predicated region
  $region18: #{convnet_forward.1} parent=0 // pred_check
    _
  $region19: #{convnet_forward.1} parent=0 // pred_check_branch
    %23 = sbr.rel (0) target = $region21
  $region20: #{convnet_forward.1} parent=0 // pred_region
    _
  $region21: #{convnet_forward.1} parent=0 // pred_fallthru
    _
  // Predicated region
  $region22: #{convnet_forward.1} parent=0 // pred_check
    _
  $region23: #{convnet_forward.1} parent=0 // pred_check_branch
    %25 = sbr.rel (0) target = $region25
  $region24: #{convnet_forward.1} parent=0 // pred_region
    _
  $region25: #{convnet_forward.1} parent=0 // pred_fallthru
    _
  // Predicated region
  $region26: #{convnet_forward.1} parent=0 // pred_check
    _
  $region27: #{convnet_forward.1} parent=0 // pred_check_branch
    %27 = sbr.rel (0) target = $region29
  $region28: #{convnet_forward.1} parent=0 // pred_region
    _
  $region29: #{convnet_forward.1} parent=0 // pred_fallthru
    _
  // Predicated region
  $region30: #{convnet_forward.1} parent=0 // pred_check
    _
  $region31: #{convnet_forward.1} parent=0 // pred_check_branch
    %29 = sbr.rel (0) target = $region33
  $region32: #{convnet_forward.1} parent=0 // pred_region
    _
  $region33: #{convnet_forward.1} parent=0 // pred_fallthru
    _
  // Predicated region
  $region34: #{convnet_forward.1} parent=0 // pred_check
    _
  $region35: #{convnet_forward.1} parent=0 // pred_check_branch
    %31 = sbr.rel (0) target = $region37
  $region36: #{convnet_forward.1} parent=0 // pred_region
    _
  $region37: #{convnet_forward.1} parent=0 // pred_fallthru
    _
  %v33 = vld [vmem:[%s0] sm:$0xff]
  %v34 = vld [vmem:[%s0 + $0x8] sm:$0xff]
  %v35 = vld [vmem:[%s0 + $0x10] sm:$0xff]
  %v36 = vld [vmem:[%s0 + $0x18] sm:$0xff]
  %v37 = vld [vmem:[%s0 + $0x20] sm:$0xff]
  %v38 = vld [vmem:[%s0 + $0x28] sm:$0xff]
  %v39 = vld [vmem:[%s0 + $0x30] sm:$0xff]
  %v40 = vld [vmem:[%s0 + $0x38] sm:$0xff]
  %v41 = vld [vmem:[%s0 + $0x40] sm:$0xff]
  %v42 = vld [vmem:[%s0 + $0x48] sm:$0xff]
  %v43 = vld [vmem:[%s0 + $0x50] sm:$0xff]
  %v44 = vld [vmem:[%s0 + $0x58] sm:$0xff]
  %v45 = vld [vmem:[%s0 + $0x60] sm:$0xff]
  %v46 = vld [vmem:[%s0 + $0x68] sm:$0xff]
  %v47 = vld [vmem:[%s0 + $0x70] sm:$0xff]
  %v48 = vld [vmem:[%s0 + $0x78] sm:$0xff]
  %v49 = vld [vmem:[%s0 + $0x80] sm:$0xff]
  %v50 = vld [vmem:[%s0 + $0x88] sm:$0xff]
  %v51 = vld [vmem:[%s0 + $0x90] sm:$0xff]
  %v52 = vld [vmem:[%s0 + $0x98] sm:$0xff]
  %v53 = vld [vmem:[%s0 + $0xa0] sm:$0xff]
  %v54 = vld [vmem:[%s0 + $0xa8] sm:$0xff]
  %v55 = vld [vmem:[%s0 + $0xb0] sm:$0xff]
  %v56 = vld [vmem:[%s0 + $0xb8] sm:$0xff]
  %v57 = vld [vmem:[%s0 + $0xc0] sm:$0xff]
  %v58 = vld [vmem:[%s0 + $0xc8] sm:$0xff]
  %v59 = vld [vmem:[%s0 + $0xd0] sm:$0xff]
  %v60 = vld [vmem:[%s0 + $0xd8] sm:$0xff]
  %v61 = vld [vmem:[%s0 + $0xe0] sm:$0xff]
  %v62 = vld [vmem:[%s0 + $0xe8] sm:$0xff]
  %v63 = vld [vmem:[%s0 + $0xf0] sm:$0xff]
  %v64 = vld [vmem:[%s0 + $0xf8] sm:$0xff]
  %v65 = vld [vmem:[%s0 + $0x100] sm:$0xff]
  %v66 = vld [vmem:[%s0 + $0x108] sm:$0xff]
  %v67 = vld [vmem:[%s0 + $0x110] sm:$0xff]
  %v68 = vld [vmem:[%s0 + $0x118] sm:$0xff]
  %v69 = vld [vmem:[%s0 + $0x120] sm:$0xff]
  %v70 = vld [vmem:[%s0 + $0x128] sm:$0xff]
  %v71 = vld [vmem:[%s0 + $0x130] sm:$0xff]
  %v72 = vld [vmem:[%s0 + $0x138] sm:$0xff]
  %v73 = vld [vmem:[%s0 + $0x140] sm:$0xff]
  %v74 = vld [vmem:[%s0 + $0x148] sm:$0xff]
  %v75 = vld [vmem:[%s0 + $0x150] sm:$0xff]
  %v76 = vld [vmem:[%s0 + $0x158] sm:$0xff]
  %v77 = vld [vmem:[%s0 + $0x160] sm:$0xff]
  %v78 = vld [vmem:[%s0 + $0x168] sm:$0xff]
  %v79 = vld [vmem:[%s0 + $0x170] sm:$0xff]
  %v80 = vld [vmem:[%s0 + $0x178] sm:$0xff]
  %v81 = vld [vmem:[%s0 + $0x180] sm:$0xff]
  %v82 = vld [vmem:[%s0 + $0x188] sm:$0xff]
  %v83 = vld [vmem:[%s0 + $0x190] sm:$0xff]
  %v84 = vld [vmem:[%s0 + $0x198] sm:$0xff]
  %v85 = vld [vmem:[%s0 + $0x1a0] sm:$0xff]
  %v86 = vld [vmem:[%s0 + $0x1a8] sm:$0xff]
  %v87 = vld [vmem:[%s0 + $0x1b0] sm:$0xff]
  %v88 = vld [vmem:[%s0 + $0x1b8] sm:$0xff]
  %v89 = vpack.c.bf16 %v33, %v33
  %v90 = vpack.c.bf16 %v34, %v34
  %v91 = vpack.c.bf16 %v35, %v35
  %v92 = vpack.c.bf16 %v36, %v36
  %v93 = vpack.c.bf16 %v37, %v37
  %v94 = vpack.c.bf16 %v38, %v38
  %v95 = vpack.c.bf16 %v39, %v39
  %v96 = vpack.c.bf16 %v40, %v40
  %v97 = vpack.c.bf16 %v41, %v41
  %v98 = vpack.c.bf16 %v42, %v42
  %v99 = vpack.c.bf16 %v43, %v43
  %v100 = vpack.c.bf16 %v44, %v44
  %v101 = vpack.c.bf16 %v45, %v45
  %v102 = vpack.c.bf16 %v46, %v46
  %v103 = vpack.c.bf16 %v47, %v47
  %v104 = vpack.c.bf16 %v48, %v48
  %v105 = vpack.c.bf16 %v49, %v49
  %v106 = vpack.c.bf16 %v50, %v50
  %v107 = vpack.c.bf16 %v51, %v51
  %v108 = vpack.c.bf16 %v52, %v52
  %v109 = vpack.c.bf16 %v53, %v53
  %v110 = vpack.c.bf16 %v54, %v54
  %v111 = vpack.c.bf16 %v55, %v55
  %v112 = vpack.c.bf16 %v56, %v56
  %v113 = vpack.c.bf16 %v57, %v57
  %v114 = vpack.c.bf16 %v58, %v58
  %v115 = vpack.c.bf16 %v59, %v59
  %v116 = vpack.c.bf16 %v60, %v60
  %v117 = vpack.c.bf16 %v61, %v61
  %v118 = vpack.c.bf16 %v62, %v62
  %v119 = vpack.c.bf16 %v63, %v63
  %v120 = vpack.c.bf16 %v64, %v64
  %v121 = vpack.c.bf16 %v65, %v65
  %v122 = vpack.c.bf16 %v66, %v66
  %v123 = vpack.c.bf16 %v67, %v67
  %v124 = vpack.c.bf16 %v68, %v68
  %v125 = vpack.c.bf16 %v69, %v69
  %v126 = vpack.c.bf16 %v70, %v70
  %v127 = vpack.c.bf16 %v71, %v71
  %v128 = vpack.c.bf16 %v72, %v72
  %v129 = vpack.c.bf16 %v73, %v73
  %v130 = vpack.c.bf16 %v74, %v74
  %v131 = vpack.c.bf16 %v75, %v75
  %v132 = vpack.c.bf16 %v76, %v76
  %v133 = vpack.c.bf16 %v77, %v77
  %v134 = vpack.c.bf16 %v78, %v78
  %v135 = vpack.c.bf16 %v79, %v79
  %v136 = vpack.c.bf16 %v80, %v80
  %v137 = vpack.c.bf16 %v81, %v81
  %v138 = vpack.c.bf16 %v82, %v82
  %v139 = vpack.c.bf16 %v83, %v83
  %v140 = vpack.c.bf16 %v84, %v84
  %v141 = vpack.c.bf16 %v85, %v85
  %v142 = vpack.c.bf16 %v86, %v86
  %v143 = vpack.c.bf16 %v87, %v87
  %v144 = vpack.c.bf16 %v88, %v88
  %v145 = vld [vmem:[%s1] sm:$0xff]
  %v146 = vld [vmem:[%s1 + $0x8] sm:$0xf]
  %v147 = vld [vmem:[%s1 + $0xc] sm:$0xff]
  %v148 = vld [vmem:[%s1 + $0x14] sm:$0xf]
  %v149 = vld [vmem:[%s1 + $0x18] sm:$0xff]
  %v150 = vld [vmem:[%s1 + $0x20] sm:$0xf]
  %v151 = vld [vmem:[%s1 + $0x24] sm:$0x33]
  %v152 = vld [vmem:[%s1 + $0x2c] sm:$0x3]
  %s153 = scalar_lea.vmem %s1, 48
  %v154 = vld [vmem:[%s153] sm:$0xff]
  %v155 = vld [vmem:[%s153 + $0x8] sm:$0xf]
  %v156 = vld [vmem:[%s153 + $0xc] sm:$0xff]
  %v157 = vld [vmem:[%s153 + $0x14] sm:$0xf]
  %v158 = vld [vmem:[%s153 + $0x18] sm:$0xff]
  %v159 = vld [vmem:[%s153 + $0x20] sm:$0xf]
  %v160 = vld [vmem:[%s153 + $0x24] sm:$0x33]
  %v161 = vld [vmem:[%s153 + $0x2c] sm:$0x3]
  %v210 = vunpack.c.l.b16 %v91
  %v211 = vunpack.c.l.b16 %v92
  %v212 = vunpack.c.l.b16 %v93
  %v213 = vunpack.c.l.b16 %v94
  %v214 = vunpack.c.l.b16 %v95
  %v215 = vunpack.c.l.b16 %v96
  %v216 = vunpack.c.l.b16 %v97
  %v217 = vunpack.c.l.b16 %v98
  %v218 = vunpack.c.l.b16 %v99
  %v219 = vunpack.c.l.b16 %v100
  %v220 = vunpack.c.l.b16 %v101
  %v221 = vunpack.c.l.b16 %v102
  %v222 = vunpack.c.l.b16 %v103
  %v223 = vunpack.c.l.b16 %v104
  %v224 = vunpack.c.l.b16 %v105
  %v225 = vunpack.c.l.b16 %v106
  %v226 = vunpack.c.l.b16 %v107
  %v227 = vunpack.c.l.b16 %v108
  %v228 = vunpack.c.l.b16 %v109
  %v229 = vunpack.c.l.b16 %v110
  %v230 = vunpack.c.l.b16 %v111
  %v231 = vunpack.c.l.b16 %v112
  %v232 = vunpack.c.l.b16 %v113
  %v233 = vunpack.c.l.b16 %v114
  %v234 = vunpack.c.l.b16 %v115
  %v235 = vunpack.c.l.b16 %v116
  %v236 = vunpack.c.l.b16 %v117
  %v237 = vunpack.c.l.b16 %v118
  %v238 = vunpack.c.l.b16 %v119
  %v239 = vunpack.c.l.b16 %v120
  %v240 = vunpack.c.l.b16 %v121
  %v241 = vunpack.c.l.b16 %v122
  %v242 = vunpack.c.l.b16 %v123
  %v243 = vunpack.c.l.b16 %v124
  %v244 = vunpack.c.l.b16 %v125
  %v245 = vunpack.c.l.b16 %v126
  %v246 = vunpack.c.l.b16 %v127
  %v247 = vunpack.c.l.b16 %v128
  %v248 = vunpack.c.l.b16 %v129
  %v249 = vunpack.c.l.b16 %v130
  %v250 = vunpack.c.l.b16 %v131
  %v251 = vunpack.c.l.b16 %v132
  %v252 = vunpack.c.l.b16 %v133
  %v253 = vunpack.c.l.b16 %v134
  %v254 = vunpack.c.l.b16 %v135
  %v255 = vunpack.c.l.b16 %v136
  %v256 = vunpack.c.l.b16 %v137
  %v257 = vunpack.c.l.b16 %v138
  %v258 = vpack.c.b16 %v211, %v210
  %v259 = vpack.c.b16 %v213, %v212
  %v260 = vpack.c.b16 %v215, %v214
  %v261 = vpack.c.b16 %v217, %v216
  %v262 = vpack.c.b16 %v219, %v218
  %v263 = vpack.c.b16 %v221, %v220
  %v264 = vpack.c.b16 %v223, %v222
  %v265 = vpack.c.b16 %v225, %v224
  %v266 = vpack.c.b16 %v227, %v226
  %v267 = vpack.c.b16 %v229, %v228
  %v268 = vpack.c.b16 %v231, %v230
  %v269 = vpack.c.b16 %v233, %v232
  %v270 = vpack.c.b16 %v235, %v234
  %v271 = vpack.c.b16 %v237, %v236
  %v272 = vpack.c.b16 %v239, %v238
  %v273 = vpack.c.b16 %v241, %v240
  %v274 = vpack.c.b16 %v243, %v242
  %v275 = vpack.c.b16 %v245, %v244
  %v276 = vpack.c.b16 %v247, %v246
  %v277 = vpack.c.b16 %v249, %v248
  %v278 = vpack.c.b16 %v251, %v250
  %v279 = vpack.c.b16 %v253, %v252
  %v280 = vpack.c.b16 %v255, %v254
  %v281 = vpack.c.b16 %v257, %v256
  %v290 = vunpack.c.l.b16 %v154
  %v291 = vunpack.c.h.b16 %v154
  %v292 = vunpack.c.l.b16 %v155
  %v293 = vunpack.c.l.b16 %v156
  %v294 = vunpack.c.h.b16 %v156
  %v295 = vunpack.c.l.b16 %v157
  %v296 = vunpack.c.l.b16 %v158
  %v297 = vunpack.c.h.b16 %v158
  %v298 = vunpack.c.l.b16 %v159
  %v299 = vunpack.c.l.b16 %v160
  %v300 = vunpack.c.h.b16 %v160
  %v301 = vunpack.c.l.b16 %v161
  %v302 = vpack.c.b16 %v293, %v290
  %v303 = vpack.c.b16 %v294, %v291
  %v304 = vpack.c.b16 %v295, %v292
  %v305 = vpack.c.b16 %v299, %v296
  %v306 = vpack.c.b16 %v300, %v297
  %v307 = vpack.c.b16 %v301, %v298
  %vm311 = vcmask 228352
  %v313 = vsel %vm311, %v258, 0
  %v316 = vsel %vm311, %v259, 0
  %v319 = vsel %vm311, %v260, 0
  %v322 = vsel %vm311, %v261, 0
  %v325 = vsel %vm311, %v262, 0
  %v328 = vsel %vm311, %v263, 0
  %v331 = vsel %vm311, %v264, 0
  %v334 = vsel %vm311, %v265, 0
  %v337 = vsel %vm311, %v266, 0
  %v340 = vsel %vm311, %v267, 0
  %v343 = vsel %vm311, %v268, 0
  %v346 = vsel %vm311, %v269, 0
  %v349 = vsel %vm311, %v270, 0
  %v352 = vsel %vm311, %v271, 0
  %v355 = vsel %vm311, %v272, 0
  %v358 = vsel %vm311, %v273, 0
  %v361 = vsel %vm311, %v274, 0
  %v364 = vsel %vm311, %v275, 0
  %v367 = vsel %vm311, %v276, 0
  %v370 = vsel %vm311, %v277, 0
  %v373 = vsel %vm311, %v278, 0
  %v376 = vsel %vm311, %v279, 0
  %v379 = vsel %vm311, %v280, 0
  %v382 = vsel %vm311, %v281, 0
  %vm384 = vcmask 1045504
  %v386 = vsel %vm384, %v305, 0
  %v389 = vsel %vm384, %v306, 0
  %v392 = vsel %vm384, %v307, 0
  %394 = vmatpush.bf16.msra.mxu0 0
  %395 = vmatpush.bf16.msra.mxu0 0
  %396 = vmatpush.bf16.msra.mxu0 0
  %397 = vmatpush.bf16.msra.mxu0 0
  %398 = vmatpush.bf16.msra.mxu0 0
  %399 = vmatpush.bf16.msra.mxu0 0
  %400 = vmatpush.bf16.msra.mxu0 %v386
  %401 = vmatpush.bf16.msra.mxu0 %v302
  %402 = vmatmul.bf16.gmra.mxu0 %v313
  %v403 = vpop.f32.mrf.mxu0
  %v404 = vadd.f32 0.0, %v403
  %v405 = vpop.f32.mrf.mxu0
  %v406 = vadd.f32 0.0, %v405
  %407 = vmatmul.bf16.gmra.mxu0 %v316
  %v408 = vpop.f32.mrf.mxu0
  %v409 = vadd.f32 0.0, %v408
  %v410 = vpop.f32.mrf.mxu0
  %v411 = vadd.f32 0.0, %v410
  %412 = vmatmul.bf16.gmra.mxu0 %v319
  %v413 = vpop.f32.mrf.mxu0
  %v414 = vadd.f32 0.0, %v413
  %v415 = vpop.f32.mrf.mxu0
  %v416 = vadd.f32 0.0, %v415
  %417 = vmatmul.bf16.gmra.mxu0 %v322
  %v418 = vpop.f32.mrf.mxu0
  %v419 = vadd.f32 0.0, %v418
  %v420 = vpop.f32.mrf.mxu0
  %v421 = vadd.f32 0.0, %v420
  %422 = vmatmul.bf16.gmra.mxu0 %v325
  %v423 = vpop.f32.mrf.mxu0
  %v424 = vadd.f32 0.0, %v423
  %v425 = vpop.f32.mrf.mxu0
  %v426 = vadd.f32 0.0, %v425
  %427 = vmatmul.bf16.gmra.mxu0 %v328
  %v428 = vpop.f32.mrf.mxu0
  %v429 = vadd.f32 0.0, %v428
  %v430 = vpop.f32.mrf.mxu0
  %v431 = vadd.f32 0.0, %v430
  %432 = vmatmul.bf16.gmra.mxu0 %v331
  %v433 = vpop.f32.mrf.mxu0
  %v434 = vadd.f32 0.0, %v433
  %v435 = vpop.f32.mrf.mxu0
  %v436 = vadd.f32 0.0, %v435
  %437 = vmatmul.bf16.gmra.mxu0 %v334
  %v438 = vpop.f32.mrf.mxu0
  %v439 = vadd.f32 0.0, %v438
  %v440 = vpop.f32.mrf.mxu0
  %v441 = vadd.f32 0.0, %v440
  %442 = vmatmul.bf16.gmra.mxu0 %v337
  %v443 = vpop.f32.mrf.mxu0
  %v444 = vadd.f32 0.0, %v443
  %v445 = vpop.f32.mrf.mxu0
  %v446 = vadd.f32 0.0, %v445
  %447 = vmatmul.bf16.gmra.mxu0 %v340
  %v448 = vpop.f32.mrf.mxu0
  %v449 = vadd.f32 0.0, %v448
  %v450 = vpop.f32.mrf.mxu0
  %v451 = vadd.f32 0.0, %v450
  %452 = vmatmul.bf16.gmra.mxu0 %v343
  %v453 = vpop.f32.mrf.mxu0
  %v454 = vadd.f32 0.0, %v453
  %v455 = vpop.f32.mrf.mxu0
  %v456 = vadd.f32 0.0, %v455
  %457 = vmatmul.bf16.gmra.mxu0 %v346
  %v458 = vpop.f32.mrf.mxu0
  %v459 = vadd.f32 0.0, %v458
  %v460 = vpop.f32.mrf.mxu0
  %v461 = vadd.f32 0.0, %v460
  %462 = vmatmul.bf16.gmra.mxu0 %v349
  %v463 = vpop.f32.mrf.mxu0
  %v464 = vadd.f32 0.0, %v463
  %v465 = vpop.f32.mrf.mxu0
  %v466 = vadd.f32 0.0, %v465
  %467 = vmatmul.bf16.gmra.mxu0 %v352
  %v468 = vpop.f32.mrf.mxu0
  %v469 = vadd.f32 0.0, %v468
  %v470 = vpop.f32.mrf.mxu0
  %v471 = vadd.f32 0.0, %v470
  %472 = vmatmul.bf16.gmra.mxu0 %v355
  %v473 = vpop.f32.mrf.mxu0
  %v474 = vadd.f32 0.0, %v473
  %v475 = vpop.f32.mrf.mxu0
  %v476 = vadd.f32 0.0, %v475
  %477 = vmatmul.bf16.gmra.mxu0 %v358
  %v478 = vpop.f32.mrf.mxu0
  %v479 = vadd.f32 0.0, %v478
  %v480 = vpop.f32.mrf.mxu0
  %v481 = vadd.f32 0.0, %v480
  %482 = vmatmul.bf16.gmra.mxu0 %v361
  %v483 = vpop.f32.mrf.mxu0
  %v484 = vadd.f32 0.0, %v483
  %v485 = vpop.f32.mrf.mxu0
  %v486 = vadd.f32 0.0, %v485
  %487 = vmatmul.bf16.gmra.mxu0 %v364
  %v488 = vpop.f32.mrf.mxu0
  %v489 = vadd.f32 0.0, %v488
  %v490 = vpop.f32.mrf.mxu0
  %v491 = vadd.f32 0.0, %v490
  %492 = vmatmul.bf16.gmra.mxu0 %v367
  %v493 = vpop.f32.mrf.mxu0
  %v494 = vadd.f32 0.0, %v493
  %v495 = vpop.f32.mrf.mxu0
  %v496 = vadd.f32 0.0, %v495
  %497 = vmatmul.bf16.gmra.mxu0 %v370
  %v498 = vpop.f32.mrf.mxu0
  %v499 = vadd.f32 0.0, %v498
  %v500 = vpop.f32.mrf.mxu0
  %v501 = vadd.f32 0.0, %v500
  %502 = vmatmul.bf16.gmra.mxu0 %v373
  %v503 = vpop.f32.mrf.mxu0
  %v504 = vadd.f32 0.0, %v503
  %v505 = vpop.f32.mrf.mxu0
  %v506 = vadd.f32 0.0, %v505
  %507 = vmatmul.bf16.gmra.mxu0 %v376
  %v508 = vpop.f32.mrf.mxu0
  %v509 = vadd.f32 0.0, %v508
  %v510 = vpop.f32.mrf.mxu0
  %v511 = vadd.f32 0.0, %v510
  %512 = vmatmul.bf16.gmra.mxu0 %v379
  %v513 = vpop.f32.mrf.mxu0
  %v514 = vadd.f32 0.0, %v513
  %v515 = vpop.f32.mrf.mxu0
  %v516 = vadd.f32 0.0, %v515
  %517 = vmatmul.bf16.gmra.mxu0 %v382
  %v518 = vpop.f32.mrf.mxu0
  %v519 = vadd.f32 0.0, %v518
  %v520 = vpop.f32.mrf.mxu0
  %v521 = vadd.f32 0.0, %v520
  %522 = vdwg.mxu0
  %523 = vmatpush.bf16.msra.mxu0 0
  %524 = vmatpush.bf16.msra.mxu0 0
  %525 = vmatpush.bf16.msra.mxu0 0
  %526 = vmatpush.bf16.msra.mxu0 0
  %527 = vmatpush.bf16.msra.mxu0 0
  %528 = vmatpush.bf16.msra.mxu0 0
  %529 = vmatpush.bf16.msra.mxu0 %v389
  %530 = vmatpush.bf16.msra.mxu0 %v303
  %531 = vmatmul.bf16.gmra.mxu0 %v313
  %v532 = vpop.f32.mrf.mxu0
  %v533 = vadd.f32 0.0, %v532
  %v534 = vpop.f32.mrf.mxu0
  %v535 = vadd.f32 0.0, %v534
  %536 = vmatmul.bf16.gmra.mxu0 %v316
  %v537 = vpop.f32.mrf.mxu0
  %v538 = vadd.f32 0.0, %v537
  %v539 = vpop.f32.mrf.mxu0
  %v540 = vadd.f32 0.0, %v539
  %541 = vmatmul.bf16.gmra.mxu0 %v319
  %v542 = vpop.f32.mrf.mxu0
  %v543 = vadd.f32 0.0, %v542
  %v544 = vpop.f32.mrf.mxu0
  %v545 = vadd.f32 0.0, %v544
  %546 = vmatmul.bf16.gmra.mxu0 %v322
  %v547 = vpop.f32.mrf.mxu0
  %v548 = vadd.f32 0.0, %v547
  %v549 = vpop.f32.mrf.mxu0
  %v550 = vadd.f32 0.0, %v549
  %551 = vmatmul.bf16.gmra.mxu0 %v325
  %v552 = vpop.f32.mrf.mxu0
  %v553 = vadd.f32 0.0, %v552
  %v554 = vpop.f32.mrf.mxu0
  %v555 = vadd.f32 0.0, %v554
  %556 = vmatmul.bf16.gmra.mxu0 %v328
  %v557 = vpop.f32.mrf.mxu0
  %v558 = vadd.f32 0.0, %v557
  %v559 = vpop.f32.mrf.mxu0
  %v560 = vadd.f32 0.0, %v559
  %561 = vmatmul.bf16.gmra.mxu0 %v331
  %v562 = vpop.f32.mrf.mxu0
  %v563 = vadd.f32 0.0, %v562
  %v564 = vpop.f32.mrf.mxu0
  %v565 = vadd.f32 0.0, %v564
  %566 = vmatmul.bf16.gmra.mxu0 %v334
  %v567 = vpop.f32.mrf.mxu0
  %v568 = vadd.f32 0.0, %v567
  %v569 = vpop.f32.mrf.mxu0
  %v570 = vadd.f32 0.0, %v569
  %571 = vmatmul.bf16.gmra.mxu0 %v337
  %v572 = vpop.f32.mrf.mxu0
  %v573 = vadd.f32 0.0, %v572
  %v574 = vpop.f32.mrf.mxu0
  %v575 = vadd.f32 0.0, %v574
  %576 = vmatmul.bf16.gmra.mxu0 %v340
  %v577 = vpop.f32.mrf.mxu0
  %v578 = vadd.f32 0.0, %v577
  %v579 = vpop.f32.mrf.mxu0
  %v580 = vadd.f32 0.0, %v579
  %581 = vmatmul.bf16.gmra.mxu0 %v343
  %v582 = vpop.f32.mrf.mxu0
  %v583 = vadd.f32 0.0, %v582
  %v584 = vpop.f32.mrf.mxu0
  %v585 = vadd.f32 0.0, %v584
  %586 = vmatmul.bf16.gmra.mxu0 %v346
  %v587 = vpop.f32.mrf.mxu0
  %v588 = vadd.f32 0.0, %v587
  %v589 = vpop.f32.mrf.mxu0
  %v590 = vadd.f32 0.0, %v589
  %591 = vmatmul.bf16.gmra.mxu0 %v349
  %v592 = vpop.f32.mrf.mxu0
  %v593 = vadd.f32 0.0, %v592
  %v594 = vpop.f32.mrf.mxu0
  %v595 = vadd.f32 0.0, %v594
  %596 = vmatmul.bf16.gmra.mxu0 %v352
  %v597 = vpop.f32.mrf.mxu0
  %v598 = vadd.f32 0.0, %v597
  %v599 = vpop.f32.mrf.mxu0
  %v600 = vadd.f32 0.0, %v599
  %601 = vmatmul.bf16.gmra.mxu0 %v355
  %v602 = vpop.f32.mrf.mxu0
  %v603 = vadd.f32 0.0, %v602
  %v604 = vpop.f32.mrf.mxu0
  %v605 = vadd.f32 0.0, %v604
  %606 = vmatmul.bf16.gmra.mxu0 %v358
  %v607 = vpop.f32.mrf.mxu0
  %v608 = vadd.f32 0.0, %v607
  %v609 = vpop.f32.mrf.mxu0
  %v610 = vadd.f32 0.0, %v609
  %611 = vmatmul.bf16.gmra.mxu0 %v361
  %v612 = vpop.f32.mrf.mxu0
  %v613 = vadd.f32 0.0, %v612
  %v614 = vpop.f32.mrf.mxu0
  %v615 = vadd.f32 0.0, %v614
  %616 = vmatmul.bf16.gmra.mxu0 %v364
  %v617 = vpop.f32.mrf.mxu0
  %v618 = vadd.f32 0.0, %v617
  %v619 = vpop.f32.mrf.mxu0
  %v620 = vadd.f32 0.0, %v619
  %621 = vmatmul.bf16.gmra.mxu0 %v367
  %v622 = vpop.f32.mrf.mxu0
  %v623 = vadd.f32 0.0, %v622
  %v624 = vpop.f32.mrf.mxu0
  %v625 = vadd.f32 0.0, %v624
  %626 = vmatmul.bf16.gmra.mxu0 %v370
  %v627 = vpop.f32.mrf.mxu0
  %v628 = vadd.f32 0.0, %v627
  %v629 = vpop.f32.mrf.mxu0
  %v630 = vadd.f32 0.0, %v629
  %631 = vmatmul.bf16.gmra.mxu0 %v373
  %v632 = vpop.f32.mrf.mxu0
  %v633 = vadd.f32 0.0, %v632
  %v634 = vpop.f32.mrf.mxu0
  %v635 = vadd.f32 0.0, %v634
  %636 = vmatmul.bf16.gmra.mxu0 %v376
  %v637 = vpop.f32.mrf.mxu0
  %v638 = vadd.f32 0.0, %v637
  %v639 = vpop.f32.mrf.mxu0
  %v640 = vadd.f32 0.0, %v639
  %641 = vmatmul.bf16.gmra.mxu0 %v379
  %v642 = vpop.f32.mrf.mxu0
  %v643 = vadd.f32 0.0, %v642
  %v644 = vpop.f32.mrf.mxu0
  %v645 = vadd.f32 0.0, %v644
  %646 = vmatmul.bf16.gmra.mxu0 %v382
  %v647 = vpop.f32.mrf.mxu0
  %v648 = vadd.f32 0.0, %v647
  %v649 = vpop.f32.mrf.mxu0
  %v650 = vadd.f32 0.0, %v649
  %651 = vdwg.mxu0
  %652 = vmatpush.bf16.msra.mxu0 0
  %653 = vmatpush.bf16.msra.mxu0 0
  %654 = vmatpush.bf16.msra.mxu0 0
  %655 = vmatpush.bf16.msra.mxu0 0
  %656 = vmatpush.bf16.msra.mxu0 0
  %657 = vmatpush.bf16.msra.mxu0 0
  %658 = vmatpush.bf16.msra.mxu0 %v392
  %659 = vmatpush.bf16.msra.mxu0 %v304
  %660 = vmatmul.bf16.gmra.mxu0 %v313
  %v661 = vpop.f32.mrf.mxu0
  %v662 = vadd.f32 0.0, %v661
  %v663 = vpop.f32.mrf.mxu0
  %v664 = vadd.f32 0.0, %v663
  %665 = vmatmul.bf16.gmra.mxu0 %v316
  %v666 = vpop.f32.mrf.mxu0
  %v667 = vadd.f32 0.0, %v666
  %v668 = vpop.f32.mrf.mxu0
  %v669 = vadd.f32 0.0, %v668
  %670 = vmatmul.bf16.gmra.mxu0 %v319
  %v671 = vpop.f32.mrf.mxu0
  %v672 = vadd.f32 0.0, %v671
  %v673 = vpop.f32.mrf.mxu0
  %v674 = vadd.f32 0.0, %v673
  %675 = vmatmul.bf16.gmra.mxu0 %v322
  %v676 = vpop.f32.mrf.mxu0
  %v677 = vadd.f32 0.0, %v676
  %v678 = vpop.f32.mrf.mxu0
  %v679 = vadd.f32 0.0, %v678
  %680 = vmatmul.bf16.gmra.mxu0 %v325
  %v681 = vpop.f32.mrf.mxu0
  %v682 = vadd.f32 0.0, %v681
  %v683 = vpop.f32.mrf.mxu0
  %v684 = vadd.f32 0.0, %v683
  %685 = vmatmul.bf16.gmra.mxu0 %v328
  %v686 = vpop.f32.mrf.mxu0
  %v687 = vadd.f32 0.0, %v686
  %v688 = vpop.f32.mrf.mxu0
  %v689 = vadd.f32 0.0, %v688
  %690 = vmatmul.bf16.gmra.mxu0 %v331
  %v691 = vpop.f32.mrf.mxu0
  %v692 = vadd.f32 0.0, %v691
  %v693 = vpop.f32.mrf.mxu0
  %v694 = vadd.f32 0.0, %v693
  %695 = vmatmul.bf16.gmra.mxu0 %v334
  %v696 = vpop.f32.mrf.mxu0
  %v697 = vadd.f32 0.0, %v696
  %v698 = vpop.f32.mrf.mxu0
  %v699 = vadd.f32 0.0, %v698
  %700 = vmatmul.bf16.gmra.mxu0 %v337
  %v701 = vpop.f32.mrf.mxu0
  %v702 = vadd.f32 0.0, %v701
  %v703 = vpop.f32.mrf.mxu0
  %v704 = vadd.f32 0.0, %v703
  %705 = vmatmul.bf16.gmra.mxu0 %v340
  %v706 = vpop.f32.mrf.mxu0
  %v707 = vadd.f32 0.0, %v706
  %v708 = vpop.f32.mrf.mxu0
  %v709 = vadd.f32 0.0, %v708
  %710 = vmatmul.bf16.gmra.mxu0 %v343
  %v711 = vpop.f32.mrf.mxu0
  %v712 = vadd.f32 0.0, %v711
  %v713 = vpop.f32.mrf.mxu0
  %v714 = vadd.f32 0.0, %v713
  %715 = vmatmul.bf16.gmra.mxu0 %v346
  %v716 = vpop.f32.mrf.mxu0
  %v717 = vadd.f32 0.0, %v716
  %v718 = vpop.f32.mrf.mxu0
  %v719 = vadd.f32 0.0, %v718
  %720 = vmatmul.bf16.gmra.mxu0 %v349
  %v721 = vpop.f32.mrf.mxu0
  %v722 = vadd.f32 0.0, %v721
  %v723 = vpop.f32.mrf.mxu0
  %v724 = vadd.f32 0.0, %v723
  %725 = vmatmul.bf16.gmra.mxu0 %v352
  %v726 = vpop.f32.mrf.mxu0
  %v727 = vadd.f32 0.0, %v726
  %v728 = vpop.f32.mrf.mxu0
  %v729 = vadd.f32 0.0, %v728
  %730 = vmatmul.bf16.gmra.mxu0 %v355
  %v731 = vpop.f32.mrf.mxu0
  %v732 = vadd.f32 0.0, %v731
  %v733 = vpop.f32.mrf.mxu0
  %v734 = vadd.f32 0.0, %v733
  %735 = vmatmul.bf16.gmra.mxu0 %v358
  %v736 = vpop.f32.mrf.mxu0
  %v737 = vadd.f32 0.0, %v736
  %v738 = vpop.f32.mrf.mxu0
  %v739 = vadd.f32 0.0, %v738
  %740 = vmatmul.bf16.gmra.mxu0 %v361
  %v741 = vpop.f32.mrf.mxu0
  %v742 = vadd.f32 0.0, %v741
  %v743 = vpop.f32.mrf.mxu0
  %v744 = vadd.f32 0.0, %v743
  %745 = vmatmul.bf16.gmra.mxu0 %v364
  %v746 = vpop.f32.mrf.mxu0
  %v747 = vadd.f32 0.0, %v746
  %v748 = vpop.f32.mrf.mxu0
  %v749 = vadd.f32 0.0, %v748
  %750 = vmatmul.bf16.gmra.mxu0 %v367
  %v751 = vpop.f32.mrf.mxu0
  %v752 = vadd.f32 0.0, %v751
  %v753 = vpop.f32.mrf.mxu0
  %v754 = vadd.f32 0.0, %v753
  %755 = vmatmul.bf16.gmra.mxu0 %v370
  %v756 = vpop.f32.mrf.mxu0
  %v757 = vadd.f32 0.0, %v756
  %v758 = vpop.f32.mrf.mxu0
  %v759 = vadd.f32 0.0, %v758
  %760 = vmatmul.bf16.gmra.mxu0 %v373
  %v761 = vpop.f32.mrf.mxu0
  %v762 = vadd.f32 0.0, %v761
  %v763 = vpop.f32.mrf.mxu0
  %v764 = vadd.f32 0.0, %v763
  %765 = vmatmul.bf16.gmra.mxu0 %v376
  %v766 = vpop.f32.mrf.mxu0
  %v767 = vadd.f32 0.0, %v766
  %v768 = vpop.f32.mrf.mxu0
  %v769 = vadd.f32 0.0, %v768
  %770 = vmatmul.bf16.gmra.mxu0 %v379
  %v771 = vpop.f32.mrf.mxu0
  %v772 = vadd.f32 0.0, %v771
  %v773 = vpop.f32.mrf.mxu0
  %v774 = vadd.f32 0.0, %v773
  %775 = vmatmul.bf16.gmra.mxu0 %v382
  %v776 = vpop.f32.mrf.mxu0
  %v777 = vadd.f32 0.0, %v776
  %v778 = vpop.f32.mrf.mxu0
  %v779 = vadd.f32 0.0, %v778
  %780 = vdwg.mxu0
  %v783 = vunpack.c.l.b16 %v89
  %v784 = vunpack.c.l.b16 %v90
  %v785 = vpack.c.b16 %v784, %v783
  %v794 = vunpack.c.l.b16 %v145
  %v795 = vunpack.c.h.b16 %v145
  %v796 = vunpack.c.l.b16 %v146
  %v797 = vunpack.c.l.b16 %v147
  %v798 = vunpack.c.h.b16 %v147
  %v799 = vunpack.c.l.b16 %v148
  %v800 = vunpack.c.l.b16 %v149
  %v801 = vunpack.c.h.b16 %v149
  %v802 = vunpack.c.l.b16 %v150
  %v803 = vunpack.c.l.b16 %v151
  %v804 = vunpack.c.h.b16 %v151
  %v805 = vunpack.c.l.b16 %v152
  %v806 = vpack.c.b16 %v797, %v794
  %v807 = vpack.c.b16 %v798, %v795
  %v808 = vpack.c.b16 %v799, %v796
  %v809 = vpack.c.b16 %v803, %v800
  %v810 = vpack.c.b16 %v804, %v801
  %v811 = vpack.c.b16 %v805, %v802
  %v816 = vsel %vm311, %v785, 0
  %v819 = vsel %vm384, %v809, 0
  %v822 = vsel %vm384, %v810, 0
  %v825 = vsel %vm384, %v811, 0
  %827 = vmatpush.bf16.msra.mxu0 0
  %828 = vmatpush.bf16.msra.mxu0 0
  %829 = vmatpush.bf16.msra.mxu0 0
  %830 = vmatpush.bf16.msra.mxu0 0
  %831 = vmatpush.bf16.msra.mxu0 0
  %832 = vmatpush.bf16.msra.mxu0 0
  %833 = vmatpush.bf16.msra.mxu0 %v819
  %834 = vmatpush.bf16.msra.mxu0 %v806
  %835 = vmatmul.bf16.gmra.mxu0 %v816
  %v836 = vpop.f32.mrf.mxu0
  %v837 = vadd.f32 %v404, %v836
  %v838 = vpop.f32.mrf.mxu0
  %v839 = vadd.f32 %v406, %v838
  %840 = vmatmul.bf16.gmra.mxu0 %v313
  %v841 = vpop.f32.mrf.mxu0
  %v842 = vadd.f32 %v409, %v841
  %v843 = vpop.f32.mrf.mxu0
  %v844 = vadd.f32 %v411, %v843
  %845 = vmatmul.bf16.gmra.mxu0 %v316
  %v846 = vpop.f32.mrf.mxu0
  %v847 = vadd.f32 %v414, %v846
  %v848 = vpop.f32.mrf.mxu0
  %v849 = vadd.f32 %v416, %v848
  %850 = vmatmul.bf16.gmra.mxu0 %v319
  %v851 = vpop.f32.mrf.mxu0
  %v852 = vadd.f32 %v419, %v851
  %v853 = vpop.f32.mrf.mxu0
  %v854 = vadd.f32 %v421, %v853
  %855 = vmatmul.bf16.gmra.mxu0 %v322
  %v856 = vpop.f32.mrf.mxu0
  %v857 = vadd.f32 %v424, %v856
  %v858 = vpop.f32.mrf.mxu0
  %v859 = vadd.f32 %v426, %v858
  %860 = vmatmul.bf16.gmra.mxu0 %v325
  %v861 = vpop.f32.mrf.mxu0
  %v862 = vadd.f32 %v429, %v861
  %v863 = vpop.f32.mrf.mxu0
  %v864 = vadd.f32 %v431, %v863
  %865 = vmatmul.bf16.gmra.mxu0 %v328
  %v866 = vpop.f32.mrf.mxu0
  %v867 = vadd.f32 %v434, %v866
  %v868 = vpop.f32.mrf.mxu0
  %v869 = vadd.f32 %v436, %v868
  %870 = vmatmul.bf16.gmra.mxu0 %v331
  %v871 = vpop.f32.mrf.mxu0
  %v872 = vadd.f32 %v439, %v871
  %v873 = vpop.f32.mrf.mxu0
  %v874 = vadd.f32 %v441, %v873
  %875 = vmatmul.bf16.gmra.mxu0 %v334
  %v876 = vpop.f32.mrf.mxu0
  %v877 = vadd.f32 %v444, %v876
  %v878 = vpop.f32.mrf.mxu0
  %v879 = vadd.f32 %v446, %v878
  %880 = vmatmul.bf16.gmra.mxu0 %v337
  %v881 = vpop.f32.mrf.mxu0
  %v882 = vadd.f32 %v449, %v881
  %v883 = vpop.f32.mrf.mxu0
  %v884 = vadd.f32 %v451, %v883
  %885 = vmatmul.bf16.gmra.mxu0 %v340
  %v886 = vpop.f32.mrf.mxu0
  %v887 = vadd.f32 %v454, %v886
  %v888 = vpop.f32.mrf.mxu0
  %v889 = vadd.f32 %v456, %v888
  %890 = vmatmul.bf16.gmra.mxu0 %v343
  %v891 = vpop.f32.mrf.mxu0
  %v892 = vadd.f32 %v459, %v891
  %v893 = vpop.f32.mrf.mxu0
  %v894 = vadd.f32 %v461, %v893
  %895 = vmatmul.bf16.gmra.mxu0 %v346
  %v896 = vpop.f32.mrf.mxu0
  %v897 = vadd.f32 %v464, %v896
  %v898 = vpop.f32.mrf.mxu0
  %v899 = vadd.f32 %v466, %v898
  %900 = vmatmul.bf16.gmra.mxu0 %v349
  %v901 = vpop.f32.mrf.mxu0
  %v902 = vadd.f32 %v469, %v901
  %v903 = vpop.f32.mrf.mxu0
  %v904 = vadd.f32 %v471, %v903
  %905 = vmatmul.bf16.gmra.mxu0 %v352
  %v906 = vpop.f32.mrf.mxu0
  %v907 = vadd.f32 %v474, %v906
  %v908 = vpop.f32.mrf.mxu0
  %v909 = vadd.f32 %v476, %v908
  %910 = vmatmul.bf16.gmra.mxu0 %v355
  %v911 = vpop.f32.mrf.mxu0
  %v912 = vadd.f32 %v479, %v911
  %v913 = vpop.f32.mrf.mxu0
  %v914 = vadd.f32 %v481, %v913
  %915 = vmatmul.bf16.gmra.mxu0 %v358
  %v916 = vpop.f32.mrf.mxu0
  %v917 = vadd.f32 %v484, %v916
  %v918 = vpop.f32.mrf.mxu0
  %v919 = vadd.f32 %v486, %v918
  %920 = vmatmul.bf16.gmra.mxu0 %v361
  %v921 = vpop.f32.mrf.mxu0
  %v922 = vadd.f32 %v489, %v921
  %v923 = vpop.f32.mrf.mxu0
  %v924 = vadd.f32 %v491, %v923
  %925 = vmatmul.bf16.gmra.mxu0 %v364
  %v926 = vpop.f32.mrf.mxu0
  %v927 = vadd.f32 %v494, %v926
  %v928 = vpop.f32.mrf.mxu0
  %v929 = vadd.f32 %v496, %v928
  %930 = vmatmul.bf16.gmra.mxu0 %v367
  %v931 = vpop.f32.mrf.mxu0
  %v932 = vadd.f32 %v499, %v931
  %v933 = vpop.f32.mrf.mxu0
  %v934 = vadd.f32 %v501, %v933
  %935 = vmatmul.bf16.gmra.mxu0 %v370
  %v936 = vpop.f32.mrf.mxu0
  %v937 = vadd.f32 %v504, %v936
  %v938 = vpop.f32.mrf.mxu0
  %v939 = vadd.f32 %v506, %v938
  %940 = vmatmul.bf16.gmra.mxu0 %v373
  %v941 = vpop.f32.mrf.mxu0
  %v942 = vadd.f32 %v509, %v941
  %v943 = vpop.f32.mrf.mxu0
  %v944 = vadd.f32 %v511, %v943
  %945 = vmatmul.bf16.gmra.mxu0 %v376
  %v946 = vpop.f32.mrf.mxu0
  %v947 = vadd.f32 %v514, %v946
  %v948 = vpop.f32.mrf.mxu0
  %v949 = vadd.f32 %v516, %v948
  %950 = vmatmul.bf16.gmra.mxu0 %v379
  %v951 = vpop.f32.mrf.mxu0
  %v952 = vadd.f32 %v519, %v951
  %v953 = vpop.f32.mrf.mxu0
  %v954 = vadd.f32 %v521, %v953
  %955 = vdwg.mxu0
  %956 = vmatpush.bf16.msra.mxu0 0
  %957 = vmatpush.bf16.msra.mxu0 0
  %958 = vmatpush.bf16.msra.mxu0 0
  %959 = vmatpush.bf16.msra.mxu0 0
  %960 = vmatpush.bf16.msra.mxu0 0
  %961 = vmatpush.bf16.msra.mxu0 0
  %962 = vmatpush.bf16.msra.mxu0 %v822
  %963 = vmatpush.bf16.msra.mxu0 %v807
  %964 = vmatmul.bf16.gmra.mxu0 %v816
  %v965 = vpop.f32.mrf.mxu0
  %v966 = vadd.f32 %v533, %v965
  %v967 = vpop.f32.mrf.mxu0
  %v968 = vadd.f32 %v535, %v967
  %969 = vmatmul.bf16.gmra.mxu0 %v313
  %v970 = vpop.f32.mrf.mxu0
  %v971 = vadd.f32 %v538, %v970
  %v972 = vpop.f32.mrf.mxu0
  %v973 = vadd.f32 %v540, %v972
  %974 = vmatmul.bf16.gmra.mxu0 %v316
  %v975 = vpop.f32.mrf.mxu0
  %v976 = vadd.f32 %v543, %v975
  %v977 = vpop.f32.mrf.mxu0
  %v978 = vadd.f32 %v545, %v977
  %979 = vmatmul.bf16.gmra.mxu0 %v319
  %v980 = vpop.f32.mrf.mxu0
  %v981 = vadd.f32 %v548, %v980
  %v982 = vpop.f32.mrf.mxu0
  %v983 = vadd.f32 %v550, %v982
  %984 = vmatmul.bf16.gmra.mxu0 %v322
  %v985 = vpop.f32.mrf.mxu0
  %v986 = vadd.f32 %v553, %v985
  %v987 = vpop.f32.mrf.mxu0
  %v988 = vadd.f32 %v555, %v987
  %989 = vmatmul.bf16.gmra.mxu0 %v325
  %v990 = vpop.f32.mrf.mxu0
  %v991 = vadd.f32 %v558, %v990
  %v992 = vpop.f32.mrf.mxu0
  %v993 = vadd.f32 %v560, %v992
  %994 = vmatmul.bf16.gmra.mxu0 %v328
  %v995 = vpop.f32.mrf.mxu0
  %v996 = vadd.f32 %v563, %v995
  %v997 = vpop.f32.mrf.mxu0
  %v998 = vadd.f32 %v565, %v997
  %999 = vmatmul.bf16.gmra.mxu0 %v331
  %v1000 = vpop.f32.mrf.mxu0
  %v1001 = vadd.f32 %v568, %v1000
  %v1002 = vpop.f32.mrf.mxu0
  %v1003 = vadd.f32 %v570, %v1002
  %1004 = vmatmul.bf16.gmra.mxu0 %v334
  %v1005 = vpop.f32.mrf.mxu0
  %v1006 = vadd.f32 %v573, %v1005
  %v1007 = vpop.f32.mrf.mxu0
  %v1008 = vadd.f32 %v575, %v1007
  %1009 = vmatmul.bf16.gmra.mxu0 %v337
  %v1010 = vpop.f32.mrf.mxu0
  %v1011 = vadd.f32 %v578, %v1010
  %v1012 = vpop.f32.mrf.mxu0
  %v1013 = vadd.f32 %v580, %v1012
  %1014 = vmatmul.bf16.gmra.mxu0 %v340
  %v1015 = vpop.f32.mrf.mxu0
  %v1016 = vadd.f32 %v583, %v1015
  %v1017 = vpop.f32.mrf.mxu0
  %v1018 = vadd.f32 %v585, %v1017
  %1019 = vmatmul.bf16.gmra.mxu0 %v343
  %v1020 = vpop.f32.mrf.mxu0
  %v1021 = vadd.f32 %v588, %v1020
  %v1022 = vpop.f32.mrf.mxu0
  %v1023 = vadd.f32 %v590, %v1022
  %1024 = vmatmul.bf16.gmra.mxu0 %v346
  %v1025 = vpop.f32.mrf.mxu0
  %v1026 = vadd.f32 %v593, %v1025
  %v1027 = vpop.f32.mrf.mxu0
  %v1028 = vadd.f32 %v595, %v1027
  %1029 = vmatmul.bf16.gmra.mxu0 %v349
  %v1030 = vpop.f32.mrf.mxu0
  %v1031 = vadd.f32 %v598, %v1030
  %v1032 = vpop.f32.mrf.mxu0
  %v1033 = vadd.f32 %v600, %v1032
  %1034 = vmatmul.bf16.gmra.mxu0 %v352
  %v1035 = vpop.f32.mrf.mxu0
  %v1036 = vadd.f32 %v603, %v1035
  %v1037 = vpop.f32.mrf.mxu0
  %v1038 = vadd.f32 %v605, %v1037
  %1039 = vmatmul.bf16.gmra.mxu0 %v355
  %v1040 = vpop.f32.mrf.mxu0
  %v1041 = vadd.f32 %v608, %v1040
  %v1042 = vpop.f32.mrf.mxu0
  %v1043 = vadd.f32 %v610, %v1042
  %1044 = vmatmul.bf16.gmra.mxu0 %v358
  %v1045 = vpop.f32.mrf.mxu0
  %v1046 = vadd.f32 %v613, %v1045
  %v1047 = vpop.f32.mrf.mxu0
  %v1048 = vadd.f32 %v615, %v1047
  %1049 = vmatmul.bf16.gmra.mxu0 %v361
  %v1050 = vpop.f32.mrf.mxu0
  %v1051 = vadd.f32 %v618, %v1050
  %v1052 = vpop.f32.mrf.mxu0
  %v1053 = vadd.f32 %v620, %v1052
  %1054 = vmatmul.bf16.gmra.mxu0 %v364
  %v1055 = vpop.f32.mrf.mxu0
  %v1056 = vadd.f32 %v623, %v1055
  %v1057 = vpop.f32.mrf.mxu0
  %v1058 = vadd.f32 %v625, %v1057
  %1059 = vmatmul.bf16.gmra.mxu0 %v367
  %v1060 = vpop.f32.mrf.mxu0
  %v1061 = vadd.f32 %v628, %v1060
  %v1062 = vpop.f32.mrf.mxu0
  %v1063 = vadd.f32 %v630, %v1062
  %1064 = vmatmul.bf16.gmra.mxu0 %v370
  %v1065 = vpop.f32.mrf.mxu0
  %v1066 = vadd.f32 %v633, %v1065
  %v1067 = vpop.f32.mrf.mxu0
  %v1068 = vadd.f32 %v635, %v1067
  %1069 = vmatmul.bf16.gmra.mxu0 %v373
  %v1070 = vpop.f32.mrf.mxu0
  %v1071 = vadd.f32 %v638, %v1070
  %v1072 = vpop.f32.mrf.mxu0
  %v1073 = vadd.f32 %v640, %v1072
  %1074 = vmatmul.bf16.gmra.mxu0 %v376
  %v1075 = vpop.f32.mrf.mxu0
  %v1076 = vadd.f32 %v643, %v1075
  %v1077 = vpop.f32.mrf.mxu0
  %v1078 = vadd.f32 %v645, %v1077
  %1079 = vmatmul.bf16.gmra.mxu0 %v379
  %v1080 = vpop.f32.mrf.mxu0
  %v1081 = vadd.f32 %v648, %v1080
  %v1082 = vpop.f32.mrf.mxu0
  %v1083 = vadd.f32 %v650, %v1082
  %1084 = vdwg.mxu0
  %1085 = vmatpush.bf16.msra.mxu0 0
  %1086 = vmatpush.bf16.msra.mxu0 0
  %1087 = vmatpush.bf16.msra.mxu0 0
  %1088 = vmatpush.bf16.msra.mxu0 0
  %1089 = vmatpush.bf16.msra.mxu0 0
  %1090 = vmatpush.bf16.msra.mxu0 0
  %1091 = vmatpush.bf16.msra.mxu0 %v825
  %1092 = vmatpush.bf16.msra.mxu0 %v808
  %1093 = vmatmul.bf16.gmra.mxu0 %v816
  %v1094 = vpop.f32.mrf.mxu0
  %v1095 = vadd.f32 %v662, %v1094
  %v1096 = vpop.f32.mrf.mxu0
  %v1097 = vadd.f32 %v664, %v1096
  %1098 = vmatmul.bf16.gmra.mxu0 %v313
  %v1099 = vpop.f32.mrf.mxu0
  %v1100 = vadd.f32 %v667, %v1099
  %v1101 = vpop.f32.mrf.mxu0
  %v1102 = vadd.f32 %v669, %v1101
  %1103 = vmatmul.bf16.gmra.mxu0 %v316
  %v1104 = vpop.f32.mrf.mxu0
  %v1105 = vadd.f32 %v672, %v1104
  %v1106 = vpop.f32.mrf.mxu0
  %v1107 = vadd.f32 %v674, %v1106
  %1108 = vmatmul.bf16.gmra.mxu0 %v319
  %v1109 = vpop.f32.mrf.mxu0
  %v1110 = vadd.f32 %v677, %v1109
  %v1111 = vpop.f32.mrf.mxu0
  %v1112 = vadd.f32 %v679, %v1111
  %1113 = vmatmul.bf16.gmra.mxu0 %v322
  %v1114 = vpop.f32.mrf.mxu0
  %v1115 = vadd.f32 %v682, %v1114
  %v1116 = vpop.f32.mrf.mxu0
  %v1117 = vadd.f32 %v684, %v1116
  %1118 = vmatmul.bf16.gmra.mxu0 %v325
  %v1119 = vpop.f32.mrf.mxu0
  %v1120 = vadd.f32 %v687, %v1119
  %v1121 = vpop.f32.mrf.mxu0
  %v1122 = vadd.f32 %v689, %v1121
  %1123 = vmatmul.bf16.gmra.mxu0 %v328
  %v1124 = vpop.f32.mrf.mxu0
  %v1125 = vadd.f32 %v692, %v1124
  %v1126 = vpop.f32.mrf.mxu0
  %v1127 = vadd.f32 %v694, %v1126
  %1128 = vmatmul.bf16.gmra.mxu0 %v331
  %v1129 = vpop.f32.mrf.mxu0
  %v1130 = vadd.f32 %v697, %v1129
  %v1131 = vpop.f32.mrf.mxu0
  %v1132 = vadd.f32 %v699, %v1131
  %1133 = vmatmul.bf16.gmra.mxu0 %v334
  %v1134 = vpop.f32.mrf.mxu0
  %v1135 = vadd.f32 %v702, %v1134
  %v1136 = vpop.f32.mrf.mxu0
  %v1137 = vadd.f32 %v704, %v1136
  %1138 = vmatmul.bf16.gmra.mxu0 %v337
  %v1139 = vpop.f32.mrf.mxu0
  %v1140 = vadd.f32 %v707, %v1139
  %v1141 = vpop.f32.mrf.mxu0
  %v1142 = vadd.f32 %v709, %v1141
  %1143 = vmatmul.bf16.gmra.mxu0 %v340
  %v1144 = vpop.f32.mrf.mxu0
  %v1145 = vadd.f32 %v712, %v1144
  %v1146 = vpop.f32.mrf.mxu0
  %v1147 = vadd.f32 %v714, %v1146
  %1148 = vmatmul.bf16.gmra.mxu0 %v343
  %v1149 = vpop.f32.mrf.mxu0
  %v1150 = vadd.f32 %v717, %v1149
  %v1151 = vpop.f32.mrf.mxu0
  %v1152 = vadd.f32 %v719, %v1151
  %1153 = vmatmul.bf16.gmra.mxu0 %v346
  %v1154 = vpop.f32.mrf.mxu0
  %v1155 = vadd.f32 %v722, %v1154
  %v1156 = vpop.f32.mrf.mxu0
  %v1157 = vadd.f32 %v724, %v1156
  %1158 = vmatmul.bf16.gmra.mxu0 %v349
  %v1159 = vpop.f32.mrf.mxu0
  %v1160 = vadd.f32 %v727, %v1159
  %v1161 = vpop.f32.mrf.mxu0
  %v1162 = vadd.f32 %v729, %v1161
  %1163 = vmatmul.bf16.gmra.mxu0 %v352
  %v1164 = vpop.f32.mrf.mxu0
  %v1165 = vadd.f32 %v732, %v1164
  %v1166 = vpop.f32.mrf.mxu0
  %v1167 = vadd.f32 %v734, %v1166
  %1168 = vmatmul.bf16.gmra.mxu0 %v355
  %v1169 = vpop.f32.mrf.mxu0
  %v1170 = vadd.f32 %v737, %v1169
  %v1171 = vpop.f32.mrf.mxu0
  %v1172 = vadd.f32 %v739, %v1171
  %1173 = vmatmul.bf16.gmra.mxu0 %v358
  %v1174 = vpop.f32.mrf.mxu0
  %v1175 = vadd.f32 %v742, %v1174
  %v1176 = vpop.f32.mrf.mxu0
  %v1177 = vadd.f32 %v744, %v1176
  %1178 = vmatmul.bf16.gmra.mxu0 %v361
  %v1179 = vpop.f32.mrf.mxu0
  %v1180 = vadd.f32 %v747, %v1179
  %v1181 = vpop.f32.mrf.mxu0
  %v1182 = vadd.f32 %v749, %v1181
  %1183 = vmatmul.bf16.gmra.mxu0 %v364
  %v1184 = vpop.f32.mrf.mxu0
  %v1185 = vadd.f32 %v752, %v1184
  %v1186 = vpop.f32.mrf.mxu0
  %v1187 = vadd.f32 %v754, %v1186
  %1188 = vmatmul.bf16.gmra.mxu0 %v367
  %v1189 = vpop.f32.mrf.mxu0
  %v1190 = vadd.f32 %v757, %v1189
  %v1191 = vpop.f32.mrf.mxu0
  %v1192 = vadd.f32 %v759, %v1191
  %1193 = vmatmul.bf16.gmra.mxu0 %v370
  %v1194 = vpop.f32.mrf.mxu0
  %v1195 = vadd.f32 %v762, %v1194
  %v1196 = vpop.f32.mrf.mxu0
  %v1197 = vadd.f32 %v764, %v1196
  %1198 = vmatmul.bf16.gmra.mxu0 %v373
  %v1199 = vpop.f32.mrf.mxu0
  %v1200 = vadd.f32 %v767, %v1199
  %v1201 = vpop.f32.mrf.mxu0
  %v1202 = vadd.f32 %v769, %v1201
  %1203 = vmatmul.bf16.gmra.mxu0 %v376
  %v1204 = vpop.f32.mrf.mxu0
  %v1205 = vadd.f32 %v772, %v1204
  %v1206 = vpop.f32.mrf.mxu0
  %v1207 = vadd.f32 %v774, %v1206
  %1208 = vmatmul.bf16.gmra.mxu0 %v379
  %v1209 = vpop.f32.mrf.mxu0
  %v1210 = vadd.f32 %v777, %v1209
  %v1211 = vpop.f32.mrf.mxu0
  %v1212 = vadd.f32 %v779, %v1211
  %1213 = vdwg.mxu0
  %s1214 = scalar_lea.vmem %s1, 96
  %v1215 = vld [vmem:[%s1214] sm:$0xff]
  %v1216 = vld [vmem:[%s1214 + $0x8] sm:$0xf]
  %v1217 = vld [vmem:[%s1214 + $0xc] sm:$0xff]
  %v1218 = vld [vmem:[%s1214 + $0x14] sm:$0xf]
  %v1219 = vld [vmem:[%s1214 + $0x18] sm:$0xff]
  %v1220 = vld [vmem:[%s1214 + $0x20] sm:$0xf]
  %v1221 = vld [vmem:[%s1214 + $0x24] sm:$0x33]
  %v1222 = vld [vmem:[%s1214 + $0x2c] sm:$0x3]
  %v1225 = vunpack.c.l.b16 %v139
  %v1226 = vunpack.c.l.b16 %v140
  %v1227 = vpack.c.b16 %v1226, %v1225
  %v1236 = vunpack.c.l.b16 %v1215
  %v1237 = vunpack.c.h.b16 %v1215
  %v1238 = vunpack.c.l.b16 %v1216
  %v1239 = vunpack.c.l.b16 %v1217
  %v1240 = vunpack.c.h.b16 %v1217
  %v1241 = vunpack.c.l.b16 %v1218
  %v1242 = vunpack.c.l.b16 %v1219
  %v1243 = vunpack.c.h.b16 %v1219
  %v1244 = vunpack.c.l.b16 %v1220
  %v1245 = vunpack.c.l.b16 %v1221
  %v1246 = vunpack.c.h.b16 %v1221
  %v1247 = vunpack.c.l.b16 %v1222
  %v1248 = vpack.c.b16 %v1239, %v1236
  %v1249 = vpack.c.b16 %v1240, %v1237
  %v1250 = vpack.c.b16 %v1241, %v1238
  %v1251 = vpack.c.b16 %v1245, %v1242
  %v1252 = vpack.c.b16 %v1246, %v1243
  %v1253 = vpack.c.b16 %v1247, %v1244
  %v1258 = vsel %vm311, %v1227, 0
  %v1261 = vsel %vm384, %v1251, 0
  %v1264 = vsel %vm384, %v1252, 0
  %v1267 = vsel %vm384, %v1253, 0
  %1269 = vmatpush.bf16.msra.mxu0 0
  %1270 = vmatpush.bf16.msra.mxu0 0
  %1271 = vmatpush.bf16.msra.mxu0 0
  %1272 = vmatpush.bf16.msra.mxu0 0
  %1273 = vmatpush.bf16.msra.mxu0 0
  %1274 = vmatpush.bf16.msra.mxu0 0
  %1275 = vmatpush.bf16.msra.mxu0 %v1261
  %1276 = vmatpush.bf16.msra.mxu0 %v1248
  %1277 = vmatmul.bf16.gmra.mxu0 %v316
  %v1278 = vpop.f32.mrf.mxu0
  %v1279 = vadd.f32 0.0, %v1278
  %v1280 = vpop.f32.mrf.mxu0
  %v1281 = vadd.f32 0.0, %v1280
  %1282 = vmatmul.bf16.gmra.mxu0 %v319
  %v1283 = vpop.f32.mrf.mxu0
  %v1284 = vadd.f32 0.0, %v1283
  %v1285 = vpop.f32.mrf.mxu0
  %v1286 = vadd.f32 0.0, %v1285
  %1287 = vmatmul.bf16.gmra.mxu0 %v322
  %v1288 = vpop.f32.mrf.mxu0
  %v1289 = vadd.f32 0.0, %v1288
  %v1290 = vpop.f32.mrf.mxu0
  %v1291 = vadd.f32 0.0, %v1290
  %1292 = vmatmul.bf16.gmra.mxu0 %v325
  %v1293 = vpop.f32.mrf.mxu0
  %v1294 = vadd.f32 0.0, %v1293
  %v1295 = vpop.f32.mrf.mxu0
  %v1296 = vadd.f32 0.0, %v1295
  %1297 = vmatmul.bf16.gmra.mxu0 %v328
  %v1298 = vpop.f32.mrf.mxu0
  %v1299 = vadd.f32 0.0, %v1298
  %v1300 = vpop.f32.mrf.mxu0
  %v1301 = vadd.f32 0.0, %v1300
  %1302 = vmatmul.bf16.gmra.mxu0 %v331
  %v1303 = vpop.f32.mrf.mxu0
  %v1304 = vadd.f32 0.0, %v1303
  %v1305 = vpop.f32.mrf.mxu0
  %v1306 = vadd.f32 0.0, %v1305
  %1307 = vmatmul.bf16.gmra.mxu0 %v334
  %v1308 = vpop.f32.mrf.mxu0
  %v1309 = vadd.f32 0.0, %v1308
  %v1310 = vpop.f32.mrf.mxu0
  %v1311 = vadd.f32 0.0, %v1310
  %1312 = vmatmul.bf16.gmra.mxu0 %v337
  %v1313 = vpop.f32.mrf.mxu0
  %v1314 = vadd.f32 0.0, %v1313
  %v1315 = vpop.f32.mrf.mxu0
  %v1316 = vadd.f32 0.0, %v1315
  %1317 = vmatmul.bf16.gmra.mxu0 %v340
  %v1318 = vpop.f32.mrf.mxu0
  %v1319 = vadd.f32 0.0, %v1318
  %v1320 = vpop.f32.mrf.mxu0
  %v1321 = vadd.f32 0.0, %v1320
  %1322 = vmatmul.bf16.gmra.mxu0 %v343
  %v1323 = vpop.f32.mrf.mxu0
  %v1324 = vadd.f32 0.0, %v1323
  %v1325 = vpop.f32.mrf.mxu0
  %v1326 = vadd.f32 0.0, %v1325
  %1327 = vmatmul.bf16.gmra.mxu0 %v346
  %v1328 = vpop.f32.mrf.mxu0
  %v1329 = vadd.f32 0.0, %v1328
  %v1330 = vpop.f32.mrf.mxu0
  %v1331 = vadd.f32 0.0, %v1330
  %1332 = vmatmul.bf16.gmra.mxu0 %v349
  %v1333 = vpop.f32.mrf.mxu0
  %v1334 = vadd.f32 0.0, %v1333
  %v1335 = vpop.f32.mrf.mxu0
  %v1336 = vadd.f32 0.0, %v1335
  %1337 = vmatmul.bf16.gmra.mxu0 %v352
  %v1338 = vpop.f32.mrf.mxu0
  %v1339 = vadd.f32 0.0, %v1338
  %v1340 = vpop.f32.mrf.mxu0
  %v1341 = vadd.f32 0.0, %v1340
  %1342 = vmatmul.bf16.gmra.mxu0 %v355
  %v1343 = vpop.f32.mrf.mxu0
  %v1344 = vadd.f32 0.0, %v1343
  %v1345 = vpop.f32.mrf.mxu0
  %v1346 = vadd.f32 0.0, %v1345
  %1347 = vmatmul.bf16.gmra.mxu0 %v358
  %v1348 = vpop.f32.mrf.mxu0
  %v1349 = vadd.f32 0.0, %v1348
  %v1350 = vpop.f32.mrf.mxu0
  %v1351 = vadd.f32 0.0, %v1350
  %1352 = vmatmul.bf16.gmra.mxu0 %v361
  %v1353 = vpop.f32.mrf.mxu0
  %v1354 = vadd.f32 0.0, %v1353
  %v1355 = vpop.f32.mrf.mxu0
  %v1356 = vadd.f32 0.0, %v1355
  %1357 = vmatmul.bf16.gmra.mxu0 %v364
  %v1358 = vpop.f32.mrf.mxu0
  %v1359 = vadd.f32 0.0, %v1358
  %v1360 = vpop.f32.mrf.mxu0
  %v1361 = vadd.f32 0.0, %v1360
  %1362 = vmatmul.bf16.gmra.mxu0 %v367
  %v1363 = vpop.f32.mrf.mxu0
  %v1364 = vadd.f32 0.0, %v1363
  %v1365 = vpop.f32.mrf.mxu0
  %v1366 = vadd.f32 0.0, %v1365
  %1367 = vmatmul.bf16.gmra.mxu0 %v370
  %v1368 = vpop.f32.mrf.mxu0
  %v1369 = vadd.f32 0.0, %v1368
  %v1370 = vpop.f32.mrf.mxu0
  %v1371 = vadd.f32 0.0, %v1370
  %1372 = vmatmul.bf16.gmra.mxu0 %v373
  %v1373 = vpop.f32.mrf.mxu0
  %v1374 = vadd.f32 0.0, %v1373
  %v1375 = vpop.f32.mrf.mxu0
  %v1376 = vadd.f32 0.0, %v1375
  %1377 = vmatmul.bf16.gmra.mxu0 %v376
  %v1378 = vpop.f32.mrf.mxu0
  %v1379 = vadd.f32 0.0, %v1378
  %v1380 = vpop.f32.mrf.mxu0
  %v1381 = vadd.f32 0.0, %v1380
  %1382 = vmatmul.bf16.gmra.mxu0 %v379
  %v1383 = vpop.f32.mrf.mxu0
  %v1384 = vadd.f32 0.0, %v1383
  %v1385 = vpop.f32.mrf.mxu0
  %v1386 = vadd.f32 0.0, %v1385
  %1387 = vmatmul.bf16.gmra.mxu0 %v382
  %v1388 = vpop.f32.mrf.mxu0
  %v1389 = vadd.f32 0.0, %v1388
  %v1390 = vpop.f32.mrf.mxu0
  %v1391 = vadd.f32 0.0, %v1390
  %1392 = vmatmul.bf16.gmra.mxu0 %v1258
  %v1393 = vpop.f32.mrf.mxu0
  %v1394 = vadd.f32 0.0, %v1393
  %v1395 = vpop.f32.mrf.mxu0
  %v1396 = vadd.f32 0.0, %v1395
  %1397 = vdwg.mxu0
  %1398 = vmatpush.bf16.msra.mxu0 0
  %1399 = vmatpush.bf16.msra.mxu0 0
  %1400 = vmatpush.bf16.msra.mxu0 0
  %1401 = vmatpush.bf16.msra.mxu0 0
  %1402 = vmatpush.bf16.msra.mxu0 0
  %1403 = vmatpush.bf16.msra.mxu0 0
  %1404 = vmatpush.bf16.msra.mxu0 %v1264
  %1405 = vmatpush.bf16.msra.mxu0 %v1249
  %1406 = vmatmul.bf16.gmra.mxu0 %v316
  %v1407 = vpop.f32.mrf.mxu0
  %v1408 = vadd.f32 0.0, %v1407
  %v1409 = vpop.f32.mrf.mxu0
  %v1410 = vadd.f32 0.0, %v1409
  %1411 = vmatmul.bf16.gmra.mxu0 %v319
  %v1412 = vpop.f32.mrf.mxu0
  %v1413 = vadd.f32 0.0, %v1412
  %v1414 = vpop.f32.mrf.mxu0
  %v1415 = vadd.f32 0.0, %v1414
  %1416 = vmatmul.bf16.gmra.mxu0 %v322
  %v1417 = vpop.f32.mrf.mxu0
  %v1418 = vadd.f32 0.0, %v1417
  %v1419 = vpop.f32.mrf.mxu0
  %v1420 = vadd.f32 0.0, %v1419
  %1421 = vmatmul.bf16.gmra.mxu0 %v325
  %v1422 = vpop.f32.mrf.mxu0
  %v1423 = vadd.f32 0.0, %v1422
  %v1424 = vpop.f32.mrf.mxu0
  %v1425 = vadd.f32 0.0, %v1424
  %1426 = vmatmul.bf16.gmra.mxu0 %v328
  %v1427 = vpop.f32.mrf.mxu0
  %v1428 = vadd.f32 0.0, %v1427
  %v1429 = vpop.f32.mrf.mxu0
  %v1430 = vadd.f32 0.0, %v1429
  %1431 = vmatmul.bf16.gmra.mxu0 %v331
  %v1432 = vpop.f32.mrf.mxu0
  %v1433 = vadd.f32 0.0, %v1432
  %v1434 = vpop.f32.mrf.mxu0
  %v1435 = vadd.f32 0.0, %v1434
  %1436 = vmatmul.bf16.gmra.mxu0 %v334
  %v1437 = vpop.f32.mrf.mxu0
  %v1438 = vadd.f32 0.0, %v1437
  %v1439 = vpop.f32.mrf.mxu0
  %v1440 = vadd.f32 0.0, %v1439
  %1441 = vmatmul.bf16.gmra.mxu0 %v337
  %v1442 = vpop.f32.mrf.mxu0
  %v1443 = vadd.f32 0.0, %v1442
  %v1444 = vpop.f32.mrf.mxu0
  %v1445 = vadd.f32 0.0, %v1444
  %1446 = vmatmul.bf16.gmra.mxu0 %v340
  %v1447 = vpop.f32.mrf.mxu0
  %v1448 = vadd.f32 0.0, %v1447
  %v1449 = vpop.f32.mrf.mxu0
  %v1450 = vadd.f32 0.0, %v1449
  %1451 = vmatmul.bf16.gmra.mxu0 %v343
  %v1452 = vpop.f32.mrf.mxu0
  %v1453 = vadd.f32 0.0, %v1452
  %v1454 = vpop.f32.mrf.mxu0
  %v1455 = vadd.f32 0.0, %v1454
  %1456 = vmatmul.bf16.gmra.mxu0 %v346
  %v1457 = vpop.f32.mrf.mxu0
  %v1458 = vadd.f32 0.0, %v1457
  %v1459 = vpop.f32.mrf.mxu0
  %v1460 = vadd.f32 0.0, %v1459
  %1461 = vmatmul.bf16.gmra.mxu0 %v349
  %v1462 = vpop.f32.mrf.mxu0
  %v1463 = vadd.f32 0.0, %v1462
  %v1464 = vpop.f32.mrf.mxu0
  %v1465 = vadd.f32 0.0, %v1464
  %1466 = vmatmul.bf16.gmra.mxu0 %v352
  %v1467 = vpop.f32.mrf.mxu0
  %v1468 = vadd.f32 0.0, %v1467
  %v1469 = vpop.f32.mrf.mxu0
  %v1470 = vadd.f32 0.0, %v1469
  %1471 = vmatmul.bf16.gmra.mxu0 %v355
  %v1472 = vpop.f32.mrf.mxu0
  %v1473 = vadd.f32 0.0, %v1472
  %v1474 = vpop.f32.mrf.mxu0
  %v1475 = vadd.f32 0.0, %v1474
  %1476 = vmatmul.bf16.gmra.mxu0 %v358
  %v1477 = vpop.f32.mrf.mxu0
  %v1478 = vadd.f32 0.0, %v1477
  %v1479 = vpop.f32.mrf.mxu0
  %v1480 = vadd.f32 0.0, %v1479
  %1481 = vmatmul.bf16.gmra.mxu0 %v361
  %v1482 = vpop.f32.mrf.mxu0
  %v1483 = vadd.f32 0.0, %v1482
  %v1484 = vpop.f32.mrf.mxu0
  %v1485 = vadd.f32 0.0, %v1484
  %1486 = vmatmul.bf16.gmra.mxu0 %v364
  %v1487 = vpop.f32.mrf.mxu0
  %v1488 = vadd.f32 0.0, %v1487
  %v1489 = vpop.f32.mrf.mxu0
  %v1490 = vadd.f32 0.0, %v1489
  %1491 = vmatmul.bf16.gmra.mxu0 %v367
  %v1492 = vpop.f32.mrf.mxu0
  %v1493 = vadd.f32 0.0, %v1492
  %v1494 = vpop.f32.mrf.mxu0
  %v1495 = vadd.f32 0.0, %v1494
  %1496 = vmatmul.bf16.gmra.mxu0 %v370
  %v1497 = vpop.f32.mrf.mxu0
  %v1498 = vadd.f32 0.0, %v1497
  %v1499 = vpop.f32.mrf.mxu0
  %v1500 = vadd.f32 0.0, %v1499
  %1501 = vmatmul.bf16.gmra.mxu0 %v373
  %v1502 = vpop.f32.mrf.mxu0
  %v1503 = vadd.f32 0.0, %v1502
  %v1504 = vpop.f32.mrf.mxu0
  %v1505 = vadd.f32 0.0, %v1504
  %1506 = vmatmul.bf16.gmra.mxu0 %v376
  %v1507 = vpop.f32.mrf.mxu0
  %v1508 = vadd.f32 0.0, %v1507
  %v1509 = vpop.f32.mrf.mxu0
  %v1510 = vadd.f32 0.0, %v1509
  %1511 = vmatmul.bf16.gmra.mxu0 %v379
  %v1512 = vpop.f32.mrf.mxu0
  %v1513 = vadd.f32 0.0, %v1512
  %v1514 = vpop.f32.mrf.mxu0
  %v1515 = vadd.f32 0.0, %v1514
  %1516 = vmatmul.bf16.gmra.mxu0 %v382
  %v1517 = vpop.f32.mrf.mxu0
  %v1518 = vadd.f32 0.0, %v1517
  %v1519 = vpop.f32.mrf.mxu0
  %v1520 = vadd.f32 0.0, %v1519
  %1521 = vmatmul.bf16.gmra.mxu0 %v1258
  %v1522 = vpop.f32.mrf.mxu0
  %v1523 = vadd.f32 0.0, %v1522
  %v1524 = vpop.f32.mrf.mxu0
  %v1525 = vadd.f32 0.0, %v1524
  %1526 = vdwg.mxu0
  %1527 = vmatpush.bf16.msra.mxu0 0
  %1528 = vmatpush.bf16.msra.mxu0 0
  %1529 = vmatpush.bf16.msra.mxu0 0
  %1530 = vmatpush.bf16.msra.mxu0 0
  %1531 = vmatpush.bf16.msra.mxu0 0
  %1532 = vmatpush.bf16.msra.mxu0 0
  %1533 = vmatpush.bf16.msra.mxu0 %v1267
  %1534 = vmatpush.bf16.msra.mxu0 %v1250
  %1535 = vmatmul.bf16.gmra.mxu0 %v316
  %v1536 = vpop.f32.mrf.mxu0
  %v1537 = vadd.f32 0.0, %v1536
  %v1538 = vpop.f32.mrf.mxu0
  %v1539 = vadd.f32 0.0, %v1538
  %1540 = vmatmul.bf16.gmra.mxu0 %v319
  %v1541 = vpop.f32.mrf.mxu0
  %v1542 = vadd.f32 0.0, %v1541
  %v1543 = vpop.f32.mrf.mxu0
  %v1544 = vadd.f32 0.0, %v1543
  %1545 = vmatmul.bf16.gmra.mxu0 %v322
  %v1546 = vpop.f32.mrf.mxu0
  %v1547 = vadd.f32 0.0, %v1546
  %v1548 = vpop.f32.mrf.mxu0
  %v1549 = vadd.f32 0.0, %v1548
  %1550 = vmatmul.bf16.gmra.mxu0 %v325
  %v1551 = vpop.f32.mrf.mxu0
  %v1552 = vadd.f32 0.0, %v1551
  %v1553 = vpop.f32.mrf.mxu0
  %v1554 = vadd.f32 0.0, %v1553
  %1555 = vmatmul.bf16.gmra.mxu0 %v328
  %v1556 = vpop.f32.mrf.mxu0
  %v1557 = vadd.f32 0.0, %v1556
  %v1558 = vpop.f32.mrf.mxu0
  %v1559 = vadd.f32 0.0, %v1558
  %1560 = vmatmul.bf16.gmra.mxu0 %v331
  %v1561 = vpop.f32.mrf.mxu0
  %v1562 = vadd.f32 0.0, %v1561
  %v1563 = vpop.f32.mrf.mxu0
  %v1564 = vadd.f32 0.0, %v1563
  %1565 = vmatmul.bf16.gmra.mxu0 %v334
  %v1566 = vpop.f32.mrf.mxu0
  %v1567 = vadd.f32 0.0, %v1566
  %v1568 = vpop.f32.mrf.mxu0
  %v1569 = vadd.f32 0.0, %v1568
  %1570 = vmatmul.bf16.gmra.mxu0 %v337
  %v1571 = vpop.f32.mrf.mxu0
  %v1572 = vadd.f32 0.0, %v1571
  %v1573 = vpop.f32.mrf.mxu0
  %v1574 = vadd.f32 0.0, %v1573
  %1575 = vmatmul.bf16.gmra.mxu0 %v340
  %v1576 = vpop.f32.mrf.mxu0
  %v1577 = vadd.f32 0.0, %v1576
  %v1578 = vpop.f32.mrf.mxu0
  %v1579 = vadd.f32 0.0, %v1578
  %1580 = vmatmul.bf16.gmra.mxu0 %v343
  %v1581 = vpop.f32.mrf.mxu0
  %v1582 = vadd.f32 0.0, %v1581
  %v1583 = vpop.f32.mrf.mxu0
  %v1584 = vadd.f32 0.0, %v1583
  %1585 = vmatmul.bf16.gmra.mxu0 %v346
  %v1586 = vpop.f32.mrf.mxu0
  %v1587 = vadd.f32 0.0, %v1586
  %v1588 = vpop.f32.mrf.mxu0
  %v1589 = vadd.f32 0.0, %v1588
  %1590 = vmatmul.bf16.gmra.mxu0 %v349
  %v1591 = vpop.f32.mrf.mxu0
  %v1592 = vadd.f32 0.0, %v1591
  %v1593 = vpop.f32.mrf.mxu0
  %v1594 = vadd.f32 0.0, %v1593
  %1595 = vmatmul.bf16.gmra.mxu0 %v352
  %v1596 = vpop.f32.mrf.mxu0
  %v1597 = vadd.f32 0.0, %v1596
  %v1598 = vpop.f32.mrf.mxu0
  %v1599 = vadd.f32 0.0, %v1598
  %1600 = vmatmul.bf16.gmra.mxu0 %v355
  %v1601 = vpop.f32.mrf.mxu0
  %v1602 = vadd.f32 0.0, %v1601
  %v1603 = vpop.f32.mrf.mxu0
  %v1604 = vadd.f32 0.0, %v1603
  %1605 = vmatmul.bf16.gmra.mxu0 %v358
  %v1606 = vpop.f32.mrf.mxu0
  %v1607 = vadd.f32 0.0, %v1606
  %v1608 = vpop.f32.mrf.mxu0
  %v1609 = vadd.f32 0.0, %v1608
  %1610 = vmatmul.bf16.gmra.mxu0 %v361
  %v1611 = vpop.f32.mrf.mxu0
  %v1612 = vadd.f32 0.0, %v1611
  %v1613 = vpop.f32.mrf.mxu0
  %v1614 = vadd.f32 0.0, %v1613
  %1615 = vmatmul.bf16.gmra.mxu0 %v364
  %v1616 = vpop.f32.mrf.mxu0
  %v1617 = vadd.f32 0.0, %v1616
  %v1618 = vpop.f32.mrf.mxu0
  %v1619 = vadd.f32 0.0, %v1618
  %1620 = vmatmul.bf16.gmra.mxu0 %v367
  %v1621 = vpop.f32.mrf.mxu0
  %v1622 = vadd.f32 0.0, %v1621
  %v1623 = vpop.f32.mrf.mxu0
  %v1624 = vadd.f32 0.0, %v1623
  %1625 = vmatmul.bf16.gmra.mxu0 %v370
  %v1626 = vpop.f32.mrf.mxu0
  %v1627 = vadd.f32 0.0, %v1626
  %v1628 = vpop.f32.mrf.mxu0
  %v1629 = vadd.f32 0.0, %v1628
  %1630 = vmatmul.bf16.gmra.mxu0 %v373
  %v1631 = vpop.f32.mrf.mxu0
  %v1632 = vadd.f32 0.0, %v1631
  %v1633 = vpop.f32.mrf.mxu0
  %v1634 = vadd.f32 0.0, %v1633
  %1635 = vmatmul.bf16.gmra.mxu0 %v376
  %v1636 = vpop.f32.mrf.mxu0
  %v1637 = vadd.f32 0.0, %v1636
  %v1638 = vpop.f32.mrf.mxu0
  %v1639 = vadd.f32 0.0, %v1638
  %1640 = vmatmul.bf16.gmra.mxu0 %v379
  %v1641 = vpop.f32.mrf.mxu0
  %v1642 = vadd.f32 0.0, %v1641
  %v1643 = vpop.f32.mrf.mxu0
  %v1644 = vadd.f32 0.0, %v1643
  %1645 = vmatmul.bf16.gmra.mxu0 %v382
  %v1646 = vpop.f32.mrf.mxu0
  %v1647 = vadd.f32 0.0, %v1646
  %v1648 = vpop.f32.mrf.mxu0
  %v1649 = vadd.f32 0.0, %v1648
  %1650 = vmatmul.bf16.gmra.mxu0 %v1258
  %v1651 = vpop.f32.mrf.mxu0
  %v1652 = vadd.f32 0.0, %v1651
  %v1653 = vpop.f32.mrf.mxu0
  %v1654 = vadd.f32 0.0, %v1653
  %1655 = vdwg.mxu0
  %v1656 = vadd.f32 %v837, %v1279
  %v1657 = vadd.f32 %v966, %v1408
  %v1658 = vadd.f32 %v1095, %v1537
  %v1659 = vadd.f32 %v839, %v1281
  %v1660 = vadd.f32 %v968, %v1410
  %v1661 = vadd.f32 %v1097, %v1539
  %v1662 = vadd.f32 %v842, %v1284
  %v1663 = vadd.f32 %v971, %v1413
  %v1664 = vadd.f32 %v1100, %v1542
  %v1665 = vadd.f32 %v844, %v1286
  %v1666 = vadd.f32 %v973, %v1415
  %v1667 = vadd.f32 %v1102, %v1544
  %v1668 = vadd.f32 %v847, %v1289
  %v1669 = vadd.f32 %v976, %v1418
  %v1670 = vadd.f32 %v1105, %v1547
  %v1671 = vadd.f32 %v849, %v1291
  %v1672 = vadd.f32 %v978, %v1420
  %v1673 = vadd.f32 %v1107, %v1549
  %v1674 = vadd.f32 %v852, %v1294
  %v1675 = vadd.f32 %v981, %v1423
  %v1676 = vadd.f32 %v1110, %v1552
  %v1677 = vadd.f32 %v854, %v1296
  %v1678 = vadd.f32 %v983, %v1425
  %v1679 = vadd.f32 %v1112, %v1554
  %v1680 = vadd.f32 %v857, %v1299
  %v1681 = vadd.f32 %v986, %v1428
  %v1682 = vadd.f32 %v1115, %v1557
  %v1683 = vadd.f32 %v859, %v1301
  %v1684 = vadd.f32 %v988, %v1430
  %v1685 = vadd.f32 %v1117, %v1559
  %v1686 = vadd.f32 %v862, %v1304
  %v1687 = vadd.f32 %v991, %v1433
  %v1688 = vadd.f32 %v1120, %v1562
  %v1689 = vadd.f32 %v864, %v1306
  %v1690 = vadd.f32 %v993, %v1435
  %v1691 = vadd.f32 %v1122, %v1564
  %v1692 = vadd.f32 %v867, %v1309
  %v1693 = vadd.f32 %v996, %v1438
  %v1694 = vadd.f32 %v1125, %v1567
  %v1695 = vadd.f32 %v869, %v1311
  %v1696 = vadd.f32 %v998, %v1440
  %v1697 = vadd.f32 %v1127, %v1569
  %v1698 = vadd.f32 %v872, %v1314
  %v1699 = vadd.f32 %v1001, %v1443
  %v1700 = vadd.f32 %v1130, %v1572
  %v1701 = vadd.f32 %v874, %v1316
  %v1702 = vadd.f32 %v1003, %v1445
  %v1703 = vadd.f32 %v1132, %v1574
  %v1704 = vadd.f32 %v877, %v1319
  %v1705 = vadd.f32 %v1006, %v1448
  %v1706 = vadd.f32 %v1135, %v1577
  %v1707 = vadd.f32 %v879, %v1321
  %v1708 = vadd.f32 %v1008, %v1450
  %v1709 = vadd.f32 %v1137, %v1579
  %v1710 = vadd.f32 %v882, %v1324
  %v1711 = vadd.f32 %v1011, %v1453
  %v1712 = vadd.f32 %v1140, %v1582
  %v1713 = vadd.f32 %v884, %v1326
  %v1714 = vadd.f32 %v1013, %v1455
  %v1715 = vadd.f32 %v1142, %v1584
  %v1716 = vadd.f32 %v887, %v1329
  %v1717 = vadd.f32 %v1016, %v1458
  %v1718 = vadd.f32 %v1145, %v1587
  %v1719 = vadd.f32 %v889, %v1331
  %v1720 = vadd.f32 %v1018, %v1460
  %v1721 = vadd.f32 %v1147, %v1589
  %v1722 = vadd.f32 %v892, %v1334
  %v1723 = vadd.f32 %v1021, %v1463
  %v1724 = vadd.f32 %v1150, %v1592
  %v1725 = vadd.f32 %v894, %v1336
  %v1726 = vadd.f32 %v1023, %v1465
  %v1727 = vadd.f32 %v1152, %v1594
  %v1728 = vadd.f32 %v897, %v1339
  %v1729 = vadd.f32 %v1026, %v1468
  %v1730 = vadd.f32 %v1155, %v1597
  %v1731 = vadd.f32 %v899, %v1341
  %v1732 = vadd.f32 %v1028, %v1470
  %v1733 = vadd.f32 %v1157, %v1599
  %v1734 = vadd.f32 %v902, %v1344
  %v1735 = vadd.f32 %v1031, %v1473
  %v1736 = vadd.f32 %v1160, %v1602
  %v1737 = vadd.f32 %v904, %v1346
  %v1738 = vadd.f32 %v1033, %v1475
  %v1739 = vadd.f32 %v1162, %v1604
  %v1740 = vadd.f32 %v907, %v1349
  %v1741 = vadd.f32 %v1036, %v1478
  %v1742 = vadd.f32 %v1165, %v1607
  %v1743 = vadd.f32 %v909, %v1351
  %v1744 = vadd.f32 %v1038, %v1480
  %v1745 = vadd.f32 %v1167, %v1609
  %v1746 = vadd.f32 %v912, %v1354
  %v1747 = vadd.f32 %v1041, %v1483
  %v1748 = vadd.f32 %v1170, %v1612
  %v1749 = vadd.f32 %v914, %v1356
  %v1750 = vadd.f32 %v1043, %v1485
  %v1751 = vadd.f32 %v1172, %v1614
  %v1752 = vadd.f32 %v917, %v1359
  %v1753 = vadd.f32 %v1046, %v1488
  %v1754 = vadd.f32 %v1175, %v1617
  %v1755 = vadd.f32 %v919, %v1361
  %v1756 = vadd.f32 %v1048, %v1490
  %v1757 = vadd.f32 %v1177, %v1619
  %v1758 = vadd.f32 %v922, %v1364
  %v1759 = vadd.f32 %v1051, %v1493
  %v1760 = vadd.f32 %v1180, %v1622
  %v1761 = vadd.f32 %v924, %v1366
  %v1762 = vadd.f32 %v1053, %v1495
  %v1763 = vadd.f32 %v1182, %v1624
  %v1764 = vadd.f32 %v927, %v1369
  %v1765 = vadd.f32 %v1056, %v1498
  %v1766 = vadd.f32 %v1185, %v1627
  %v1767 = vadd.f32 %v929, %v1371
  %v1768 = vadd.f32 %v1058, %v1500
  %v1769 = vadd.f32 %v1187, %v1629
  %v1770 = vadd.f32 %v932, %v1374
  %v1771 = vadd.f32 %v1061, %v1503
  %v1772 = vadd.f32 %v1190, %v1632
  %v1773 = vadd.f32 %v934, %v1376
  %v1774 = vadd.f32 %v1063, %v1505
  %v1775 = vadd.f32 %v1192, %v1634
  %v1776 = vadd.f32 %v937, %v1379
  %v1777 = vadd.f32 %v1066, %v1508
  %v1778 = vadd.f32 %v1195, %v1637
  %v1779 = vadd.f32 %v939, %v1381
  %v1780 = vadd.f32 %v1068, %v1510
  %v1781 = vadd.f32 %v1197, %v1639
  %v1782 = vadd.f32 %v942, %v1384
  %v1783 = vadd.f32 %v1071, %v1513
  %v1784 = vadd.f32 %v1200, %v1642
  %v1785 = vadd.f32 %v944, %v1386
  %v1786 = vadd.f32 %v1073, %v1515
  %v1787 = vadd.f32 %v1202, %v1644
  %v1788 = vadd.f32 %v947, %v1389
  %v1789 = vadd.f32 %v1076, %v1518
  %v1790 = vadd.f32 %v1205, %v1647
  %v1791 = vadd.f32 %v949, %v1391
  %v1792 = vadd.f32 %v1078, %v1520
  %v1793 = vadd.f32 %v1207, %v1649
  %v1794 = vadd.f32 %v952, %v1394
  %v1795 = vadd.f32 %v1081, %v1523
  %v1796 = vadd.f32 %v1210, %v1652
  %v1797 = vadd.f32 %v954, %v1396
  %v1798 = vadd.f32 %v1083, %v1525
  %v1799 = vadd.f32 %v1212, %v1654
  %s1800 = scalar_lea.vmem %s1, 144
  %v1801 = vld [vmem:[%s1800] sm:$0xff]
  %v1802 = vld [vmem:[%s1800 + $0x8] sm:$0xf]
  %v1803 = vld [vmem:[%s1800 + $0xc] sm:$0xff]
  %v1804 = vld [vmem:[%s1800 + $0x14] sm:$0xf]
  %v1805 = vld [vmem:[%s1800 + $0x18] sm:$0xff]
  %v1806 = vld [vmem:[%s1800 + $0x20] sm:$0xf]
  %v1807 = vld [vmem:[%s1800 + $0x24] sm:$0x33]
  %v1808 = vld [vmem:[%s1800 + $0x2c] sm:$0x3]
  %v1811 = vunpack.c.l.b16 %v141
  %v1812 = vunpack.c.l.b16 %v142
  %v1813 = vpack.c.b16 %v1812, %v1811
  %v1822 = vunpack.c.l.b16 %v1801
  %v1823 = vunpack.c.h.b16 %v1801
  %v1824 = vunpack.c.l.b16 %v1802
  %v1825 = vunpack.c.l.b16 %v1803
  %v1826 = vunpack.c.h.b16 %v1803
  %v1827 = vunpack.c.l.b16 %v1804
  %v1828 = vunpack.c.l.b16 %v1805
  %v1829 = vunpack.c.h.b16 %v1805
  %v1830 = vunpack.c.l.b16 %v1806
  %v1831 = vunpack.c.l.b16 %v1807
  %v1832 = vunpack.c.h.b16 %v1807
  %v1833 = vunpack.c.l.b16 %v1808
  %v1834 = vpack.c.b16 %v1825, %v1822
  %v1835 = vpack.c.b16 %v1826, %v1823
  %v1836 = vpack.c.b16 %v1827, %v1824
  %v1837 = vpack.c.b16 %v1831, %v1828
  %v1838 = vpack.c.b16 %v1832, %v1829
  %v1839 = vpack.c.b16 %v1833, %v1830
  %v1844 = vsel %vm311, %v1813, 0
  %v1847 = vsel %vm384, %v1837, 0
  %v1850 = vsel %vm384, %v1838, 0
  %v1853 = vsel %vm384, %v1839, 0
  %1855 = vmatpush.bf16.msra.mxu0 0
  %1856 = vmatpush.bf16.msra.mxu0 0
  %1857 = vmatpush.bf16.msra.mxu0 0
  %1858 = vmatpush.bf16.msra.mxu0 0
  %1859 = vmatpush.bf16.msra.mxu0 0
  %1860 = vmatpush.bf16.msra.mxu0 0
  %1861 = vmatpush.bf16.msra.mxu0 %v1847
  %1862 = vmatpush.bf16.msra.mxu0 %v1834
  %1863 = vmatmul.bf16.gmra.mxu0 %v319
  %v1864 = vpop.f32.mrf.mxu0
  %v1865 = vadd.f32 0.0, %v1864
  %v1866 = vpop.f32.mrf.mxu0
  %v1867 = vadd.f32 0.0, %v1866
  %1868 = vmatmul.bf16.gmra.mxu0 %v322
  %v1869 = vpop.f32.mrf.mxu0
  %v1870 = vadd.f32 0.0, %v1869
  %v1871 = vpop.f32.mrf.mxu0
  %v1872 = vadd.f32 0.0, %v1871
  %1873 = vmatmul.bf16.gmra.mxu0 %v325
  %v1874 = vpop.f32.mrf.mxu0
  %v1875 = vadd.f32 0.0, %v1874
  %v1876 = vpop.f32.mrf.mxu0
  %v1877 = vadd.f32 0.0, %v1876
  %1878 = vmatmul.bf16.gmra.mxu0 %v328
  %v1879 = vpop.f32.mrf.mxu0
  %v1880 = vadd.f32 0.0, %v1879
  %v1881 = vpop.f32.mrf.mxu0
  %v1882 = vadd.f32 0.0, %v1881
  %1883 = vmatmul.bf16.gmra.mxu0 %v331
  %v1884 = vpop.f32.mrf.mxu0
  %v1885 = vadd.f32 0.0, %v1884
  %v1886 = vpop.f32.mrf.mxu0
  %v1887 = vadd.f32 0.0, %v1886
  %1888 = vmatmul.bf16.gmra.mxu0 %v334
  %v1889 = vpop.f32.mrf.mxu0
  %v1890 = vadd.f32 0.0, %v1889
  %v1891 = vpop.f32.mrf.mxu0
  %v1892 = vadd.f32 0.0, %v1891
  %1893 = vmatmul.bf16.gmra.mxu0 %v337
  %v1894 = vpop.f32.mrf.mxu0
  %v1895 = vadd.f32 0.0, %v1894
  %v1896 = vpop.f32.mrf.mxu0
  %v1897 = vadd.f32 0.0, %v1896
  %1898 = vmatmul.bf16.gmra.mxu0 %v340
  %v1899 = vpop.f32.mrf.mxu0
  %v1900 = vadd.f32 0.0, %v1899
  %v1901 = vpop.f32.mrf.mxu0
  %v1902 = vadd.f32 0.0, %v1901
  %1903 = vmatmul.bf16.gmra.mxu0 %v343
  %v1904 = vpop.f32.mrf.mxu0
  %v1905 = vadd.f32 0.0, %v1904
  %v1906 = vpop.f32.mrf.mxu0
  %v1907 = vadd.f32 0.0, %v1906
  %1908 = vmatmul.bf16.gmra.mxu0 %v346
  %v1909 = vpop.f32.mrf.mxu0
  %v1910 = vadd.f32 0.0, %v1909
  %v1911 = vpop.f32.mrf.mxu0
  %v1912 = vadd.f32 0.0, %v1911
  %1913 = vmatmul.bf16.gmra.mxu0 %v349
  %v1914 = vpop.f32.mrf.mxu0
  %v1915 = vadd.f32 0.0, %v1914
  %v1916 = vpop.f32.mrf.mxu0
  %v1917 = vadd.f32 0.0, %v1916
  %1918 = vmatmul.bf16.gmra.mxu0 %v352
  %v1919 = vpop.f32.mrf.mxu0
  %v1920 = vadd.f32 0.0, %v1919
  %v1921 = vpop.f32.mrf.mxu0
  %v1922 = vadd.f32 0.0, %v1921
  %1923 = vmatmul.bf16.gmra.mxu0 %v355
  %v1924 = vpop.f32.mrf.mxu0
  %v1925 = vadd.f32 0.0, %v1924
  %v1926 = vpop.f32.mrf.mxu0
  %v1927 = vadd.f32 0.0, %v1926
  %1928 = vmatmul.bf16.gmra.mxu0 %v358
  %v1929 = vpop.f32.mrf.mxu0
  %v1930 = vadd.f32 0.0, %v1929
  %v1931 = vpop.f32.mrf.mxu0
  %v1932 = vadd.f32 0.0, %v1931
  %1933 = vmatmul.bf16.gmra.mxu0 %v361
  %v1934 = vpop.f32.mrf.mxu0
  %v1935 = vadd.f32 0.0, %v1934
  %v1936 = vpop.f32.mrf.mxu0
  %v1937 = vadd.f32 0.0, %v1936
  %1938 = vmatmul.bf16.gmra.mxu0 %v364
  %v1939 = vpop.f32.mrf.mxu0
  %v1940 = vadd.f32 0.0, %v1939
  %v1941 = vpop.f32.mrf.mxu0
  %v1942 = vadd.f32 0.0, %v1941
  %1943 = vmatmul.bf16.gmra.mxu0 %v367
  %v1944 = vpop.f32.mrf.mxu0
  %v1945 = vadd.f32 0.0, %v1944
  %v1946 = vpop.f32.mrf.mxu0
  %v1947 = vadd.f32 0.0, %v1946
  %1948 = vmatmul.bf16.gmra.mxu0 %v370
  %v1949 = vpop.f32.mrf.mxu0
  %v1950 = vadd.f32 0.0, %v1949
  %v1951 = vpop.f32.mrf.mxu0
  %v1952 = vadd.f32 0.0, %v1951
  %1953 = vmatmul.bf16.gmra.mxu0 %v373
  %v1954 = vpop.f32.mrf.mxu0
  %v1955 = vadd.f32 0.0, %v1954
  %v1956 = vpop.f32.mrf.mxu0
  %v1957 = vadd.f32 0.0, %v1956
  %1958 = vmatmul.bf16.gmra.mxu0 %v376
  %v1959 = vpop.f32.mrf.mxu0
  %v1960 = vadd.f32 0.0, %v1959
  %v1961 = vpop.f32.mrf.mxu0
  %v1962 = vadd.f32 0.0, %v1961
  %1963 = vmatmul.bf16.gmra.mxu0 %v379
  %v1964 = vpop.f32.mrf.mxu0
  %v1965 = vadd.f32 0.0, %v1964
  %v1966 = vpop.f32.mrf.mxu0
  %v1967 = vadd.f32 0.0, %v1966
  %1968 = vmatmul.bf16.gmra.mxu0 %v382
  %v1969 = vpop.f32.mrf.mxu0
  %v1970 = vadd.f32 0.0, %v1969
  %v1971 = vpop.f32.mrf.mxu0
  %v1972 = vadd.f32 0.0, %v1971
  %1973 = vmatmul.bf16.gmra.mxu0 %v1258
  %v1974 = vpop.f32.mrf.mxu0
  %v1975 = vadd.f32 0.0, %v1974
  %v1976 = vpop.f32.mrf.mxu0
  %v1977 = vadd.f32 0.0, %v1976
  %1978 = vmatmul.bf16.gmra.mxu0 %v1844
  %v1979 = vpop.f32.mrf.mxu0
  %v1980 = vadd.f32 0.0, %v1979
  %v1981 = vpop.f32.mrf.mxu0
  %v1982 = vadd.f32 0.0, %v1981
  %1983 = vdwg.mxu0
  %1984 = vmatpush.bf16.msra.mxu0 0
  %1985 = vmatpush.bf16.msra.mxu0 0
  %1986 = vmatpush.bf16.msra.mxu0 0
  %1987 = vmatpush.bf16.msra.mxu0 0
  %1988 = vmatpush.bf16.msra.mxu0 0
  %1989 = vmatpush.bf16.msra.mxu0 0
  %1990 = vmatpush.bf16.msra.mxu0 %v1850
  %1991 = vmatpush.bf16.msra.mxu0 %v1835
  %1992 = vmatmul.bf16.gmra.mxu0 %v319
  %v1993 = vpop.f32.mrf.mxu0
  %v1994 = vadd.f32 0.0, %v1993
  %v1995 = vpop.f32.mrf.mxu0
  %v1996 = vadd.f32 0.0, %v1995
  %1997 = vmatmul.bf16.gmra.mxu0 %v322
  %v1998 = vpop.f32.mrf.mxu0
  %v1999 = vadd.f32 0.0, %v1998
  %v2000 = vpop.f32.mrf.mxu0
  %v2001 = vadd.f32 0.0, %v2000
  %2002 = vmatmul.bf16.gmra.mxu0 %v325
  %v2003 = vpop.f32.mrf.mxu0
  %v2004 = vadd.f32 0.0, %v2003
  %v2005 = vpop.f32.mrf.mxu0
  %v2006 = vadd.f32 0.0, %v2005
  %2007 = vmatmul.bf16.gmra.mxu0 %v328
  %v2008 = vpop.f32.mrf.mxu0
  %v2009 = vadd.f32 0.0, %v2008
  %v2010 = vpop.f32.mrf.mxu0
  %v2011 = vadd.f32 0.0, %v2010
  %2012 = vmatmul.bf16.gmra.mxu0 %v331
  %v2013 = vpop.f32.mrf.mxu0
  %v2014 = vadd.f32 0.0, %v2013
  %v2015 = vpop.f32.mrf.mxu0
  %v2016 = vadd.f32 0.0, %v2015
  %2017 = vmatmul.bf16.gmra.mxu0 %v334
  %v2018 = vpop.f32.mrf.mxu0
  %v2019 = vadd.f32 0.0, %v2018
  %v2020 = vpop.f32.mrf.mxu0
  %v2021 = vadd.f32 0.0, %v2020
  %2022 = vmatmul.bf16.gmra.mxu0 %v337
  %v2023 = vpop.f32.mrf.mxu0
  %v2024 = vadd.f32 0.0, %v2023
  %v2025 = vpop.f32.mrf.mxu0
  %v2026 = vadd.f32 0.0, %v2025
  %2027 = vmatmul.bf16.gmra.mxu0 %v340
  %v2028 = vpop.f32.mrf.mxu0
  %v2029 = vadd.f32 0.0, %v2028
  %v2030 = vpop.f32.mrf.mxu0
  %v2031 = vadd.f32 0.0, %v2030
  %2032 = vmatmul.bf16.gmra.mxu0 %v343
  %v2033 = vpop.f32.mrf.mxu0
  %v2034 = vadd.f32 0.0, %v2033
  %v2035 = vpop.f32.mrf.mxu0
  %v2036 = vadd.f32 0.0, %v2035
  %2037 = vmatmul.bf16.gmra.mxu0 %v346
  %v2038 = vpop.f32.mrf.mxu0
  %v2039 = vadd.f32 0.0, %v2038
  %v2040 = vpop.f32.mrf.mxu0
  %v2041 = vadd.f32 0.0, %v2040
  %2042 = vmatmul.bf16.gmra.mxu0 %v349
  %v2043 = vpop.f32.mrf.mxu0
  %v2044 = vadd.f32 0.0, %v2043
  %v2045 = vpop.f32.mrf.mxu0
  %v2046 = vadd.f32 0.0, %v2045
  %2047 = vmatmul.bf16.gmra.mxu0 %v352
  %v2048 = vpop.f32.mrf.mxu0
  %v2049 = vadd.f32 0.0, %v2048
  %v2050 = vpop.f32.mrf.mxu0
  %v2051 = vadd.f32 0.0, %v2050
  %2052 = vmatmul.bf16.gmra.mxu0 %v355
  %v2053 = vpop.f32.mrf.mxu0
  %v2054 = vadd.f32 0.0, %v2053
  %v2055 = vpop.f32.mrf.mxu0
  %v2056 = vadd.f32 0.0, %v2055
  %2057 = vmatmul.bf16.gmra.mxu0 %v358
  %v2058 = vpop.f32.mrf.mxu0
  %v2059 = vadd.f32 0.0, %v2058
  %v2060 = vpop.f32.mrf.mxu0
  %v2061 = vadd.f32 0.0, %v2060
  %2062 = vmatmul.bf16.gmra.mxu0 %v361
  %v2063 = vpop.f32.mrf.mxu0
  %v2064 = vadd.f32 0.0, %v2063
  %v2065 = vpop.f32.mrf.mxu0
  %v2066 = vadd.f32 0.0, %v2065
  %2067 = vmatmul.bf16.gmra.mxu0 %v364
  %v2068 = vpop.f32.mrf.mxu0
  %v2069 = vadd.f32 0.0, %v2068
  %v2070 = vpop.f32.mrf.mxu0
  %v2071 = vadd.f32 0.0, %v2070
  %2072 = vmatmul.bf16.gmra.mxu0 %v367
  %v2073 = vpop.f32.mrf.mxu0
  %v2074 = vadd.f32 0.0, %v2073
  %v2075 = vpop.f32.mrf.mxu0
  %v2076 = vadd.f32 0.0, %v2075
  %2077 = vmatmul.bf16.gmra.mxu0 %v370
  %v2078 = vpop.f32.mrf.mxu0
  %v2079 = vadd.f32 0.0, %v2078
  %v2080 = vpop.f32.mrf.mxu0
  %v2081 = vadd.f32 0.0, %v2080
  %2082 = vmatmul.bf16.gmra.mxu0 %v373
  %v2083 = vpop.f32.mrf.mxu0
  %v2084 = vadd.f32 0.0, %v2083
  %v2085 = vpop.f32.mrf.mxu0
  %v2086 = vadd.f32 0.0, %v2085
  %2087 = vmatmul.bf16.gmra.mxu0 %v376
  %v2088 = vpop.f32.mrf.mxu0
  %v2089 = vadd.f32 0.0, %v2088
  %v2090 = vpop.f32.mrf.mxu0
  %v2091 = vadd.f32 0.0, %v2090
  %2092 = vmatmul.bf16.gmra.mxu0 %v379
  %v2093 = vpop.f32.mrf.mxu0
  %v2094 = vadd.f32 0.0, %v2093
  %v2095 = vpop.f32.mrf.mxu0
  %v2096 = vadd.f32 0.0, %v2095
  %2097 = vmatmul.bf16.gmra.mxu0 %v382
  %v2098 = vpop.f32.mrf.mxu0
  %v2099 = vadd.f32 0.0, %v2098
  %v2100 = vpop.f32.mrf.mxu0
  %v2101 = vadd.f32 0.0, %v2100
  %2102 = vmatmul.bf16.gmra.mxu0 %v1258
  %v2103 = vpop.f32.mrf.mxu0
  %v2104 = vadd.f32 0.0, %v2103
  %v2105 = vpop.f32.mrf.mxu0
  %v2106 = vadd.f32 0.0, %v2105
  %2107 = vmatmul.bf16.gmra.mxu0 %v1844
  %v2108 = vpop.f32.mrf.mxu0
  %v2109 = vadd.f32 0.0, %v2108
  %v2110 = vpop.f32.mrf.mxu0
  %v2111 = vadd.f32 0.0, %v2110
  %2112 = vdwg.mxu0
  %2113 = vmatpush.bf16.msra.mxu0 0
  %2114 = vmatpush.bf16.msra.mxu0 0
  %2115 = vmatpush.bf16.msra.mxu0 0
  %2116 = vmatpush.bf16.msra.mxu0 0
  %2117 = vmatpush.bf16.msra.mxu0 0
  %2118 = vmatpush.bf16.msra.mxu0 0
  %2119 = vmatpush.bf16.msra.mxu0 %v1853
  %2120 = vmatpush.bf16.msra.mxu0 %v1836
  %2121 = vmatmul.bf16.gmra.mxu0 %v319
  %v2122 = vpop.f32.mrf.mxu0
  %v2123 = vadd.f32 0.0, %v2122
  %v2124 = vpop.f32.mrf.mxu0
  %v2125 = vadd.f32 0.0, %v2124
  %2126 = vmatmul.bf16.gmra.mxu0 %v322
  %v2127 = vpop.f32.mrf.mxu0
  %v2128 = vadd.f32 0.0, %v2127
  %v2129 = vpop.f32.mrf.mxu0
  %v2130 = vadd.f32 0.0, %v2129
  %2131 = vmatmul.bf16.gmra.mxu0 %v325
  %v2132 = vpop.f32.mrf.mxu0
  %v2133 = vadd.f32 0.0, %v2132
  %v2134 = vpop.f32.mrf.mxu0
  %v2135 = vadd.f32 0.0, %v2134
  %2136 = vmatmul.bf16.gmra.mxu0 %v328
  %v2137 = vpop.f32.mrf.mxu0
  %v2138 = vadd.f32 0.0, %v2137
  %v2139 = vpop.f32.mrf.mxu0
  %v2140 = vadd.f32 0.0, %v2139
  %2141 = vmatmul.bf16.gmra.mxu0 %v331
  %v2142 = vpop.f32.mrf.mxu0
  %v2143 = vadd.f32 0.0, %v2142
  %v2144 = vpop.f32.mrf.mxu0
  %v2145 = vadd.f32 0.0, %v2144
  %2146 = vmatmul.bf16.gmra.mxu0 %v334
  %v2147 = vpop.f32.mrf.mxu0
  %v2148 = vadd.f32 0.0, %v2147
  %v2149 = vpop.f32.mrf.mxu0
  %v2150 = vadd.f32 0.0, %v2149
  %2151 = vmatmul.bf16.gmra.mxu0 %v337
  %v2152 = vpop.f32.mrf.mxu0
  %v2153 = vadd.f32 0.0, %v2152
  %v2154 = vpop.f32.mrf.mxu0
  %v2155 = vadd.f32 0.0, %v2154
  %2156 = vmatmul.bf16.gmra.mxu0 %v340
  %v2157 = vpop.f32.mrf.mxu0
  %v2158 = vadd.f32 0.0, %v2157
  %v2159 = vpop.f32.mrf.mxu0
  %v2160 = vadd.f32 0.0, %v2159
  %2161 = vmatmul.bf16.gmra.mxu0 %v343
  %v2162 = vpop.f32.mrf.mxu0
  %v2163 = vadd.f32 0.0, %v2162
  %v2164 = vpop.f32.mrf.mxu0
  %v2165 = vadd.f32 0.0, %v2164
  %2166 = vmatmul.bf16.gmra.mxu0 %v346
  %v2167 = vpop.f32.mrf.mxu0
  %v2168 = vadd.f32 0.0, %v2167
  %v2169 = vpop.f32.mrf.mxu0
  %v2170 = vadd.f32 0.0, %v2169
  %2171 = vmatmul.bf16.gmra.mxu0 %v349
  %v2172 = vpop.f32.mrf.mxu0
  %v2173 = vadd.f32 0.0, %v2172
  %v2174 = vpop.f32.mrf.mxu0
  %v2175 = vadd.f32 0.0, %v2174
  %2176 = vmatmul.bf16.gmra.mxu0 %v352
  %v2177 = vpop.f32.mrf.mxu0
  %v2178 = vadd.f32 0.0, %v2177
  %v2179 = vpop.f32.mrf.mxu0
  %v2180 = vadd.f32 0.0, %v2179
  %2181 = vmatmul.bf16.gmra.mxu0 %v355
  %v2182 = vpop.f32.mrf.mxu0
  %v2183 = vadd.f32 0.0, %v2182
  %v2184 = vpop.f32.mrf.mxu0
  %v2185 = vadd.f32 0.0, %v2184
  %2186 = vmatmul.bf16.gmra.mxu0 %v358
  %v2187 = vpop.f32.mrf.mxu0
  %v2188 = vadd.f32 0.0, %v2187
  %v2189 = vpop.f32.mrf.mxu0
  %v2190 = vadd.f32 0.0, %v2189
  %2191 = vmatmul.bf16.gmra.mxu0 %v361
  %v2192 = vpop.f32.mrf.mxu0
  %v2193 = vadd.f32 0.0, %v2192
  %v2194 = vpop.f32.mrf.mxu0
  %v2195 = vadd.f32 0.0, %v2194
  %2196 = vmatmul.bf16.gmra.mxu0 %v364
  %v2197 = vpop.f32.mrf.mxu0
  %v2198 = vadd.f32 0.0, %v2197
  %v2199 = vpop.f32.mrf.mxu0
  %v2200 = vadd.f32 0.0, %v2199
  %2201 = vmatmul.bf16.gmra.mxu0 %v367
  %v2202 = vpop.f32.mrf.mxu0
  %v2203 = vadd.f32 0.0, %v2202
  %v2204 = vpop.f32.mrf.mxu0
  %v2205 = vadd.f32 0.0, %v2204
  %2206 = vmatmul.bf16.gmra.mxu0 %v370
  %v2207 = vpop.f32.mrf.mxu0
  %v2208 = vadd.f32 0.0, %v2207
  %v2209 = vpop.f32.mrf.mxu0
  %v2210 = vadd.f32 0.0, %v2209
  %2211 = vmatmul.bf16.gmra.mxu0 %v373
  %v2212 = vpop.f32.mrf.mxu0
  %v2213 = vadd.f32 0.0, %v2212
  %v2214 = vpop.f32.mrf.mxu0
  %v2215 = vadd.f32 0.0, %v2214
  %2216 = vmatmul.bf16.gmra.mxu0 %v376
  %v2217 = vpop.f32.mrf.mxu0
  %v2218 = vadd.f32 0.0, %v2217
  %v2219 = vpop.f32.mrf.mxu0
  %v2220 = vadd.f32 0.0, %v2219
  %2221 = vmatmul.bf16.gmra.mxu0 %v379
  %v2222 = vpop.f32.mrf.mxu0
  %v2223 = vadd.f32 0.0, %v2222
  %v2224 = vpop.f32.mrf.mxu0
  %v2225 = vadd.f32 0.0, %v2224
  %2226 = vmatmul.bf16.gmra.mxu0 %v382
  %v2227 = vpop.f32.mrf.mxu0
  %v2228 = vadd.f32 0.0, %v2227
  %v2229 = vpop.f32.mrf.mxu0
  %v2230 = vadd.f32 0.0, %v2229
  %2231 = vmatmul.bf16.gmra.mxu0 %v1258
  %v2232 = vpop.f32.mrf.mxu0
  %v2233 = vadd.f32 0.0, %v2232
  %v2234 = vpop.f32.mrf.mxu0
  %v2235 = vadd.f32 0.0, %v2234
  %2236 = vmatmul.bf16.gmra.mxu0 %v1844
  %v2237 = vpop.f32.mrf.mxu0
  %v2238 = vadd.f32 0.0, %v2237
  %v2239 = vpop.f32.mrf.mxu0
  %v2240 = vadd.f32 0.0, %v2239
  %2241 = vdwg.mxu0
  %v2242 = vadd.f32 %v1656, %v1865
  %v2243 = vadd.f32 %v1657, %v1994
  %v2244 = vadd.f32 %v1658, %v2123
  %v2245 = vadd.f32 %v1659, %v1867
  %v2246 = vadd.f32 %v1660, %v1996
  %v2247 = vadd.f32 %v1661, %v2125
  %v2248 = vadd.f32 %v1662, %v1870
  %v2249 = vadd.f32 %v1663, %v1999
  %v2250 = vadd.f32 %v1664, %v2128
  %v2251 = vadd.f32 %v1665, %v1872
  %v2252 = vadd.f32 %v1666, %v2001
  %v2253 = vadd.f32 %v1667, %v2130
  %v2254 = vadd.f32 %v1668, %v1875
  %v2255 = vadd.f32 %v1669, %v2004
  %v2256 = vadd.f32 %v1670, %v2133
  %v2257 = vadd.f32 %v1671, %v1877
  %v2258 = vadd.f32 %v1672, %v2006
  %v2259 = vadd.f32 %v1673, %v2135
  %v2260 = vadd.f32 %v1674, %v1880
  %v2261 = vadd.f32 %v1675, %v2009
  %v2262 = vadd.f32 %v1676, %v2138
  %v2263 = vadd.f32 %v1677, %v1882
  %v2264 = vadd.f32 %v1678, %v2011
  %v2265 = vadd.f32 %v1679, %v2140
  %v2266 = vadd.f32 %v1680, %v1885
  %v2267 = vadd.f32 %v1681, %v2014
  %v2268 = vadd.f32 %v1682, %v2143
  %v2269 = vadd.f32 %v1683, %v1887
  %v2270 = vadd.f32 %v1684, %v2016
  %v2271 = vadd.f32 %v1685, %v2145
  %v2272 = vadd.f32 %v1686, %v1890
  %v2273 = vadd.f32 %v1687, %v2019
  %v2274 = vadd.f32 %v1688, %v2148
  %v2275 = vadd.f32 %v1689, %v1892
  %v2276 = vadd.f32 %v1690, %v2021
  %v2277 = vadd.f32 %v1691, %v2150
  %v2278 = vadd.f32 %v1692, %v1895
  %v2279 = vadd.f32 %v1693, %v2024
  %v2280 = vadd.f32 %v1694, %v2153
  %v2281 = vadd.f32 %v1695, %v1897
  %v2282 = vadd.f32 %v1696, %v2026
  %v2283 = vadd.f32 %v1697, %v2155
  %v2284 = vadd.f32 %v1698, %v1900
  %v2285 = vadd.f32 %v1699, %v2029
  %v2286 = vadd.f32 %v1700, %v2158
  %v2287 = vadd.f32 %v1701, %v1902
  %v2288 = vadd.f32 %v1702, %v2031
  %v2289 = vadd.f32 %v1703, %v2160
  %v2290 = vadd.f32 %v1704, %v1905
  %v2291 = vadd.f32 %v1705, %v2034
  %v2292 = vadd.f32 %v1706, %v2163
  %v2293 = vadd.f32 %v1707, %v1907
  %v2294 = vadd.f32 %v1708, %v2036
  %v2295 = vadd.f32 %v1709, %v2165
  %v2296 = vadd.f32 %v1710, %v1910
  %v2297 = vadd.f32 %v1711, %v2039
  %v2298 = vadd.f32 %v1712, %v2168
  %v2299 = vadd.f32 %v1713, %v1912
  %v2300 = vadd.f32 %v1714, %v2041
  %v2301 = vadd.f32 %v1715, %v2170
  %v2302 = vadd.f32 %v1716, %v1915
  %v2303 = vadd.f32 %v1717, %v2044
  %v2304 = vadd.f32 %v1718, %v2173
  %v2305 = vadd.f32 %v1719, %v1917
  %v2306 = vadd.f32 %v1720, %v2046
  %v2307 = vadd.f32 %v1721, %v2175
  %v2308 = vadd.f32 %v1722, %v1920
  %v2309 = vadd.f32 %v1723, %v2049
  %v2310 = vadd.f32 %v1724, %v2178
  %v2311 = vadd.f32 %v1725, %v1922
  %v2312 = vadd.f32 %v1726, %v2051
  %v2313 = vadd.f32 %v1727, %v2180
  %v2314 = vadd.f32 %v1728, %v1925
  %v2315 = vadd.f32 %v1729, %v2054
  %v2316 = vadd.f32 %v1730, %v2183
  %v2317 = vadd.f32 %v1731, %v1927
  %v2318 = vadd.f32 %v1732, %v2056
  %v2319 = vadd.f32 %v1733, %v2185
  %v2320 = vadd.f32 %v1734, %v1930
  %v2321 = vadd.f32 %v1735, %v2059
  %v2322 = vadd.f32 %v1736, %v2188
  %v2323 = vadd.f32 %v1737, %v1932
  %v2324 = vadd.f32 %v1738, %v2061
  %v2325 = vadd.f32 %v1739, %v2190
  %v2326 = vadd.f32 %v1740, %v1935
  %v2327 = vadd.f32 %v1741, %v2064
  %v2328 = vadd.f32 %v1742, %v2193
  %v2329 = vadd.f32 %v1743, %v1937
  %v2330 = vadd.f32 %v1744, %v2066
  %v2331 = vadd.f32 %v1745, %v2195
  %v2332 = vadd.f32 %v1746, %v1940
  %v2333 = vadd.f32 %v1747, %v2069
  %v2334 = vadd.f32 %v1748, %v2198
  %v2335 = vadd.f32 %v1749, %v1942
  %v2336 = vadd.f32 %v1750, %v2071
  %v2337 = vadd.f32 %v1751, %v2200
  %v2338 = vadd.f32 %v1752, %v1945
  %v2339 = vadd.f32 %v1753, %v2074
  %v2340 = vadd.f32 %v1754, %v2203
  %v2341 = vadd.f32 %v1755, %v1947
  %v2342 = vadd.f32 %v1756, %v2076
  %v2343 = vadd.f32 %v1757, %v2205
  %v2344 = vadd.f32 %v1758, %v1950
  %v2345 = vadd.f32 %v1759, %v2079
  %v2346 = vadd.f32 %v1760, %v2208
  %v2347 = vadd.f32 %v1761, %v1952
  %v2348 = vadd.f32 %v1762, %v2081
  %v2349 = vadd.f32 %v1763, %v2210
  %v2350 = vadd.f32 %v1764, %v1955
  %v2351 = vadd.f32 %v1765, %v2084
  %v2352 = vadd.f32 %v1766, %v2213
  %v2353 = vadd.f32 %v1767, %v1957
  %v2354 = vadd.f32 %v1768, %v2086
  %v2355 = vadd.f32 %v1769, %v2215
  %v2356 = vadd.f32 %v1770, %v1960
  %v2357 = vadd.f32 %v1771, %v2089
  %v2358 = vadd.f32 %v1772, %v2218
  %v2359 = vadd.f32 %v1773, %v1962
  %v2360 = vadd.f32 %v1774, %v2091
  %v2361 = vadd.f32 %v1775, %v2220
  %v2362 = vadd.f32 %v1776, %v1965
  %v2363 = vadd.f32 %v1777, %v2094
  %v2364 = vadd.f32 %v1778, %v2223
  %v2365 = vadd.f32 %v1779, %v1967
  %v2366 = vadd.f32 %v1780, %v2096
  %v2367 = vadd.f32 %v1781, %v2225
  %v2368 = vadd.f32 %v1782, %v1970
  %v2369 = vadd.f32 %v1783, %v2099
  %v2370 = vadd.f32 %v1784, %v2228
  %v2371 = vadd.f32 %v1785, %v1972
  %v2372 = vadd.f32 %v1786, %v2101
  %v2373 = vadd.f32 %v1787, %v2230
  %v2374 = vadd.f32 %v1788, %v1975
  %v2375 = vadd.f32 %v1789, %v2104
  %v2376 = vadd.f32 %v1790, %v2233
  %v2377 = vadd.f32 %v1791, %v1977
  %v2378 = vadd.f32 %v1792, %v2106
  %v2379 = vadd.f32 %v1793, %v2235
  %v2380 = vadd.f32 %v1794, %v1980
  %v2381 = vadd.f32 %v1795, %v2109
  %v2382 = vadd.f32 %v1796, %v2238
  %v2383 = vadd.f32 %v1797, %v1982
  %v2384 = vadd.f32 %v1798, %v2111
  %v2385 = vadd.f32 %v1799, %v2240
  %s2386 = scalar_lea.vmem %s1, 192
  %v2387 = vld [vmem:[%s2386] sm:$0xff]
  %v2388 = vld [vmem:[%s2386 + $0x8] sm:$0xf]
  %v2389 = vld [vmem:[%s2386 + $0xc] sm:$0xff]
  %v2390 = vld [vmem:[%s2386 + $0x14] sm:$0xf]
  %v2391 = vld [vmem:[%s2386 + $0x18] sm:$0xff]
  %v2392 = vld [vmem:[%s2386 + $0x20] sm:$0xf]
  %v2393 = vld [vmem:[%s2386 + $0x24] sm:$0x33]
  %v2394 = vld [vmem:[%s2386 + $0x2c] sm:$0x3]
  %v2397 = vunpack.c.l.b16 %v143
  %v2398 = vunpack.c.l.b16 %v144
  %v2399 = vpack.c.b16 %v2398, %v2397
  %v2408 = vunpack.c.l.b16 %v2387
  %v2409 = vunpack.c.h.b16 %v2387
  %v2410 = vunpack.c.l.b16 %v2388
  %v2411 = vunpack.c.l.b16 %v2389
  %v2412 = vunpack.c.h.b16 %v2389
  %v2413 = vunpack.c.l.b16 %v2390
  %v2414 = vunpack.c.l.b16 %v2391
  %v2415 = vunpack.c.h.b16 %v2391
  %v2416 = vunpack.c.l.b16 %v2392
  %v2417 = vunpack.c.l.b16 %v2393
  %v2418 = vunpack.c.h.b16 %v2393
  %v2419 = vunpack.c.l.b16 %v2394
  %v2420 = vpack.c.b16 %v2411, %v2408
  %v2421 = vpack.c.b16 %v2412, %v2409
  %v2422 = vpack.c.b16 %v2413, %v2410
  %v2423 = vpack.c.b16 %v2417, %v2414
  %v2424 = vpack.c.b16 %v2418, %v2415
  %v2425 = vpack.c.b16 %v2419, %v2416
  %v2430 = vsel %vm311, %v2399, 0
  %v2433 = vsel %vm384, %v2423, 0
  %v2436 = vsel %vm384, %v2424, 0
  %v2439 = vsel %vm384, %v2425, 0
  %2441 = vmatpush.bf16.msra.mxu0 0
  %2442 = vmatpush.bf16.msra.mxu0 0
  %2443 = vmatpush.bf16.msra.mxu0 0
  %2444 = vmatpush.bf16.msra.mxu0 0
  %2445 = vmatpush.bf16.msra.mxu0 0
  %2446 = vmatpush.bf16.msra.mxu0 0
  %2447 = vmatpush.bf16.msra.mxu0 %v2433
  %2448 = vmatpush.bf16.msra.mxu0 %v2420
  %2449 = vmatmul.bf16.gmra.mxu0 %v322
  %v2450 = vpop.f32.mrf.mxu0
  %v2451 = vadd.f32 0.0, %v2450
  %v2452 = vpop.f32.mrf.mxu0
  %v2453 = vadd.f32 0.0, %v2452
  %2454 = vmatmul.bf16.gmra.mxu0 %v325
  %v2455 = vpop.f32.mrf.mxu0
  %v2456 = vadd.f32 0.0, %v2455
  %v2457 = vpop.f32.mrf.mxu0
  %v2458 = vadd.f32 0.0, %v2457
  %2459 = vmatmul.bf16.gmra.mxu0 %v328
  %v2460 = vpop.f32.mrf.mxu0
  %v2461 = vadd.f32 0.0, %v2460
  %v2462 = vpop.f32.mrf.mxu0
  %v2463 = vadd.f32 0.0, %v2462
  %2464 = vmatmul.bf16.gmra.mxu0 %v331
  %v2465 = vpop.f32.mrf.mxu0
  %v2466 = vadd.f32 0.0, %v2465
  %v2467 = vpop.f32.mrf.mxu0
  %v2468 = vadd.f32 0.0, %v2467
  %2469 = vmatmul.bf16.gmra.mxu0 %v334
  %v2470 = vpop.f32.mrf.mxu0
  %v2471 = vadd.f32 0.0, %v2470
  %v2472 = vpop.f32.mrf.mxu0
  %v2473 = vadd.f32 0.0, %v2472
  %2474 = vmatmul.bf16.gmra.mxu0 %v337
  %v2475 = vpop.f32.mrf.mxu0
  %v2476 = vadd.f32 0.0, %v2475
  %v2477 = vpop.f32.mrf.mxu0
  %v2478 = vadd.f32 0.0, %v2477
  %2479 = vmatmul.bf16.gmra.mxu0 %v340
  %v2480 = vpop.f32.mrf.mxu0
  %v2481 = vadd.f32 0.0, %v2480
  %v2482 = vpop.f32.mrf.mxu0
  %v2483 = vadd.f32 0.0, %v2482
  %2484 = vmatmul.bf16.gmra.mxu0 %v343
  %v2485 = vpop.f32.mrf.mxu0
  %v2486 = vadd.f32 0.0, %v2485
  %v2487 = vpop.f32.mrf.mxu0
  %v2488 = vadd.f32 0.0, %v2487
  %2489 = vmatmul.bf16.gmra.mxu0 %v346
  %v2490 = vpop.f32.mrf.mxu0
  %v2491 = vadd.f32 0.0, %v2490
  %v2492 = vpop.f32.mrf.mxu0
  %v2493 = vadd.f32 0.0, %v2492
  %2494 = vmatmul.bf16.gmra.mxu0 %v349
  %v2495 = vpop.f32.mrf.mxu0
  %v2496 = vadd.f32 0.0, %v2495
  %v2497 = vpop.f32.mrf.mxu0
  %v2498 = vadd.f32 0.0, %v2497
  %2499 = vmatmul.bf16.gmra.mxu0 %v352
  %v2500 = vpop.f32.mrf.mxu0
  %v2501 = vadd.f32 0.0, %v2500
  %v2502 = vpop.f32.mrf.mxu0
  %v2503 = vadd.f32 0.0, %v2502
  %2504 = vmatmul.bf16.gmra.mxu0 %v355
  %v2505 = vpop.f32.mrf.mxu0
  %v2506 = vadd.f32 0.0, %v2505
  %v2507 = vpop.f32.mrf.mxu0
  %v2508 = vadd.f32 0.0, %v2507
  %2509 = vmatmul.bf16.gmra.mxu0 %v358
  %v2510 = vpop.f32.mrf.mxu0
  %v2511 = vadd.f32 0.0, %v2510
  %v2512 = vpop.f32.mrf.mxu0
  %v2513 = vadd.f32 0.0, %v2512
  %2514 = vmatmul.bf16.gmra.mxu0 %v361
  %v2515 = vpop.f32.mrf.mxu0
  %v2516 = vadd.f32 0.0, %v2515
  %v2517 = vpop.f32.mrf.mxu0
  %v2518 = vadd.f32 0.0, %v2517
  %2519 = vmatmul.bf16.gmra.mxu0 %v364
  %v2520 = vpop.f32.mrf.mxu0
  %v2521 = vadd.f32 0.0, %v2520
  %v2522 = vpop.f32.mrf.mxu0
  %v2523 = vadd.f32 0.0, %v2522
  %2524 = vmatmul.bf16.gmra.mxu0 %v367
  %v2525 = vpop.f32.mrf.mxu0
  %v2526 = vadd.f32 0.0, %v2525
  %v2527 = vpop.f32.mrf.mxu0
  %v2528 = vadd.f32 0.0, %v2527
  %2529 = vmatmul.bf16.gmra.mxu0 %v370
  %v2530 = vpop.f32.mrf.mxu0
  %v2531 = vadd.f32 0.0, %v2530
  %v2532 = vpop.f32.mrf.mxu0
  %v2533 = vadd.f32 0.0, %v2532
  %2534 = vmatmul.bf16.gmra.mxu0 %v373
  %v2535 = vpop.f32.mrf.mxu0
  %v2536 = vadd.f32 0.0, %v2535
  %v2537 = vpop.f32.mrf.mxu0
  %v2538 = vadd.f32 0.0, %v2537
  %2539 = vmatmul.bf16.gmra.mxu0 %v376
  %v2540 = vpop.f32.mrf.mxu0
  %v2541 = vadd.f32 0.0, %v2540
  %v2542 = vpop.f32.mrf.mxu0
  %v2543 = vadd.f32 0.0, %v2542
  %2544 = vmatmul.bf16.gmra.mxu0 %v379
  %v2545 = vpop.f32.mrf.mxu0
  %v2546 = vadd.f32 0.0, %v2545
  %v2547 = vpop.f32.mrf.mxu0
  %v2548 = vadd.f32 0.0, %v2547
  %2549 = vmatmul.bf16.gmra.mxu0 %v382
  %v2550 = vpop.f32.mrf.mxu0
  %v2551 = vadd.f32 0.0, %v2550
  %v2552 = vpop.f32.mrf.mxu0
  %v2553 = vadd.f32 0.0, %v2552
  %2554 = vmatmul.bf16.gmra.mxu0 %v1258
  %v2555 = vpop.f32.mrf.mxu0
  %v2556 = vadd.f32 0.0, %v2555
  %v2557 = vpop.f32.mrf.mxu0
  %v2558 = vadd.f32 0.0, %v2557
  %2559 = vmatmul.bf16.gmra.mxu0 %v1844
  %v2560 = vpop.f32.mrf.mxu0
  %v2561 = vadd.f32 0.0, %v2560
  %v2562 = vpop.f32.mrf.mxu0
  %v2563 = vadd.f32 0.0, %v2562
  %2564 = vmatmul.bf16.gmra.mxu0 %v2430
  %v2565 = vpop.f32.mrf.mxu0
  %v2566 = vadd.f32 0.0, %v2565
  %v2567 = vpop.f32.mrf.mxu0
  %v2568 = vadd.f32 0.0, %v2567
  %2569 = vdwg.mxu0
  %2570 = vmatpush.bf16.msra.mxu0 0
  %2571 = vmatpush.bf16.msra.mxu0 0
  %2572 = vmatpush.bf16.msra.mxu0 0
  %2573 = vmatpush.bf16.msra.mxu0 0
  %2574 = vmatpush.bf16.msra.mxu0 0
  %2575 = vmatpush.bf16.msra.mxu0 0
  %2576 = vmatpush.bf16.msra.mxu0 %v2436
  %2577 = vmatpush.bf16.msra.mxu0 %v2421
  %2578 = vmatmul.bf16.gmra.mxu0 %v322
  %v2579 = vpop.f32.mrf.mxu0
  %v2580 = vadd.f32 0.0, %v2579
  %v2581 = vpop.f32.mrf.mxu0
  %v2582 = vadd.f32 0.0, %v2581
  %2583 = vmatmul.bf16.gmra.mxu0 %v325
  %v2584 = vpop.f32.mrf.mxu0
  %v2585 = vadd.f32 0.0, %v2584
  %v2586 = vpop.f32.mrf.mxu0
  %v2587 = vadd.f32 0.0, %v2586
  %2588 = vmatmul.bf16.gmra.mxu0 %v328
  %v2589 = vpop.f32.mrf.mxu0
  %v2590 = vadd.f32 0.0, %v2589
  %v2591 = vpop.f32.mrf.mxu0
  %v2592 = vadd.f32 0.0, %v2591
  %2593 = vmatmul.bf16.gmra.mxu0 %v331
  %v2594 = vpop.f32.mrf.mxu0
  %v2595 = vadd.f32 0.0, %v2594
  %v2596 = vpop.f32.mrf.mxu0
  %v2597 = vadd.f32 0.0, %v2596
  %2598 = vmatmul.bf16.gmra.mxu0 %v334
  %v2599 = vpop.f32.mrf.mxu0
  %v2600 = vadd.f32 0.0, %v2599
  %v2601 = vpop.f32.mrf.mxu0
  %v2602 = vadd.f32 0.0, %v2601
  %2603 = vmatmul.bf16.gmra.mxu0 %v337
  %v2604 = vpop.f32.mrf.mxu0
  %v2605 = vadd.f32 0.0, %v2604
  %v2606 = vpop.f32.mrf.mxu0
  %v2607 = vadd.f32 0.0, %v2606
  %2608 = vmatmul.bf16.gmra.mxu0 %v340
  %v2609 = vpop.f32.mrf.mxu0
  %v2610 = vadd.f32 0.0, %v2609
  %v2611 = vpop.f32.mrf.mxu0
  %v2612 = vadd.f32 0.0, %v2611
  %2613 = vmatmul.bf16.gmra.mxu0 %v343
  %v2614 = vpop.f32.mrf.mxu0
  %v2615 = vadd.f32 0.0, %v2614
  %v2616 = vpop.f32.mrf.mxu0
  %v2617 = vadd.f32 0.0, %v2616
  %2618 = vmatmul.bf16.gmra.mxu0 %v346
  %v2619 = vpop.f32.mrf.mxu0
  %v2620 = vadd.f32 0.0, %v2619
  %v2621 = vpop.f32.mrf.mxu0
  %v2622 = vadd.f32 0.0, %v2621
  %2623 = vmatmul.bf16.gmra.mxu0 %v349
  %v2624 = vpop.f32.mrf.mxu0
  %v2625 = vadd.f32 0.0, %v2624
  %v2626 = vpop.f32.mrf.mxu0
  %v2627 = vadd.f32 0.0, %v2626
  %2628 = vmatmul.bf16.gmra.mxu0 %v352
  %v2629 = vpop.f32.mrf.mxu0
  %v2630 = vadd.f32 0.0, %v2629
  %v2631 = vpop.f32.mrf.mxu0
  %v2632 = vadd.f32 0.0, %v2631
  %2633 = vmatmul.bf16.gmra.mxu0 %v355
  %v2634 = vpop.f32.mrf.mxu0
  %v2635 = vadd.f32 0.0, %v2634
  %v2636 = vpop.f32.mrf.mxu0
  %v2637 = vadd.f32 0.0, %v2636
  %2638 = vmatmul.bf16.gmra.mxu0 %v358
  %v2639 = vpop.f32.mrf.mxu0
  %v2640 = vadd.f32 0.0, %v2639
  %v2641 = vpop.f32.mrf.mxu0
  %v2642 = vadd.f32 0.0, %v2641
  %2643 = vmatmul.bf16.gmra.mxu0 %v361
  %v2644 = vpop.f32.mrf.mxu0
  %v2645 = vadd.f32 0.0, %v2644
  %v2646 = vpop.f32.mrf.mxu0
  %v2647 = vadd.f32 0.0, %v2646
  %2648 = vmatmul.bf16.gmra.mxu0 %v364
  %v2649 = vpop.f32.mrf.mxu0
  %v2650 = vadd.f32 0.0, %v2649
  %v2651 = vpop.f32.mrf.mxu0
  %v2652 = vadd.f32 0.0, %v2651
  %2653 = vmatmul.bf16.gmra.mxu0 %v367
  %v2654 = vpop.f32.mrf.mxu0
  %v2655 = vadd.f32 0.0, %v2654
  %v2656 = vpop.f32.mrf.mxu0
  %v2657 = vadd.f32 0.0, %v2656
  %2658 = vmatmul.bf16.gmra.mxu0 %v370
  %v2659 = vpop.f32.mrf.mxu0
  %v2660 = vadd.f32 0.0, %v2659
  %v2661 = vpop.f32.mrf.mxu0
  %v2662 = vadd.f32 0.0, %v2661
  %2663 = vmatmul.bf16.gmra.mxu0 %v373
  %v2664 = vpop.f32.mrf.mxu0
  %v2665 = vadd.f32 0.0, %v2664
  %v2666 = vpop.f32.mrf.mxu0
  %v2667 = vadd.f32 0.0, %v2666
  %2668 = vmatmul.bf16.gmra.mxu0 %v376
  %v2669 = vpop.f32.mrf.mxu0
  %v2670 = vadd.f32 0.0, %v2669
  %v2671 = vpop.f32.mrf.mxu0
  %v2672 = vadd.f32 0.0, %v2671
  %2673 = vmatmul.bf16.gmra.mxu0 %v379
  %v2674 = vpop.f32.mrf.mxu0
  %v2675 = vadd.f32 0.0, %v2674
  %v2676 = vpop.f32.mrf.mxu0
  %v2677 = vadd.f32 0.0, %v2676
  %2678 = vmatmul.bf16.gmra.mxu0 %v382
  %v2679 = vpop.f32.mrf.mxu0
  %v2680 = vadd.f32 0.0, %v2679
  %v2681 = vpop.f32.mrf.mxu0
  %v2682 = vadd.f32 0.0, %v2681
  %2683 = vmatmul.bf16.gmra.mxu0 %v1258
  %v2684 = vpop.f32.mrf.mxu0
  %v2685 = vadd.f32 0.0, %v2684
  %v2686 = vpop.f32.mrf.mxu0
  %v2687 = vadd.f32 0.0, %v2686
  %2688 = vmatmul.bf16.gmra.mxu0 %v1844
  %v2689 = vpop.f32.mrf.mxu0
  %v2690 = vadd.f32 0.0, %v2689
  %v2691 = vpop.f32.mrf.mxu0
  %v2692 = vadd.f32 0.0, %v2691
  %2693 = vmatmul.bf16.gmra.mxu0 %v2430
  %v2694 = vpop.f32.mrf.mxu0
  %v2695 = vadd.f32 0.0, %v2694
  %v2696 = vpop.f32.mrf.mxu0
  %v2697 = vadd.f32 0.0, %v2696
  %2698 = vdwg.mxu0
  %2699 = vmatpush.bf16.msra.mxu0 0
  %2700 = vmatpush.bf16.msra.mxu0 0
  %2701 = vmatpush.bf16.msra.mxu0 0
  %2702 = vmatpush.bf16.msra.mxu0 0
  %2703 = vmatpush.bf16.msra.mxu0 0
  %2704 = vmatpush.bf16.msra.mxu0 0
  %2705 = vmatpush.bf16.msra.mxu0 %v2439
  %2706 = vmatpush.bf16.msra.mxu0 %v2422
  %2707 = vmatmul.bf16.gmra.mxu0 %v322
  %v2708 = vpop.f32.mrf.mxu0
  %v2709 = vadd.f32 0.0, %v2708
  %v2710 = vpop.f32.mrf.mxu0
  %v2711 = vadd.f32 0.0, %v2710
  %2712 = vmatmul.bf16.gmra.mxu0 %v325
  %v2713 = vpop.f32.mrf.mxu0
  %v2714 = vadd.f32 0.0, %v2713
  %v2715 = vpop.f32.mrf.mxu0
  %v2716 = vadd.f32 0.0, %v2715
  %2717 = vmatmul.bf16.gmra.mxu0 %v328
  %v2718 = vpop.f32.mrf.mxu0
  %v2719 = vadd.f32 0.0, %v2718
  %v2720 = vpop.f32.mrf.mxu0
  %v2721 = vadd.f32 0.0, %v2720
  %2722 = vmatmul.bf16.gmra.mxu0 %v331
  %v2723 = vpop.f32.mrf.mxu0
  %v2724 = vadd.f32 0.0, %v2723
  %v2725 = vpop.f32.mrf.mxu0
  %v2726 = vadd.f32 0.0, %v2725
  %2727 = vmatmul.bf16.gmra.mxu0 %v334
  %v2728 = vpop.f32.mrf.mxu0
  %v2729 = vadd.f32 0.0, %v2728
  %v2730 = vpop.f32.mrf.mxu0
  %v2731 = vadd.f32 0.0, %v2730
  %2732 = vmatmul.bf16.gmra.mxu0 %v337
  %v2733 = vpop.f32.mrf.mxu0
  %v2734 = vadd.f32 0.0, %v2733
  %v2735 = vpop.f32.mrf.mxu0
  %v2736 = vadd.f32 0.0, %v2735
  %2737 = vmatmul.bf16.gmra.mxu0 %v340
  %v2738 = vpop.f32.mrf.mxu0
  %v2739 = vadd.f32 0.0, %v2738
  %v2740 = vpop.f32.mrf.mxu0
  %v2741 = vadd.f32 0.0, %v2740
  %2742 = vmatmul.bf16.gmra.mxu0 %v343
  %v2743 = vpop.f32.mrf.mxu0
  %v2744 = vadd.f32 0.0, %v2743
  %v2745 = vpop.f32.mrf.mxu0
  %v2746 = vadd.f32 0.0, %v2745
  %2747 = vmatmul.bf16.gmra.mxu0 %v346
  %v2748 = vpop.f32.mrf.mxu0
  %v2749 = vadd.f32 0.0, %v2748
  %v2750 = vpop.f32.mrf.mxu0
  %v2751 = vadd.f32 0.0, %v2750
  %2752 = vmatmul.bf16.gmra.mxu0 %v349
  %v2753 = vpop.f32.mrf.mxu0
  %v2754 = vadd.f32 0.0, %v2753
  %v2755 = vpop.f32.mrf.mxu0
  %v2756 = vadd.f32 0.0, %v2755
  %2757 = vmatmul.bf16.gmra.mxu0 %v352
  %v2758 = vpop.f32.mrf.mxu0
  %v2759 = vadd.f32 0.0, %v2758
  %v2760 = vpop.f32.mrf.mxu0
  %v2761 = vadd.f32 0.0, %v2760
  %2762 = vmatmul.bf16.gmra.mxu0 %v355
  %v2763 = vpop.f32.mrf.mxu0
  %v2764 = vadd.f32 0.0, %v2763
  %v2765 = vpop.f32.mrf.mxu0
  %v2766 = vadd.f32 0.0, %v2765
  %2767 = vmatmul.bf16.gmra.mxu0 %v358
  %v2768 = vpop.f32.mrf.mxu0
  %v2769 = vadd.f32 0.0, %v2768
  %v2770 = vpop.f32.mrf.mxu0
  %v2771 = vadd.f32 0.0, %v2770
  %2772 = vmatmul.bf16.gmra.mxu0 %v361
  %v2773 = vpop.f32.mrf.mxu0
  %v2774 = vadd.f32 0.0, %v2773
  %v2775 = vpop.f32.mrf.mxu0
  %v2776 = vadd.f32 0.0, %v2775
  %2777 = vmatmul.bf16.gmra.mxu0 %v364
  %v2778 = vpop.f32.mrf.mxu0
  %v2779 = vadd.f32 0.0, %v2778
  %v2780 = vpop.f32.mrf.mxu0
  %v2781 = vadd.f32 0.0, %v2780
  %2782 = vmatmul.bf16.gmra.mxu0 %v367
  %v2783 = vpop.f32.mrf.mxu0
  %v2784 = vadd.f32 0.0, %v2783
  %v2785 = vpop.f32.mrf.mxu0
  %v2786 = vadd.f32 0.0, %v2785
  %2787 = vmatmul.bf16.gmra.mxu0 %v370
  %v2788 = vpop.f32.mrf.mxu0
  %v2789 = vadd.f32 0.0, %v2788
  %v2790 = vpop.f32.mrf.mxu0
  %v2791 = vadd.f32 0.0, %v2790
  %2792 = vmatmul.bf16.gmra.mxu0 %v373
  %v2793 = vpop.f32.mrf.mxu0
  %v2794 = vadd.f32 0.0, %v2793
  %v2795 = vpop.f32.mrf.mxu0
  %v2796 = vadd.f32 0.0, %v2795
  %2797 = vmatmul.bf16.gmra.mxu0 %v376
  %v2798 = vpop.f32.mrf.mxu0
  %v2799 = vadd.f32 0.0, %v2798
  %v2800 = vpop.f32.mrf.mxu0
  %v2801 = vadd.f32 0.0, %v2800
  %2802 = vmatmul.bf16.gmra.mxu0 %v379
  %v2803 = vpop.f32.mrf.mxu0
  %v2804 = vadd.f32 0.0, %v2803
  %v2805 = vpop.f32.mrf.mxu0
  %v2806 = vadd.f32 0.0, %v2805
  %2807 = vmatmul.bf16.gmra.mxu0 %v382
  %v2808 = vpop.f32.mrf.mxu0
  %v2809 = vadd.f32 0.0, %v2808
  %v2810 = vpop.f32.mrf.mxu0
  %v2811 = vadd.f32 0.0, %v2810
  %2812 = vmatmul.bf16.gmra.mxu0 %v1258
  %v2813 = vpop.f32.mrf.mxu0
  %v2814 = vadd.f32 0.0, %v2813
  %v2815 = vpop.f32.mrf.mxu0
  %v2816 = vadd.f32 0.0, %v2815
  %2817 = vmatmul.bf16.gmra.mxu0 %v1844
  %v2818 = vpop.f32.mrf.mxu0
  %v2819 = vadd.f32 0.0, %v2818
  %v2820 = vpop.f32.mrf.mxu0
  %v2821 = vadd.f32 0.0, %v2820
  %2822 = vmatmul.bf16.gmra.mxu0 %v2430
  %v2823 = vpop.f32.mrf.mxu0
  %v2824 = vadd.f32 0.0, %v2823
  %v2825 = vpop.f32.mrf.mxu0
  %v2826 = vadd.f32 0.0, %v2825
  %2827 = vdwg.mxu0
  %v2828 = vadd.f32 %v2242, %v2451
  %v2829 = vadd.f32 %v2243, %v2580
  %v2830 = vadd.f32 %v2244, %v2709
  %v2831 = vadd.f32 %v2245, %v2453
  %v2832 = vadd.f32 %v2246, %v2582
  %v2833 = vadd.f32 %v2247, %v2711
  %v2834 = vadd.f32 %v2248, %v2456
  %v2835 = vadd.f32 %v2249, %v2585
  %v2836 = vadd.f32 %v2250, %v2714
  %v2837 = vadd.f32 %v2251, %v2458
  %v2838 = vadd.f32 %v2252, %v2587
  %v2839 = vadd.f32 %v2253, %v2716
  %v2840 = vadd.f32 %v2254, %v2461
  %v2841 = vadd.f32 %v2255, %v2590
  %v2842 = vadd.f32 %v2256, %v2719
  %v2843 = vadd.f32 %v2257, %v2463
  %v2844 = vadd.f32 %v2258, %v2592
  %v2845 = vadd.f32 %v2259, %v2721
  %v2846 = vadd.f32 %v2260, %v2466
  %v2847 = vadd.f32 %v2261, %v2595
  %v2848 = vadd.f32 %v2262, %v2724
  %v2849 = vadd.f32 %v2263, %v2468
  %v2850 = vadd.f32 %v2264, %v2597
  %v2851 = vadd.f32 %v2265, %v2726
  %v2852 = vadd.f32 %v2266, %v2471
  %v2853 = vadd.f32 %v2267, %v2600
  %v2854 = vadd.f32 %v2268, %v2729
  %v2855 = vadd.f32 %v2269, %v2473
  %v2856 = vadd.f32 %v2270, %v2602
  %v2857 = vadd.f32 %v2271, %v2731
  %v2858 = vadd.f32 %v2272, %v2476
  %v2859 = vadd.f32 %v2273, %v2605
  %v2860 = vadd.f32 %v2274, %v2734
  %v2861 = vadd.f32 %v2275, %v2478
  %v2862 = vadd.f32 %v2276, %v2607
  %v2863 = vadd.f32 %v2277, %v2736
  %v2864 = vadd.f32 %v2278, %v2481
  %v2865 = vadd.f32 %v2279, %v2610
  %v2866 = vadd.f32 %v2280, %v2739
  %v2867 = vadd.f32 %v2281, %v2483
  %v2868 = vadd.f32 %v2282, %v2612
  %v2869 = vadd.f32 %v2283, %v2741
  %v2870 = vadd.f32 %v2284, %v2486
  %v2871 = vadd.f32 %v2285, %v2615
  %v2872 = vadd.f32 %v2286, %v2744
  %v2873 = vadd.f32 %v2287, %v2488
  %v2874 = vadd.f32 %v2288, %v2617
  %v2875 = vadd.f32 %v2289, %v2746
  %v2876 = vadd.f32 %v2290, %v2491
  %v2877 = vadd.f32 %v2291, %v2620
  %v2878 = vadd.f32 %v2292, %v2749
  %v2879 = vadd.f32 %v2293, %v2493
  %v2880 = vadd.f32 %v2294, %v2622
  %v2881 = vadd.f32 %v2295, %v2751
  %v2882 = vadd.f32 %v2296, %v2496
  %v2883 = vadd.f32 %v2297, %v2625
  %v2884 = vadd.f32 %v2298, %v2754
  %v2885 = vadd.f32 %v2299, %v2498
  %v2886 = vadd.f32 %v2300, %v2627
  %v2887 = vadd.f32 %v2301, %v2756
  %v2888 = vadd.f32 %v2302, %v2501
  %v2889 = vadd.f32 %v2303, %v2630
  %v2890 = vadd.f32 %v2304, %v2759
  %v2891 = vadd.f32 %v2305, %v2503
  %v2892 = vadd.f32 %v2306, %v2632
  %v2893 = vadd.f32 %v2307, %v2761
  %v2894 = vadd.f32 %v2308, %v2506
  %v2895 = vadd.f32 %v2309, %v2635
  %v2896 = vadd.f32 %v2310, %v2764
  %v2897 = vadd.f32 %v2311, %v2508
  %v2898 = vadd.f32 %v2312, %v2637
  %v2899 = vadd.f32 %v2313, %v2766
  %v2900 = vadd.f32 %v2314, %v2511
  %v2901 = vadd.f32 %v2315, %v2640
  %v2902 = vadd.f32 %v2316, %v2769
  %v2903 = vadd.f32 %v2317, %v2513
  %v2904 = vadd.f32 %v2318, %v2642
  %v2905 = vadd.f32 %v2319, %v2771
  %v2906 = vadd.f32 %v2320, %v2516
  %v2907 = vadd.f32 %v2321, %v2645
  %v2908 = vadd.f32 %v2322, %v2774
  %v2909 = vadd.f32 %v2323, %v2518
  %v2910 = vadd.f32 %v2324, %v2647
  %v2911 = vadd.f32 %v2325, %v2776
  %v2912 = vadd.f32 %v2326, %v2521
  %v2913 = vadd.f32 %v2327, %v2650
  %v2914 = vadd.f32 %v2328, %v2779
  %v2915 = vadd.f32 %v2329, %v2523
  %v2916 = vadd.f32 %v2330, %v2652
  %v2917 = vadd.f32 %v2331, %v2781
  %v2918 = vadd.f32 %v2332, %v2526
  %v2919 = vadd.f32 %v2333, %v2655
  %v2920 = vadd.f32 %v2334, %v2784
  %v2921 = vadd.f32 %v2335, %v2528
  %v2922 = vadd.f32 %v2336, %v2657
  %v2923 = vadd.f32 %v2337, %v2786
  %v2924 = vadd.f32 %v2338, %v2531
  %v2925 = vadd.f32 %v2339, %v2660
  %v2926 = vadd.f32 %v2340, %v2789
  %v2927 = vadd.f32 %v2341, %v2533
  %v2928 = vadd.f32 %v2342, %v2662
  %v2929 = vadd.f32 %v2343, %v2791
  %v2930 = vadd.f32 %v2344, %v2536
  %v2931 = vadd.f32 %v2345, %v2665
  %v2932 = vadd.f32 %v2346, %v2794
  %v2933 = vadd.f32 %v2347, %v2538
  %v2934 = vadd.f32 %v2348, %v2667
  %v2935 = vadd.f32 %v2349, %v2796
  %v2936 = vadd.f32 %v2350, %v2541
  %v2937 = vadd.f32 %v2351, %v2670
  %v2938 = vadd.f32 %v2352, %v2799
  %v2939 = vadd.f32 %v2353, %v2543
  %v2940 = vadd.f32 %v2354, %v2672
  %v2941 = vadd.f32 %v2355, %v2801
  %v2942 = vadd.f32 %v2356, %v2546
  %v2943 = vadd.f32 %v2357, %v2675
  %v2944 = vadd.f32 %v2358, %v2804
  %v2945 = vadd.f32 %v2359, %v2548
  %v2946 = vadd.f32 %v2360, %v2677
  %v2947 = vadd.f32 %v2361, %v2806
  %v2948 = vadd.f32 %v2362, %v2551
  %v2949 = vadd.f32 %v2363, %v2680
  %v2950 = vadd.f32 %v2364, %v2809
  %v2951 = vadd.f32 %v2365, %v2553
  %v2952 = vadd.f32 %v2366, %v2682
  %v2953 = vadd.f32 %v2367, %v2811
  %v2954 = vadd.f32 %v2368, %v2556
  %v2955 = vadd.f32 %v2369, %v2685
  %v2956 = vadd.f32 %v2370, %v2814
  %v2957 = vadd.f32 %v2371, %v2558
  %v2958 = vadd.f32 %v2372, %v2687
  %v2959 = vadd.f32 %v2373, %v2816
  %v2960 = vadd.f32 %v2374, %v2561
  %v2961 = vadd.f32 %v2375, %v2690
  %v2962 = vadd.f32 %v2376, %v2819
  %v2963 = vadd.f32 %v2377, %v2563
  %v2964 = vadd.f32 %v2378, %v2692
  %v2965 = vadd.f32 %v2379, %v2821
  %v2966 = vadd.f32 %v2380, %v2566
  %v2967 = vadd.f32 %v2381, %v2695
  %v2968 = vadd.f32 %v2382, %v2824
  %v2969 = vadd.f32 %v2383, %v2568
  %v2970 = vadd.f32 %v2384, %v2697
  %v2971 = vadd.f32 %v2385, %v2826
  %v2972 = vld [vmem:[%s2] sm:$0x7]
  %v2974 = vperm.slane %v2972, 0
  %v2975 = vperm.slane %v2972, 1
  %v2976 = vperm.slane %v2972, 2
  %v2980 = vadd.f32 %v2828, %v2974
  %v2981 = vadd.f32 %v2829, %v2975
  %v2982 = vadd.f32 %v2830, %v2976
  %v2983 = vadd.f32 %v2831, %v2974
  %v2984 = vadd.f32 %v2832, %v2975
  %v2985 = vadd.f32 %v2833, %v2976
  %v2986 = vadd.f32 %v2834, %v2974
  %v2987 = vadd.f32 %v2835, %v2975
  %v2988 = vadd.f32 %v2836, %v2976
  %v2989 = vadd.f32 %v2837, %v2974
  %v2990 = vadd.f32 %v2838, %v2975
  %v2991 = vadd.f32 %v2839, %v2976
  %v2992 = vadd.f32 %v2840, %v2974
  %v2993 = vadd.f32 %v2841, %v2975
  %v2994 = vadd.f32 %v2842, %v2976
  %v2995 = vadd.f32 %v2843, %v2974
  %v2996 = vadd.f32 %v2844, %v2975
  %v2997 = vadd.f32 %v2845, %v2976
  %v2998 = vadd.f32 %v2846, %v2974
  %v2999 = vadd.f32 %v2847, %v2975
  %v3000 = vadd.f32 %v2848, %v2976
  %v3001 = vadd.f32 %v2849, %v2974
  %v3002 = vadd.f32 %v2850, %v2975
  %v3003 = vadd.f32 %v2851, %v2976
  %v3004 = vadd.f32 %v2852, %v2974
  %v3005 = vadd.f32 %v2853, %v2975
  %v3006 = vadd.f32 %v2854, %v2976
  %v3007 = vadd.f32 %v2855, %v2974
  %v3008 = vadd.f32 %v2856, %v2975
  %v3009 = vadd.f32 %v2857, %v2976
  %v3010 = vadd.f32 %v2858, %v2974
  %v3011 = vadd.f32 %v2859, %v2975
  %v3012 = vadd.f32 %v2860, %v2976
  %v3013 = vadd.f32 %v2861, %v2974
  %v3014 = vadd.f32 %v2862, %v2975
  %v3015 = vadd.f32 %v2863, %v2976
  %v3016 = vadd.f32 %v2864, %v2974
  %v3017 = vadd.f32 %v2865, %v2975
  %v3018 = vadd.f32 %v2866, %v2976
  %v3019 = vadd.f32 %v2867, %v2974
  %v3020 = vadd.f32 %v2868, %v2975
  %v3021 = vadd.f32 %v2869, %v2976
  %v3022 = vadd.f32 %v2870, %v2974
  %v3023 = vadd.f32 %v2871, %v2975
  %v3024 = vadd.f32 %v2872, %v2976
  %v3025 = vadd.f32 %v2873, %v2974
  %v3026 = vadd.f32 %v2874, %v2975
  %v3027 = vadd.f32 %v2875, %v2976
  %v3028 = vadd.f32 %v2876, %v2974
  %v3029 = vadd.f32 %v2877, %v2975
  %v3030 = vadd.f32 %v2878, %v2976
  %v3031 = vadd.f32 %v2879, %v2974
  %v3032 = vadd.f32 %v2880, %v2975
  %v3033 = vadd.f32 %v2881, %v2976
  %v3034 = vadd.f32 %v2882, %v2974
  %v3035 = vadd.f32 %v2883, %v2975
  %v3036 = vadd.f32 %v2884, %v2976
  %v3037 = vadd.f32 %v2885, %v2974
  %v3038 = vadd.f32 %v2886, %v2975
  %v3039 = vadd.f32 %v2887, %v2976
  %v3040 = vadd.f32 %v2888, %v2974
  %v3041 = vadd.f32 %v2889, %v2975
  %v3042 = vadd.f32 %v2890, %v2976
  %v3043 = vadd.f32 %v2891, %v2974
  %v3044 = vadd.f32 %v2892, %v2975
  %v3045 = vadd.f32 %v2893, %v2976
  %v3046 = vadd.f32 %v2894, %v2974
  %v3047 = vadd.f32 %v2895, %v2975
  %v3048 = vadd.f32 %v2896, %v2976
  %v3049 = vadd.f32 %v2897, %v2974
  %v3050 = vadd.f32 %v2898, %v2975
  %v3051 = vadd.f32 %v2899, %v2976
  %v3052 = vadd.f32 %v2900, %v2974
  %v3053 = vadd.f32 %v2901, %v2975
  %v3054 = vadd.f32 %v2902, %v2976
  %v3055 = vadd.f32 %v2903, %v2974
  %v3056 = vadd.f32 %v2904, %v2975
  %v3057 = vadd.f32 %v2905, %v2976
  %v3058 = vadd.f32 %v2906, %v2974
  %v3059 = vadd.f32 %v2907, %v2975
  %v3060 = vadd.f32 %v2908, %v2976
  %v3061 = vadd.f32 %v2909, %v2974
  %v3062 = vadd.f32 %v2910, %v2975
  %v3063 = vadd.f32 %v2911, %v2976
  %v3064 = vadd.f32 %v2912, %v2974
  %v3065 = vadd.f32 %v2913, %v2975
  %v3066 = vadd.f32 %v2914, %v2976
  %v3067 = vadd.f32 %v2915, %v2974
  %v3068 = vadd.f32 %v2916, %v2975
  %v3069 = vadd.f32 %v2917, %v2976
  %v3070 = vadd.f32 %v2918, %v2974
  %v3071 = vadd.f32 %v2919, %v2975
  %v3072 = vadd.f32 %v2920, %v2976
  %v3073 = vadd.f32 %v2921, %v2974
  %v3074 = vadd.f32 %v2922, %v2975
  %v3075 = vadd.f32 %v2923, %v2976
  %v3076 = vadd.f32 %v2924, %v2974
  %v3077 = vadd.f32 %v2925, %v2975
  %v3078 = vadd.f32 %v2926, %v2976
  %v3079 = vadd.f32 %v2927, %v2974
  %v3080 = vadd.f32 %v2928, %v2975
  %v3081 = vadd.f32 %v2929, %v2976
  %v3082 = vadd.f32 %v2930, %v2974
  %v3083 = vadd.f32 %v2931, %v2975
  %v3084 = vadd.f32 %v2932, %v2976
  %v3085 = vadd.f32 %v2933, %v2974
  %v3086 = vadd.f32 %v2934, %v2975
  %v3087 = vadd.f32 %v2935, %v2976
  %v3088 = vadd.f32 %v2936, %v2974
  %v3089 = vadd.f32 %v2937, %v2975
  %v3090 = vadd.f32 %v2938, %v2976
  %v3091 = vadd.f32 %v2939, %v2974
  %v3092 = vadd.f32 %v2940, %v2975
  %v3093 = vadd.f32 %v2941, %v2976
  %v3094 = vadd.f32 %v2942, %v2974
  %v3095 = vadd.f32 %v2943, %v2975
  %v3096 = vadd.f32 %v2944, %v2976
  %v3097 = vadd.f32 %v2945, %v2974
  %v3098 = vadd.f32 %v2946, %v2975
  %v3099 = vadd.f32 %v2947, %v2976
  %v3100 = vadd.f32 %v2948, %v2974
  %v3101 = vadd.f32 %v2949, %v2975
  %v3102 = vadd.f32 %v2950, %v2976
  %v3103 = vadd.f32 %v2951, %v2974
  %v3104 = vadd.f32 %v2952, %v2975
  %v3105 = vadd.f32 %v2953, %v2976
  %v3106 = vadd.f32 %v2954, %v2974
  %v3107 = vadd.f32 %v2955, %v2975
  %v3108 = vadd.f32 %v2956, %v2976
  %v3109 = vadd.f32 %v2957, %v2974
  %v3110 = vadd.f32 %v2958, %v2975
  %v3111 = vadd.f32 %v2959, %v2976
  %v3112 = vadd.f32 %v2960, %v2974
  %v3113 = vadd.f32 %v2961, %v2975
  %v3114 = vadd.f32 %v2962, %v2976
  %v3115 = vadd.f32 %v2963, %v2974
  %v3116 = vadd.f32 %v2964, %v2975
  %v3117 = vadd.f32 %v2965, %v2976
  %v3118 = vadd.f32 %v2966, %v2974
  %v3119 = vadd.f32 %v2967, %v2975
  %v3120 = vadd.f32 %v2968, %v2976
  %v3121 = vadd.f32 %v2969, %v2974
  %v3122 = vadd.f32 %v2970, %v2975
  %v3123 = vadd.f32 %v2971, %v2976
  %v3124 = vmax.f32 %v2980, 0.0
  %v3125 = vmax.f32 %v2981, 0.0
  %v3126 = vmax.f32 %v2982, 0.0
  %v3127 = vmax.f32 %v2983, 0.0
  %v3128 = vmax.f32 %v2984, 0.0
  %v3129 = vmax.f32 %v2985, 0.0
  %v3130 = vmax.f32 %v2986, 0.0
  %v3131 = vmax.f32 %v2987, 0.0
  %v3132 = vmax.f32 %v2988, 0.0
  %v3133 = vmax.f32 %v2989, 0.0
  %v3134 = vmax.f32 %v2990, 0.0
  %v3135 = vmax.f32 %v2991, 0.0
  %v3136 = vmax.f32 %v2992, 0.0
  %v3137 = vmax.f32 %v2993, 0.0
  %v3138 = vmax.f32 %v2994, 0.0
  %v3139 = vmax.f32 %v2995, 0.0
  %v3140 = vmax.f32 %v2996, 0.0
  %v3141 = vmax.f32 %v2997, 0.0
  %v3142 = vmax.f32 %v2998, 0.0
  %v3143 = vmax.f32 %v2999, 0.0
  %v3144 = vmax.f32 %v3000, 0.0
  %v3145 = vmax.f32 %v3001, 0.0
  %v3146 = vmax.f32 %v3002, 0.0
  %v3147 = vmax.f32 %v3003, 0.0
  %v3148 = vmax.f32 %v3004, 0.0
  %v3149 = vmax.f32 %v3005, 0.0
  %v3150 = vmax.f32 %v3006, 0.0
  %v3151 = vmax.f32 %v3007, 0.0
  %v3152 = vmax.f32 %v3008, 0.0
  %v3153 = vmax.f32 %v3009, 0.0
  %v3154 = vmax.f32 %v3010, 0.0
  %v3155 = vmax.f32 %v3011, 0.0
  %v3156 = vmax.f32 %v3012, 0.0
  %v3157 = vmax.f32 %v3013, 0.0
  %v3158 = vmax.f32 %v3014, 0.0
  %v3159 = vmax.f32 %v3015, 0.0
  %v3160 = vmax.f32 %v3016, 0.0
  %v3161 = vmax.f32 %v3017, 0.0
  %v3162 = vmax.f32 %v3018, 0.0
  %v3163 = vmax.f32 %v3019, 0.0
  %v3164 = vmax.f32 %v3020, 0.0
  %v3165 = vmax.f32 %v3021, 0.0
  %v3166 = vmax.f32 %v3022, 0.0
  %v3167 = vmax.f32 %v3023, 0.0
  %v3168 = vmax.f32 %v3024, 0.0
  %v3169 = vmax.f32 %v3025, 0.0
  %v3170 = vmax.f32 %v3026, 0.0
  %v3171 = vmax.f32 %v3027, 0.0
  %v3172 = vmax.f32 %v3028, 0.0
  %v3173 = vmax.f32 %v3029, 0.0
  %v3174 = vmax.f32 %v3030, 0.0
  %v3175 = vmax.f32 %v3031, 0.0
  %v3176 = vmax.f32 %v3032, 0.0
  %v3177 = vmax.f32 %v3033, 0.0
  %v3178 = vmax.f32 %v3034, 0.0
  %v3179 = vmax.f32 %v3035, 0.0
  %v3180 = vmax.f32 %v3036, 0.0
  %v3181 = vmax.f32 %v3037, 0.0
  %v3182 = vmax.f32 %v3038, 0.0
  %v3183 = vmax.f32 %v3039, 0.0
  %v3184 = vmax.f32 %v3040, 0.0
  %v3185 = vmax.f32 %v3041, 0.0
  %v3186 = vmax.f32 %v3042, 0.0
  %v3187 = vmax.f32 %v3043, 0.0
  %v3188 = vmax.f32 %v3044, 0.0
  %v3189 = vmax.f32 %v3045, 0.0
  %v3190 = vmax.f32 %v3046, 0.0
  %v3191 = vmax.f32 %v3047, 0.0
  %v3192 = vmax.f32 %v3048, 0.0
  %v3193 = vmax.f32 %v3049, 0.0
  %v3194 = vmax.f32 %v3050, 0.0
  %v3195 = vmax.f32 %v3051, 0.0
  %v3196 = vmax.f32 %v3052, 0.0
  %v3197 = vmax.f32 %v3053, 0.0
  %v3198 = vmax.f32 %v3054, 0.0
  %v3199 = vmax.f32 %v3055, 0.0
  %v3200 = vmax.f32 %v3056, 0.0
  %v3201 = vmax.f32 %v3057, 0.0
  %v3202 = vmax.f32 %v3058, 0.0
  %v3203 = vmax.f32 %v3059, 0.0
  %v3204 = vmax.f32 %v3060, 0.0
  %v3205 = vmax.f32 %v3061, 0.0
  %v3206 = vmax.f32 %v3062, 0.0
  %v3207 = vmax.f32 %v3063, 0.0
  %v3208 = vmax.f32 %v3064, 0.0
  %v3209 = vmax.f32 %v3065, 0.0
  %v3210 = vmax.f32 %v3066, 0.0
  %v3211 = vmax.f32 %v3067, 0.0
  %v3212 = vmax.f32 %v3068, 0.0
  %v3213 = vmax.f32 %v3069, 0.0
  %v3214 = vmax.f32 %v3070, 0.0
  %v3215 = vmax.f32 %v3071, 0.0
  %v3216 = vmax.f32 %v3072, 0.0
  %v3217 = vmax.f32 %v3073, 0.0
  %v3218 = vmax.f32 %v3074, 0.0
  %v3219 = vmax.f32 %v3075, 0.0
  %v3220 = vmax.f32 %v3076, 0.0
  %v3221 = vmax.f32 %v3077, 0.0
  %v3222 = vmax.f32 %v3078, 0.0
  %v3223 = vmax.f32 %v3079, 0.0
  %v3224 = vmax.f32 %v3080, 0.0
  %v3225 = vmax.f32 %v3081, 0.0
  %v3226 = vmax.f32 %v3082, 0.0
  %v3227 = vmax.f32 %v3083, 0.0
  %v3228 = vmax.f32 %v3084, 0.0
  %v3229 = vmax.f32 %v3085, 0.0
  %v3230 = vmax.f32 %v3086, 0.0
  %v3231 = vmax.f32 %v3087, 0.0
  %v3232 = vmax.f32 %v3088, 0.0
  %v3233 = vmax.f32 %v3089, 0.0
  %v3234 = vmax.f32 %v3090, 0.0
  %v3235 = vmax.f32 %v3091, 0.0
  %v3236 = vmax.f32 %v3092, 0.0
  %v3237 = vmax.f32 %v3093, 0.0
  %v3238 = vmax.f32 %v3094, 0.0
  %v3239 = vmax.f32 %v3095, 0.0
  %v3240 = vmax.f32 %v3096, 0.0
  %v3241 = vmax.f32 %v3097, 0.0
  %v3242 = vmax.f32 %v3098, 0.0
  %v3243 = vmax.f32 %v3099, 0.0
  %v3244 = vmax.f32 %v3100, 0.0
  %v3245 = vmax.f32 %v3101, 0.0
  %v3246 = vmax.f32 %v3102, 0.0
  %v3247 = vmax.f32 %v3103, 0.0
  %v3248 = vmax.f32 %v3104, 0.0
  %v3249 = vmax.f32 %v3105, 0.0
  %v3250 = vmax.f32 %v3106, 0.0
  %v3251 = vmax.f32 %v3107, 0.0
  %v3252 = vmax.f32 %v3108, 0.0
  %v3253 = vmax.f32 %v3109, 0.0
  %v3254 = vmax.f32 %v3110, 0.0
  %v3255 = vmax.f32 %v3111, 0.0
  %v3256 = vmax.f32 %v3112, 0.0
  %v3257 = vmax.f32 %v3113, 0.0
  %v3258 = vmax.f32 %v3114, 0.0
  %v3259 = vmax.f32 %v3115, 0.0
  %v3260 = vmax.f32 %v3116, 0.0
  %v3261 = vmax.f32 %v3117, 0.0
  %v3262 = vmax.f32 %v3118, 0.0
  %v3263 = vmax.f32 %v3119, 0.0
  %v3264 = vmax.f32 %v3120, 0.0
  %v3265 = vmax.f32 %v3121, 0.0
  %v3266 = vmax.f32 %v3122, 0.0
  %v3267 = vmax.f32 %v3123, 0.0
  %v3268 = vadd.f32 %v3124, %v3130
  %v3269 = vadd.f32 %v3125, %v3131
  %v3270 = vadd.f32 %v3126, %v3132
  %v3271 = vadd.f32 %v3127, %v3133
  %v3272 = vadd.f32 %v3128, %v3134
  %v3273 = vadd.f32 %v3129, %v3135
  %v3274 = vadd.f32 %v3142, %v3148
  %v3275 = vadd.f32 %v3143, %v3149
  %v3276 = vadd.f32 %v3144, %v3150
  %v3277 = vadd.f32 %v3145, %v3151
  %v3278 = vadd.f32 %v3146, %v3152
  %v3279 = vadd.f32 %v3147, %v3153
  %v3280 = vadd.f32 %v3160, %v3166
  %v3281 = vadd.f32 %v3161, %v3167
  %v3282 = vadd.f32 %v3162, %v3168
  %v3283 = vadd.f32 %v3163, %v3169
  %v3284 = vadd.f32 %v3164, %v3170
  %v3285 = vadd.f32 %v3165, %v3171
  %v3286 = vadd.f32 %v3178, %v3184
  %v3287 = vadd.f32 %v3179, %v3185
  %v3288 = vadd.f32 %v3180, %v3186
  %v3289 = vadd.f32 %v3181, %v3187
  %v3290 = vadd.f32 %v3182, %v3188
  %v3291 = vadd.f32 %v3183, %v3189
  %v3292 = vadd.f32 %v3196, %v3202
  %v3293 = vadd.f32 %v3197, %v3203
  %v3294 = vadd.f32 %v3198, %v3204
  %v3295 = vadd.f32 %v3199, %v3205
  %v3296 = vadd.f32 %v3200, %v3206
  %v3297 = vadd.f32 %v3201, %v3207
  %v3298 = vadd.f32 %v3214, %v3220
  %v3299 = vadd.f32 %v3215, %v3221
  %v3300 = vadd.f32 %v3216, %v3222
  %v3301 = vadd.f32 %v3217, %v3223
  %v3302 = vadd.f32 %v3218, %v3224
  %v3303 = vadd.f32 %v3219, %v3225
  %v3304 = vadd.f32 %v3232, %v3238
  %v3305 = vadd.f32 %v3233, %v3239
  %v3306 = vadd.f32 %v3234, %v3240
  %v3307 = vadd.f32 %v3235, %v3241
  %v3308 = vadd.f32 %v3236, %v3242
  %v3309 = vadd.f32 %v3237, %v3243
  %v3310 = vadd.f32 %v3250, %v3256
  %v3311 = vadd.f32 %v3251, %v3257
  %v3312 = vadd.f32 %v3252, %v3258
  %v3313 = vadd.f32 %v3253, %v3259
  %v3314 = vadd.f32 %v3254, %v3260
  %v3315 = vadd.f32 %v3255, %v3261
  %v3316 = vadd.f32 %v3268, %v3136
  %v3317 = vadd.f32 %v3269, %v3137
  %v3318 = vadd.f32 %v3270, %v3138
  %v3319 = vadd.f32 %v3271, %v3139
  %v3320 = vadd.f32 %v3272, %v3140
  %v3321 = vadd.f32 %v3273, %v3141
  %v3322 = vadd.f32 %v3274, %v3154
  %v3323 = vadd.f32 %v3275, %v3155
  %v3324 = vadd.f32 %v3276, %v3156
  %v3325 = vadd.f32 %v3277, %v3157
  %v3326 = vadd.f32 %v3278, %v3158
  %v3327 = vadd.f32 %v3279, %v3159
  %v3328 = vadd.f32 %v3280, %v3172
  %v3329 = vadd.f32 %v3281, %v3173
  %v3330 = vadd.f32 %v3282, %v3174
  %v3331 = vadd.f32 %v3283, %v3175
  %v3332 = vadd.f32 %v3284, %v3176
  %v3333 = vadd.f32 %v3285, %v3177
  %v3334 = vadd.f32 %v3286, %v3190
  %v3335 = vadd.f32 %v3287, %v3191
  %v3336 = vadd.f32 %v3288, %v3192
  %v3337 = vadd.f32 %v3289, %v3193
  %v3338 = vadd.f32 %v3290, %v3194
  %v3339 = vadd.f32 %v3291, %v3195
  %v3340 = vadd.f32 %v3292, %v3208
  %v3341 = vadd.f32 %v3293, %v3209
  %v3342 = vadd.f32 %v3294, %v3210
  %v3343 = vadd.f32 %v3295, %v3211
  %v3344 = vadd.f32 %v3296, %v3212
  %v3345 = vadd.f32 %v3297, %v3213
  %v3346 = vadd.f32 %v3298, %v3226
  %v3347 = vadd.f32 %v3299, %v3227
  %v3348 = vadd.f32 %v3300, %v3228
  %v3349 = vadd.f32 %v3301, %v3229
  %v3350 = vadd.f32 %v3302, %v3230
  %v3351 = vadd.f32 %v3303, %v3231
  %v3352 = vadd.f32 %v3304, %v3244
  %v3353 = vadd.f32 %v3305, %v3245
  %v3354 = vadd.f32 %v3306, %v3246
  %v3355 = vadd.f32 %v3307, %v3247
  %v3356 = vadd.f32 %v3308, %v3248
  %v3357 = vadd.f32 %v3309, %v3249
  %v3358 = vadd.f32 %v3310, %v3262
  %v3359 = vadd.f32 %v3311, %v3263
  %v3360 = vadd.f32 %v3312, %v3264
  %v3361 = vadd.f32 %v3313, %v3265
  %v3362 = vadd.f32 %v3314, %v3266
  %v3363 = vadd.f32 %v3315, %v3267
  %v3364 = vmul.f32 %v3316, 0.33333334
  %v3365 = vmul.f32 %v3317, 0.33333334
  %v3366 = vmul.f32 %v3318, 0.33333334
  %v3367 = vmul.f32 %v3319, 0.33333334
  %v3368 = vmul.f32 %v3320, 0.33333334
  %v3369 = vmul.f32 %v3321, 0.33333334
  %v3370 = vmul.f32 %v3322, 0.33333334
  %v3371 = vmul.f32 %v3323, 0.33333334
  %v3372 = vmul.f32 %v3324, 0.33333334
  %v3373 = vmul.f32 %v3325, 0.33333334
  %v3374 = vmul.f32 %v3326, 0.33333334
  %v3375 = vmul.f32 %v3327, 0.33333334
  %v3376 = vmul.f32 %v3328, 0.33333334
  %v3377 = vmul.f32 %v3329, 0.33333334
  %v3378 = vmul.f32 %v3330, 0.33333334
  %v3379 = vmul.f32 %v3331, 0.33333334
  %v3380 = vmul.f32 %v3332, 0.33333334
  %v3381 = vmul.f32 %v3333, 0.33333334
  %v3382 = vmul.f32 %v3334, 0.33333334
  %v3383 = vmul.f32 %v3335, 0.33333334
  %v3384 = vmul.f32 %v3336, 0.33333334
  %v3385 = vmul.f32 %v3337, 0.33333334
  %v3386 = vmul.f32 %v3338, 0.33333334
  %v3387 = vmul.f32 %v3339, 0.33333334
  %v3388 = vmul.f32 %v3340, 0.33333334
  %v3389 = vmul.f32 %v3341, 0.33333334
  %v3390 = vmul.f32 %v3342, 0.33333334
  %v3391 = vmul.f32 %v3343, 0.33333334
  %v3392 = vmul.f32 %v3344, 0.33333334
  %v3393 = vmul.f32 %v3345, 0.33333334
  %v3394 = vmul.f32 %v3346, 0.33333334
  %v3395 = vmul.f32 %v3347, 0.33333334
  %v3396 = vmul.f32 %v3348, 0.33333334
  %v3397 = vmul.f32 %v3349, 0.33333334
  %v3398 = vmul.f32 %v3350, 0.33333334
  %v3399 = vmul.f32 %v3351, 0.33333334
  %v3400 = vmul.f32 %v3352, 0.33333334
  %v3401 = vmul.f32 %v3353, 0.33333334
  %v3402 = vmul.f32 %v3354, 0.33333334
  %v3403 = vmul.f32 %v3355, 0.33333334
  %v3404 = vmul.f32 %v3356, 0.33333334
  %v3405 = vmul.f32 %v3357, 0.33333334
  %v3406 = vmul.f32 %v3358, 0.33333334
  %v3407 = vmul.f32 %v3359, 0.33333334
  %v3408 = vmul.f32 %v3360, 0.33333334
  %v3409 = vmul.f32 %v3361, 0.33333334
  %v3410 = vmul.f32 %v3362, 0.33333334
  %v3411 = vmul.f32 %v3363, 0.33333334
  %v3412 = vpack.c.bf16 %v3365, %v3364
  %v3413 = vpack.c.bf16 %v3366, %v3366
  %v3414 = vpack.c.bf16 %v3368, %v3367
  %v3415 = vpack.c.bf16 %v3369, %v3369
  %v3416 = vpack.c.bf16 %v3371, %v3370
  %v3417 = vpack.c.bf16 %v3372, %v3372
  %v3418 = vpack.c.bf16 %v3374, %v3373
  %v3419 = vpack.c.bf16 %v3375, %v3375
  %v3420 = vpack.c.bf16 %v3377, %v3376
  %v3421 = vpack.c.bf16 %v3378, %v3378
  %v3422 = vpack.c.bf16 %v3380, %v3379
  %v3423 = vpack.c.bf16 %v3381, %v3381
  %v3424 = vpack.c.bf16 %v3383, %v3382
  %v3425 = vpack.c.bf16 %v3384, %v3384
  %v3426 = vpack.c.bf16 %v3386, %v3385
  %v3427 = vpack.c.bf16 %v3387, %v3387
  %v3428 = vpack.c.bf16 %v3389, %v3388
  %v3429 = vpack.c.bf16 %v3390, %v3390
  %v3430 = vpack.c.bf16 %v3392, %v3391
  %v3431 = vpack.c.bf16 %v3393, %v3393
  %v3432 = vpack.c.bf16 %v3395, %v3394
  %v3433 = vpack.c.bf16 %v3396, %v3396
  %v3434 = vpack.c.bf16 %v3398, %v3397
  %v3435 = vpack.c.bf16 %v3399, %v3399
  %v3436 = vpack.c.bf16 %v3401, %v3400
  %v3437 = vpack.c.bf16 %v3402, %v3402
  %v3438 = vpack.c.bf16 %v3404, %v3403
  %v3439 = vpack.c.bf16 %v3405, %v3405
  %v3440 = vpack.c.bf16 %v3407, %v3406
  %v3441 = vpack.c.bf16 %v3408, %v3408
  %v3442 = vpack.c.bf16 %v3410, %v3409
  %v3443 = vpack.c.bf16 %v3411, %v3411
  %v3444 = vld [vmem:[%s3] sm:$0xf]
  %v3445 = vld [vmem:[%s3 + $0x4] sm:$0xf]
  %v3446 = vld [vmem:[%s3 + $0x8] sm:$0xf]
  %v3447 = vld [vmem:[%s3 + $0xc] sm:$0xf]
  %v3448 = vld [vmem:[%s3 + $0x10] sm:$0xf]
  %v3449 = vld [vmem:[%s3 + $0x14] sm:$0xf]
  %v3450 = vld [vmem:[%s3 + $0x18] sm:$0xf]
  %v3451 = vld [vmem:[%s3 + $0x1c] sm:$0xf]
  %v3452 = vld [vmem:[%s3 + $0x20] sm:$0xf]
  %v3453 = vld [vmem:[%s3 + $0x24] sm:$0xf]
  %v3454 = vld [vmem:[%s3 + $0x28] sm:$0xf]
  %v3455 = vld [vmem:[%s3 + $0x2c] sm:$0xf]
  %v3456 = vld [vmem:[%s3 + $0x30] sm:$0xf]
  %v3457 = vld [vmem:[%s3 + $0x34] sm:$0xf]
  %v3458 = vld [vmem:[%s3 + $0x38] sm:$0xf]
  %v3459 = vld [vmem:[%s3 + $0x3c] sm:$0xf]
  %v3460 = vld [vmem:[%s3 + $0x40] sm:$0xf]
  %v3461 = vld [vmem:[%s3 + $0x44] sm:$0xf]
  %v3462 = vld [vmem:[%s3 + $0x48] sm:$0xf]
  %v3463 = vld [vmem:[%s3 + $0x4c] sm:$0xf]
  %v3464 = vld [vmem:[%s3 + $0x50] sm:$0xf]
  %v3465 = vld [vmem:[%s3 + $0x54] sm:$0xf]
  %v3466 = vld [vmem:[%s3 + $0x58] sm:$0xf]
  %v3467 = vld [vmem:[%s3 + $0x5c] sm:$0xf]
  %v3468 = vld [vmem:[%s3 + $0x60] sm:$0xf]
  %v3469 = vld [vmem:[%s3 + $0x64] sm:$0xf]
  %v3470 = vld [vmem:[%s3 + $0x68] sm:$0xf]
  %v3471 = vld [vmem:[%s3 + $0x6c] sm:$0xf]
  %v3472 = vld [vmem:[%s3 + $0x70] sm:$0xf]
  %v3473 = vld [vmem:[%s3 + $0x74] sm:$0xf]
  %v3474 = vld [vmem:[%s3 + $0x78] sm:$0xf]
  %v3475 = vld [vmem:[%s3 + $0x7c] sm:$0xf]
  %v3476 = vld [vmem:[%s3 + $0x80] sm:$0xf]
  %v3477 = vld [vmem:[%s3 + $0x84] sm:$0xf]
  %v3478 = vld [vmem:[%s3 + $0x88] sm:$0xf]
  %v3479 = vld [vmem:[%s3 + $0x8c] sm:$0xf]
  %s3480 = scalar_lea.vmem %s3, 144
  %v3481 = vld [vmem:[%s3480] sm:$0xf]
  %v3482 = vld [vmem:[%s3480 + $0x4] sm:$0xf]
  %v3483 = vld [vmem:[%s3480 + $0x8] sm:$0xf]
  %v3484 = vld [vmem:[%s3480 + $0xc] sm:$0xf]
  %v3485 = vld [vmem:[%s3480 + $0x10] sm:$0xf]
  %v3486 = vld [vmem:[%s3480 + $0x14] sm:$0xf]
  %v3487 = vld [vmem:[%s3480 + $0x18] sm:$0xf]
  %v3488 = vld [vmem:[%s3480 + $0x1c] sm:$0xf]
  %v3489 = vld [vmem:[%s3480 + $0x20] sm:$0xf]
  %v3490 = vld [vmem:[%s3480 + $0x24] sm:$0xf]
  %v3491 = vld [vmem:[%s3480 + $0x28] sm:$0xf]
  %v3492 = vld [vmem:[%s3480 + $0x2c] sm:$0xf]
  %v3493 = vld [vmem:[%s3480 + $0x30] sm:$0xf]
  %v3494 = vld [vmem:[%s3480 + $0x34] sm:$0xf]
  %v3495 = vld [vmem:[%s3480 + $0x38] sm:$0xf]
  %v3496 = vld [vmem:[%s3480 + $0x3c] sm:$0xf]
  %v3497 = vld [vmem:[%s3480 + $0x40] sm:$0xf]
  %v3498 = vld [vmem:[%s3480 + $0x44] sm:$0xf]
  %v3499 = vld [vmem:[%s3480 + $0x48] sm:$0xf]
  %v3500 = vld [vmem:[%s3480 + $0x4c] sm:$0xf]
  %v3501 = vld [vmem:[%s3480 + $0x50] sm:$0xf]
  %v3502 = vld [vmem:[%s3480 + $0x54] sm:$0xf]
  %v3503 = vld [vmem:[%s3480 + $0x58] sm:$0xf]
  %v3504 = vld [vmem:[%s3480 + $0x5c] sm:$0xf]
  %v3505 = vld [vmem:[%s3480 + $0x60] sm:$0xf]
  %v3506 = vld [vmem:[%s3480 + $0x64] sm:$0xf]
  %v3507 = vld [vmem:[%s3480 + $0x68] sm:$0xf]
  %v3508 = vld [vmem:[%s3480 + $0x6c] sm:$0xf]
  %v3509 = vld [vmem:[%s3480 + $0x70] sm:$0xf]
  %v3510 = vld [vmem:[%s3480 + $0x74] sm:$0xf]
  %v3511 = vld [vmem:[%s3480 + $0x78] sm:$0xf]
  %v3512 = vld [vmem:[%s3480 + $0x7c] sm:$0xf]
  %v3513 = vld [vmem:[%s3480 + $0x80] sm:$0xf]
  %v3514 = vld [vmem:[%s3480 + $0x84] sm:$0xf]
  %v3515 = vld [vmem:[%s3480 + $0x88] sm:$0xf]
  %v3516 = vld [vmem:[%s3480 + $0x8c] sm:$0xf]
  %v3533 = vunpack.c.l.b16 %v3416
  %v3534 = vunpack.c.h.b16 %v3416
  %v3535 = vunpack.c.l.b16 %v3417
  %v3536 = vunpack.c.l.b16 %v3418
  %v3537 = vunpack.c.h.b16 %v3418
  %v3538 = vunpack.c.l.b16 %v3419
  %v3539 = vunpack.c.l.b16 %v3420
  %v3540 = vunpack.c.h.b16 %v3420
  %v3541 = vunpack.c.l.b16 %v3421
  %v3542 = vunpack.c.l.b16 %v3422
  %v3543 = vunpack.c.h.b16 %v3422
  %v3544 = vunpack.c.l.b16 %v3423
  %v3545 = vunpack.c.l.b16 %v3424
  %v3546 = vunpack.c.h.b16 %v3424
  %v3547 = vunpack.c.l.b16 %v3425
  %v3548 = vunpack.c.l.b16 %v3426
  %v3549 = vunpack.c.h.b16 %v3426
  %v3550 = vunpack.c.l.b16 %v3427
  %v3551 = vunpack.c.l.b16 %v3428
  %v3552 = vunpack.c.h.b16 %v3428
  %v3553 = vunpack.c.l.b16 %v3429
  %v3554 = vunpack.c.l.b16 %v3430
  %v3555 = vunpack.c.h.b16 %v3430
  %v3556 = vunpack.c.l.b16 %v3431
  %v3557 = vpack.c.b16 %v3536, %v3533
  %v3558 = vpack.c.b16 %v3537, %v3534
  %v3559 = vpack.c.b16 %v3538, %v3535
  %v3560 = vpack.c.b16 %v3542, %v3539
  %v3561 = vpack.c.b16 %v3543, %v3540
  %v3562 = vpack.c.b16 %v3544, %v3541
  %v3563 = vpack.c.b16 %v3548, %v3545
  %v3564 = vpack.c.b16 %v3549, %v3546
  %v3565 = vpack.c.b16 %v3550, %v3547
  %v3566 = vpack.c.b16 %v3554, %v3551
  %v3567 = vpack.c.b16 %v3555, %v3552
  %v3568 = vpack.c.b16 %v3556, %v3553
  %v3613 = vunpack.c.l.b16 %v3481
  %v3614 = vunpack.c.l.b16 %v3482
  %v3615 = vunpack.c.l.b16 %v3483
  %v3616 = vunpack.c.l.b16 %v3484
  %v3617 = vunpack.c.l.b16 %v3485
  %v3618 = vunpack.c.l.b16 %v3486
  %v3619 = vunpack.c.l.b16 %v3487
  %v3620 = vunpack.c.l.b16 %v3488
  %v3621 = vunpack.c.l.b16 %v3489
  %v3622 = vunpack.c.l.b16 %v3490
  %v3623 = vunpack.c.l.b16 %v3491
  %v3624 = vunpack.c.l.b16 %v3492
  %v3625 = vunpack.c.l.b16 %v3493
  %v3626 = vunpack.c.l.b16 %v3494
  %v3627 = vunpack.c.l.b16 %v3495
  %v3628 = vunpack.c.l.b16 %v3496
  %v3629 = vunpack.c.l.b16 %v3497
  %v3630 = vunpack.c.l.b16 %v3498
  %v3631 = vunpack.c.l.b16 %v3499
  %v3632 = vunpack.c.l.b16 %v3500
  %v3633 = vunpack.c.l.b16 %v3501
  %v3634 = vunpack.c.l.b16 %v3502
  %v3635 = vunpack.c.l.b16 %v3503
  %v3636 = vunpack.c.l.b16 %v3504
  %v3637 = vunpack.c.l.b16 %v3505
  %v3638 = vunpack.c.l.b16 %v3506
  %v3639 = vunpack.c.l.b16 %v3507
  %v3640 = vunpack.c.l.b16 %v3508
  %v3641 = vunpack.c.l.b16 %v3509
  %v3642 = vunpack.c.l.b16 %v3510
  %v3643 = vunpack.c.l.b16 %v3511
  %v3644 = vunpack.c.l.b16 %v3512
  %v3645 = vunpack.c.l.b16 %v3513
  %v3646 = vunpack.c.l.b16 %v3514
  %v3647 = vunpack.c.l.b16 %v3515
  %v3648 = vunpack.c.l.b16 %v3516
  %v3649 = vpack.c.b16 %v3614, %v3613
  %v3650 = vpack.c.b16 %v3616, %v3615
  %v3651 = vpack.c.b16 %v3618, %v3617
  %v3652 = vpack.c.b16 %v3620, %v3619
  %v3653 = vpack.c.b16 %v3622, %v3621
  %v3654 = vpack.c.b16 %v3624, %v3623
  %v3655 = vpack.c.b16 %v3626, %v3625
  %v3656 = vpack.c.b16 %v3628, %v3627
  %v3657 = vpack.c.b16 %v3630, %v3629
  %v3658 = vpack.c.b16 %v3632, %v3631
  %v3659 = vpack.c.b16 %v3634, %v3633
  %v3660 = vpack.c.b16 %v3636, %v3635
  %v3661 = vpack.c.b16 %v3638, %v3637
  %v3662 = vpack.c.b16 %v3640, %v3639
  %v3663 = vpack.c.b16 %v3642, %v3641
  %v3664 = vpack.c.b16 %v3644, %v3643
  %v3665 = vpack.c.b16 %v3646, %v3645
  %v3666 = vpack.c.b16 %v3648, %v3647
  %vm3685 = vcmask 261120
  %v3687 = vsel %vm3685, %v3559, 0
  %v3690 = vsel %vm3685, %v3562, 0
  %v3693 = vsel %vm3685, %v3565, 0
  %v3696 = vsel %vm3685, %v3568, 0
  %3698 = vmatpush.bf16.msra.mxu0 %v3656
  %3699 = vmatpush.bf16.msra.mxu0 %v3655
  %3700 = vmatpush.bf16.msra.mxu0 %v3654
  %3701 = vmatpush.bf16.msra.mxu0 %v3653
  %3702 = vmatpush.bf16.msra.mxu0 %v3652
  %3703 = vmatpush.bf16.msra.mxu0 %v3651
  %3704 = vmatpush.bf16.msra.mxu0 %v3650
  %3705 = vmatpush.bf16.msra.mxu0 %v3649
  %3706 = vmatmul.bf16.gmra.mxu0 %v3557
  %v3707 = vpop.f32.mrf.mxu0
  %v3708 = vadd.f32 0.0, %v3707
  %v3709 = vpop.f32.mrf.mxu0
  %v3710 = vadd.f32 0.0, %v3709
  %3711 = vmatmul.bf16.gmra.mxu0 %v3560
  %v3712 = vpop.f32.mrf.mxu0
  %v3713 = vadd.f32 0.0, %v3712
  %v3714 = vpop.f32.mrf.mxu0
  %v3715 = vadd.f32 0.0, %v3714
  %3716 = vmatmul.bf16.gmra.mxu0 %v3563
  %v3717 = vpop.f32.mrf.mxu0
  %v3718 = vadd.f32 0.0, %v3717
  %v3719 = vpop.f32.mrf.mxu0
  %v3720 = vadd.f32 0.0, %v3719
  %3721 = vmatmul.bf16.gmra.mxu0 %v3566
  %v3722 = vpop.f32.mrf.mxu0
  %v3723 = vadd.f32 0.0, %v3722
  %v3724 = vpop.f32.mrf.mxu0
  %v3725 = vadd.f32 0.0, %v3724
  %3726 = vdwg.mxu0
  %3727 = vmatpush.bf16.msra.mxu0 %v3664
  %3728 = vmatpush.bf16.msra.mxu0 %v3663
  %3729 = vmatpush.bf16.msra.mxu0 %v3662
  %3730 = vmatpush.bf16.msra.mxu0 %v3661
  %3731 = vmatpush.bf16.msra.mxu0 %v3660
  %3732 = vmatpush.bf16.msra.mxu0 %v3659
  %3733 = vmatpush.bf16.msra.mxu0 %v3658
  %3734 = vmatpush.bf16.msra.mxu0 %v3657
  %3735 = vmatmul.bf16.gmra.mxu0 %v3558
  %v3736 = vpop.f32.mrf.mxu0
  %v3737 = vadd.f32 %v3708, %v3736
  %v3738 = vpop.f32.mrf.mxu0
  %v3739 = vadd.f32 %v3710, %v3738
  %3740 = vmatmul.bf16.gmra.mxu0 %v3561
  %v3741 = vpop.f32.mrf.mxu0
  %v3742 = vadd.f32 %v3713, %v3741
  %v3743 = vpop.f32.mrf.mxu0
  %v3744 = vadd.f32 %v3715, %v3743
  %3745 = vmatmul.bf16.gmra.mxu0 %v3564
  %v3746 = vpop.f32.mrf.mxu0
  %v3747 = vadd.f32 %v3718, %v3746
  %v3748 = vpop.f32.mrf.mxu0
  %v3749 = vadd.f32 %v3720, %v3748
  %3750 = vmatmul.bf16.gmra.mxu0 %v3567
  %v3751 = vpop.f32.mrf.mxu0
  %v3752 = vadd.f32 %v3723, %v3751
  %v3753 = vpop.f32.mrf.mxu0
  %v3754 = vadd.f32 %v3725, %v3753
  %3755 = vdwg.mxu0
  %3756 = vmatpush.bf16.msra.mxu0 0
  %3757 = vmatpush.bf16.msra.mxu0 0
  %3758 = vmatpush.bf16.msra.mxu0 0
  %3759 = vmatpush.bf16.msra.mxu0 0
  %3760 = vmatpush.bf16.msra.mxu0 0
  %3761 = vmatpush.bf16.msra.mxu0 0
  %3762 = vmatpush.bf16.msra.mxu0 %v3666
  %3763 = vmatpush.bf16.msra.mxu0 %v3665
  %3764 = vmatmul.bf16.gmra.mxu0 %v3687
  %v3765 = vpop.f32.mrf.mxu0
  %v3766 = vadd.f32 %v3737, %v3765
  %v3767 = vpop.f32.mrf.mxu0
  %v3768 = vadd.f32 %v3739, %v3767
  %3769 = vmatmul.bf16.gmra.mxu0 %v3690
  %v3770 = vpop.f32.mrf.mxu0
  %v3771 = vadd.f32 %v3742, %v3770
  %v3772 = vpop.f32.mrf.mxu0
  %v3773 = vadd.f32 %v3744, %v3772
  %3774 = vmatmul.bf16.gmra.mxu0 %v3693
  %v3775 = vpop.f32.mrf.mxu0
  %v3776 = vadd.f32 %v3747, %v3775
  %v3777 = vpop.f32.mrf.mxu0
  %v3778 = vadd.f32 %v3749, %v3777
  %3779 = vmatmul.bf16.gmra.mxu0 %v3696
  %v3780 = vpop.f32.mrf.mxu0
  %v3781 = vadd.f32 %v3752, %v3780
  %v3782 = vpop.f32.mrf.mxu0
  %v3783 = vadd.f32 %v3754, %v3782
  %3784 = vdwg.mxu0
  %v3789 = vunpack.c.l.b16 %v3412
  %v3790 = vunpack.c.h.b16 %v3412
  %v3791 = vunpack.c.l.b16 %v3413
  %v3792 = vunpack.c.l.b16 %v3414
  %v3793 = vunpack.c.h.b16 %v3414
  %v3794 = vunpack.c.l.b16 %v3415
  %v3795 = vpack.c.b16 %v3792, %v3789
  %v3796 = vpack.c.b16 %v3793, %v3790
  %v3797 = vpack.c.b16 %v3794, %v3791
  %v3836 = vunpack.c.l.b16 %v3444
  %v3837 = vunpack.c.l.b16 %v3445
  %v3838 = vunpack.c.l.b16 %v3446
  %v3839 = vunpack.c.l.b16 %v3447
  %v3840 = vunpack.c.l.b16 %v3448
  %v3841 = vunpack.c.l.b16 %v3449
  %v3842 = vunpack.c.l.b16 %v3450
  %v3843 = vunpack.c.l.b16 %v3451
  %v3844 = vunpack.c.l.b16 %v3452
  %v3845 = vunpack.c.l.b16 %v3453
  %v3846 = vunpack.c.l.b16 %v3454
  %v3847 = vunpack.c.l.b16 %v3455
  %v3848 = vunpack.c.l.b16 %v3456
  %v3849 = vunpack.c.l.b16 %v3457
  %v3850 = vunpack.c.l.b16 %v3458
  %v3851 = vunpack.c.l.b16 %v3459
  %v3852 = vunpack.c.l.b16 %v3460
  %v3853 = vunpack.c.l.b16 %v3461
  %v3854 = vunpack.c.l.b16 %v3462
  %v3855 = vunpack.c.l.b16 %v3463
  %v3856 = vunpack.c.l.b16 %v3464
  %v3857 = vunpack.c.l.b16 %v3465
  %v3858 = vunpack.c.l.b16 %v3466
  %v3859 = vunpack.c.l.b16 %v3467
  %v3860 = vunpack.c.l.b16 %v3468
  %v3861 = vunpack.c.l.b16 %v3469
  %v3862 = vunpack.c.l.b16 %v3470
  %v3863 = vunpack.c.l.b16 %v3471
  %v3864 = vunpack.c.l.b16 %v3472
  %v3865 = vunpack.c.l.b16 %v3473
  %v3866 = vunpack.c.l.b16 %v3474
  %v3867 = vunpack.c.l.b16 %v3475
  %v3868 = vunpack.c.l.b16 %v3476
  %v3869 = vunpack.c.l.b16 %v3477
  %v3870 = vunpack.c.l.b16 %v3478
  %v3871 = vunpack.c.l.b16 %v3479
  %v3872 = vpack.c.b16 %v3837, %v3836
  %v3873 = vpack.c.b16 %v3839, %v3838
  %v3874 = vpack.c.b16 %v3841, %v3840
  %v3875 = vpack.c.b16 %v3843, %v3842
  %v3876 = vpack.c.b16 %v3845, %v3844
  %v3877 = vpack.c.b16 %v3847, %v3846
  %v3878 = vpack.c.b16 %v3849, %v3848
  %v3879 = vpack.c.b16 %v3851, %v3850
  %v3880 = vpack.c.b16 %v3853, %v3852
  %v3881 = vpack.c.b16 %v3855, %v3854
  %v3882 = vpack.c.b16 %v3857, %v3856
  %v3883 = vpack.c.b16 %v3859, %v3858
  %v3884 = vpack.c.b16 %v3861, %v3860
  %v3885 = vpack.c.b16 %v3863, %v3862
  %v3886 = vpack.c.b16 %v3865, %v3864
  %v3887 = vpack.c.b16 %v3867, %v3866
  %v3888 = vpack.c.b16 %v3869, %v3868
  %v3889 = vpack.c.b16 %v3871, %v3870
  %v3909 = vsel %vm3685, %v3797, 0
  %3911 = vmatpush.bf16.msra.mxu0 %v3879
  %3912 = vmatpush.bf16.msra.mxu0 %v3878
  %3913 = vmatpush.bf16.msra.mxu0 %v3877
  %3914 = vmatpush.bf16.msra.mxu0 %v3876
  %3915 = vmatpush.bf16.msra.mxu0 %v3875
  %3916 = vmatpush.bf16.msra.mxu0 %v3874
  %3917 = vmatpush.bf16.msra.mxu0 %v3873
  %3918 = vmatpush.bf16.msra.mxu0 %v3872
  %3919 = vmatmul.bf16.gmra.mxu0 %v3795
  %v3920 = vpop.f32.mrf.mxu0
  %v3921 = vadd.f32 %v3766, %v3920
  %v3922 = vpop.f32.mrf.mxu0
  %v3923 = vadd.f32 %v3768, %v3922
  %3924 = vmatmul.bf16.gmra.mxu0 %v3557
  %v3925 = vpop.f32.mrf.mxu0
  %v3926 = vadd.f32 %v3771, %v3925
  %v3927 = vpop.f32.mrf.mxu0
  %v3928 = vadd.f32 %v3773, %v3927
  %3929 = vmatmul.bf16.gmra.mxu0 %v3560
  %v3930 = vpop.f32.mrf.mxu0
  %v3931 = vadd.f32 %v3776, %v3930
  %v3932 = vpop.f32.mrf.mxu0
  %v3933 = vadd.f32 %v3778, %v3932
  %3934 = vmatmul.bf16.gmra.mxu0 %v3563
  %v3935 = vpop.f32.mrf.mxu0
  %v3936 = vadd.f32 %v3781, %v3935
  %v3937 = vpop.f32.mrf.mxu0
  %v3938 = vadd.f32 %v3783, %v3937
  %3939 = vdwg.mxu0
  %3940 = vmatpush.bf16.msra.mxu0 %v3887
  %3941 = vmatpush.bf16.msra.mxu0 %v3886
  %3942 = vmatpush.bf16.msra.mxu0 %v3885
  %3943 = vmatpush.bf16.msra.mxu0 %v3884
  %3944 = vmatpush.bf16.msra.mxu0 %v3883
  %3945 = vmatpush.bf16.msra.mxu0 %v3882
  %3946 = vmatpush.bf16.msra.mxu0 %v3881
  %3947 = vmatpush.bf16.msra.mxu0 %v3880
  %3948 = vmatmul.bf16.gmra.mxu0 %v3796
  %v3949 = vpop.f32.mrf.mxu0
  %v3950 = vadd.f32 %v3921, %v3949
  %v3951 = vpop.f32.mrf.mxu0
  %v3952 = vadd.f32 %v3923, %v3951
  %3953 = vmatmul.bf16.gmra.mxu0 %v3558
  %v3954 = vpop.f32.mrf.mxu0
  %v3955 = vadd.f32 %v3926, %v3954
  %v3956 = vpop.f32.mrf.mxu0
  %v3957 = vadd.f32 %v3928, %v3956
  %3958 = vmatmul.bf16.gmra.mxu0 %v3561
  %v3959 = vpop.f32.mrf.mxu0
  %v3960 = vadd.f32 %v3931, %v3959
  %v3961 = vpop.f32.mrf.mxu0
  %v3962 = vadd.f32 %v3933, %v3961
  %3963 = vmatmul.bf16.gmra.mxu0 %v3564
  %v3964 = vpop.f32.mrf.mxu0
  %v3965 = vadd.f32 %v3936, %v3964
  %v3966 = vpop.f32.mrf.mxu0
  %v3967 = vadd.f32 %v3938, %v3966
  %3968 = vdwg.mxu0
  %3969 = vmatpush.bf16.msra.mxu0 0
  %3970 = vmatpush.bf16.msra.mxu0 0
  %3971 = vmatpush.bf16.msra.mxu0 0
  %3972 = vmatpush.bf16.msra.mxu0 0
  %3973 = vmatpush.bf16.msra.mxu0 0
  %3974 = vmatpush.bf16.msra.mxu0 0
  %3975 = vmatpush.bf16.msra.mxu0 %v3889
  %3976 = vmatpush.bf16.msra.mxu0 %v3888
  %3977 = vmatmul.bf16.gmra.mxu0 %v3909
  %v3978 = vpop.f32.mrf.mxu0
  %v3979 = vadd.f32 %v3950, %v3978
  %v3980 = vpop.f32.mrf.mxu0
  %v3981 = vadd.f32 %v3952, %v3980
  %3982 = vmatmul.bf16.gmra.mxu0 %v3687
  %v3983 = vpop.f32.mrf.mxu0
  %v3984 = vadd.f32 %v3955, %v3983
  %v3985 = vpop.f32.mrf.mxu0
  %v3986 = vadd.f32 %v3957, %v3985
  %3987 = vmatmul.bf16.gmra.mxu0 %v3690
  %v3988 = vpop.f32.mrf.mxu0
  %v3989 = vadd.f32 %v3960, %v3988
  %v3990 = vpop.f32.mrf.mxu0
  %v3991 = vadd.f32 %v3962, %v3990
  %3992 = vmatmul.bf16.gmra.mxu0 %v3693
  %v3993 = vpop.f32.mrf.mxu0
  %v3994 = vadd.f32 %v3965, %v3993
  %v3995 = vpop.f32.mrf.mxu0
  %v3996 = vadd.f32 %v3967, %v3995
  %3997 = vdwg.mxu0
  %s3998 = scalar_lea.vmem %s3, 288
  %v3999 = vld [vmem:[%s3998] sm:$0xf]
  %v4000 = vld [vmem:[%s3998 + $0x4] sm:$0xf]
  %v4001 = vld [vmem:[%s3998 + $0x8] sm:$0xf]
  %v4002 = vld [vmem:[%s3998 + $0xc] sm:$0xf]
  %v4003 = vld [vmem:[%s3998 + $0x10] sm:$0xf]
  %v4004 = vld [vmem:[%s3998 + $0x14] sm:$0xf]
  %v4005 = vld [vmem:[%s3998 + $0x18] sm:$0xf]
  %v4006 = vld [vmem:[%s3998 + $0x1c] sm:$0xf]
  %v4007 = vld [vmem:[%s3998 + $0x20] sm:$0xf]
  %v4008 = vld [vmem:[%s3998 + $0x24] sm:$0xf]
  %v4009 = vld [vmem:[%s3998 + $0x28] sm:$0xf]
  %v4010 = vld [vmem:[%s3998 + $0x2c] sm:$0xf]
  %v4011 = vld [vmem:[%s3998 + $0x30] sm:$0xf]
  %v4012 = vld [vmem:[%s3998 + $0x34] sm:$0xf]
  %v4013 = vld [vmem:[%s3998 + $0x38] sm:$0xf]
  %v4014 = vld [vmem:[%s3998 + $0x3c] sm:$0xf]
  %v4015 = vld [vmem:[%s3998 + $0x40] sm:$0xf]
  %v4016 = vld [vmem:[%s3998 + $0x44] sm:$0xf]
  %v4017 = vld [vmem:[%s3998 + $0x48] sm:$0xf]
  %v4018 = vld [vmem:[%s3998 + $0x4c] sm:$0xf]
  %v4019 = vld [vmem:[%s3998 + $0x50] sm:$0xf]
  %v4020 = vld [vmem:[%s3998 + $0x54] sm:$0xf]
  %v4021 = vld [vmem:[%s3998 + $0x58] sm:$0xf]
  %v4022 = vld [vmem:[%s3998 + $0x5c] sm:$0xf]
  %v4023 = vld [vmem:[%s3998 + $0x60] sm:$0xf]
  %v4024 = vld [vmem:[%s3998 + $0x64] sm:$0xf]
  %v4025 = vld [vmem:[%s3998 + $0x68] sm:$0xf]
  %v4026 = vld [vmem:[%s3998 + $0x6c] sm:$0xf]
  %v4027 = vld [vmem:[%s3998 + $0x70] sm:$0xf]
  %v4028 = vld [vmem:[%s3998 + $0x74] sm:$0xf]
  %v4029 = vld [vmem:[%s3998 + $0x78] sm:$0xf]
  %v4030 = vld [vmem:[%s3998 + $0x7c] sm:$0xf]
  %v4031 = vld [vmem:[%s3998 + $0x80] sm:$0xf]
  %v4032 = vld [vmem:[%s3998 + $0x84] sm:$0xf]
  %v4033 = vld [vmem:[%s3998 + $0x88] sm:$0xf]
  %v4034 = vld [vmem:[%s3998 + $0x8c] sm:$0xf]
  %v4039 = vunpack.c.l.b16 %v3432
  %v4040 = vunpack.c.h.b16 %v3432
  %v4041 = vunpack.c.l.b16 %v3433
  %v4042 = vunpack.c.l.b16 %v3434
  %v4043 = vunpack.c.h.b16 %v3434
  %v4044 = vunpack.c.l.b16 %v3435
  %v4045 = vpack.c.b16 %v4042, %v4039
  %v4046 = vpack.c.b16 %v4043, %v4040
  %v4047 = vpack.c.b16 %v4044, %v4041
  %v4086 = vunpack.c.l.b16 %v3999
  %v4087 = vunpack.c.l.b16 %v4000
  %v4088 = vunpack.c.l.b16 %v4001
  %v4089 = vunpack.c.l.b16 %v4002
  %v4090 = vunpack.c.l.b16 %v4003
  %v4091 = vunpack.c.l.b16 %v4004
  %v4092 = vunpack.c.l.b16 %v4005
  %v4093 = vunpack.c.l.b16 %v4006
  %v4094 = vunpack.c.l.b16 %v4007
  %v4095 = vunpack.c.l.b16 %v4008
  %v4096 = vunpack.c.l.b16 %v4009
  %v4097 = vunpack.c.l.b16 %v4010
  %v4098 = vunpack.c.l.b16 %v4011
  %v4099 = vunpack.c.l.b16 %v4012
  %v4100 = vunpack.c.l.b16 %v4013
  %v4101 = vunpack.c.l.b16 %v4014
  %v4102 = vunpack.c.l.b16 %v4015
  %v4103 = vunpack.c.l.b16 %v4016
  %v4104 = vunpack.c.l.b16 %v4017
  %v4105 = vunpack.c.l.b16 %v4018
  %v4106 = vunpack.c.l.b16 %v4019
  %v4107 = vunpack.c.l.b16 %v4020
  %v4108 = vunpack.c.l.b16 %v4021
  %v4109 = vunpack.c.l.b16 %v4022
  %v4110 = vunpack.c.l.b16 %v4023
  %v4111 = vunpack.c.l.b16 %v4024
  %v4112 = vunpack.c.l.b16 %v4025
  %v4113 = vunpack.c.l.b16 %v4026
  %v4114 = vunpack.c.l.b16 %v4027
  %v4115 = vunpack.c.l.b16 %v4028
  %v4116 = vunpack.c.l.b16 %v4029
  %v4117 = vunpack.c.l.b16 %v4030
  %v4118 = vunpack.c.l.b16 %v4031
  %v4119 = vunpack.c.l.b16 %v4032
  %v4120 = vunpack.c.l.b16 %v4033
  %v4121 = vunpack.c.l.b16 %v4034
  %v4122 = vpack.c.b16 %v4087, %v4086
  %v4123 = vpack.c.b16 %v4089, %v4088
  %v4124 = vpack.c.b16 %v4091, %v4090
  %v4125 = vpack.c.b16 %v4093, %v4092
  %v4126 = vpack.c.b16 %v4095, %v4094
  %v4127 = vpack.c.b16 %v4097, %v4096
  %v4128 = vpack.c.b16 %v4099, %v4098
  %v4129 = vpack.c.b16 %v4101, %v4100
  %v4130 = vpack.c.b16 %v4103, %v4102
  %v4131 = vpack.c.b16 %v4105, %v4104
  %v4132 = vpack.c.b16 %v4107, %v4106
  %v4133 = vpack.c.b16 %v4109, %v4108
  %v4134 = vpack.c.b16 %v4111, %v4110
  %v4135 = vpack.c.b16 %v4113, %v4112
  %v4136 = vpack.c.b16 %v4115, %v4114
  %v4137 = vpack.c.b16 %v4117, %v4116
  %v4138 = vpack.c.b16 %v4119, %v4118
  %v4139 = vpack.c.b16 %v4121, %v4120
  %v4159 = vsel %vm3685, %v4047, 0
  %4161 = vmatpush.bf16.msra.mxu0 %v4129
  %4162 = vmatpush.bf16.msra.mxu0 %v4128
  %4163 = vmatpush.bf16.msra.mxu0 %v4127
  %4164 = vmatpush.bf16.msra.mxu0 %v4126
  %4165 = vmatpush.bf16.msra.mxu0 %v4125
  %4166 = vmatpush.bf16.msra.mxu0 %v4124
  %4167 = vmatpush.bf16.msra.mxu0 %v4123
  %4168 = vmatpush.bf16.msra.mxu0 %v4122
  %4169 = vmatmul.bf16.gmra.mxu0 %v3560
  %v4170 = vpop.f32.mrf.mxu0
  %v4171 = vadd.f32 0.0, %v4170
  %v4172 = vpop.f32.mrf.mxu0
  %v4173 = vadd.f32 0.0, %v4172
  %4174 = vmatmul.bf16.gmra.mxu0 %v3563
  %v4175 = vpop.f32.mrf.mxu0
  %v4176 = vadd.f32 0.0, %v4175
  %v4177 = vpop.f32.mrf.mxu0
  %v4178 = vadd.f32 0.0, %v4177
  %4179 = vmatmul.bf16.gmra.mxu0 %v3566
  %v4180 = vpop.f32.mrf.mxu0
  %v4181 = vadd.f32 0.0, %v4180
  %v4182 = vpop.f32.mrf.mxu0
  %v4183 = vadd.f32 0.0, %v4182
  %4184 = vmatmul.bf16.gmra.mxu0 %v4045
  %v4185 = vpop.f32.mrf.mxu0
  %v4186 = vadd.f32 0.0, %v4185
  %v4187 = vpop.f32.mrf.mxu0
  %v4188 = vadd.f32 0.0, %v4187
  %4189 = vdwg.mxu0
  %4190 = vmatpush.bf16.msra.mxu0 %v4137
  %4191 = vmatpush.bf16.msra.mxu0 %v4136
  %4192 = vmatpush.bf16.msra.mxu0 %v4135
  %4193 = vmatpush.bf16.msra.mxu0 %v4134
  %4194 = vmatpush.bf16.msra.mxu0 %v4133
  %4195 = vmatpush.bf16.msra.mxu0 %v4132
  %4196 = vmatpush.bf16.msra.mxu0 %v4131
  %4197 = vmatpush.bf16.msra.mxu0 %v4130
  %4198 = vmatmul.bf16.gmra.mxu0 %v3561
  %v4199 = vpop.f32.mrf.mxu0
  %v4200 = vadd.f32 %v4171, %v4199
  %v4201 = vpop.f32.mrf.mxu0
  %v4202 = vadd.f32 %v4173, %v4201
  %4203 = vmatmul.bf16.gmra.mxu0 %v3564
  %v4204 = vpop.f32.mrf.mxu0
  %v4205 = vadd.f32 %v4176, %v4204
  %v4206 = vpop.f32.mrf.mxu0
  %v4207 = vadd.f32 %v4178, %v4206
  %4208 = vmatmul.bf16.gmra.mxu0 %v3567
  %v4209 = vpop.f32.mrf.mxu0
  %v4210 = vadd.f32 %v4181, %v4209
  %v4211 = vpop.f32.mrf.mxu0
  %v4212 = vadd.f32 %v4183, %v4211
  %4213 = vmatmul.bf16.gmra.mxu0 %v4046
  %v4214 = vpop.f32.mrf.mxu0
  %v4215 = vadd.f32 %v4186, %v4214
  %v4216 = vpop.f32.mrf.mxu0
  %v4217 = vadd.f32 %v4188, %v4216
  %4218 = vdwg.mxu0
  %4219 = vmatpush.bf16.msra.mxu0 0
  %4220 = vmatpush.bf16.msra.mxu0 0
  %4221 = vmatpush.bf16.msra.mxu0 0
  %4222 = vmatpush.bf16.msra.mxu0 0
  %4223 = vmatpush.bf16.msra.mxu0 0
  %4224 = vmatpush.bf16.msra.mxu0 0
  %4225 = vmatpush.bf16.msra.mxu0 %v4139
  %4226 = vmatpush.bf16.msra.mxu0 %v4138
  %4227 = vmatmul.bf16.gmra.mxu0 %v3690
  %v4228 = vpop.f32.mrf.mxu0
  %v4229 = vadd.f32 %v4200, %v4228
  %v4230 = vpop.f32.mrf.mxu0
  %v4231 = vadd.f32 %v4202, %v4230
  %4232 = vmatmul.bf16.gmra.mxu0 %v3693
  %v4233 = vpop.f32.mrf.mxu0
  %v4234 = vadd.f32 %v4205, %v4233
  %v4235 = vpop.f32.mrf.mxu0
  %v4236 = vadd.f32 %v4207, %v4235
  %4237 = vmatmul.bf16.gmra.mxu0 %v3696
  %v4238 = vpop.f32.mrf.mxu0
  %v4239 = vadd.f32 %v4210, %v4238
  %v4240 = vpop.f32.mrf.mxu0
  %v4241 = vadd.f32 %v4212, %v4240
  %4242 = vmatmul.bf16.gmra.mxu0 %v4159
  %v4243 = vpop.f32.mrf.mxu0
  %v4244 = vadd.f32 %v4215, %v4243
  %v4245 = vpop.f32.mrf.mxu0
  %v4246 = vadd.f32 %v4217, %v4245
  %4247 = vdwg.mxu0
  %v4248 = vadd.f32 %v3979, %v4229
  %v4249 = vadd.f32 %v3981, %v4231
  %v4250 = vadd.f32 %v3984, %v4234
  %v4251 = vadd.f32 %v3986, %v4236
  %v4252 = vadd.f32 %v3989, %v4239
  %v4253 = vadd.f32 %v3991, %v4241
  %v4254 = vadd.f32 %v3994, %v4244
  %v4255 = vadd.f32 %v3996, %v4246
  %s4256 = scalar_lea.vmem %s3, 432
  %v4257 = vld [vmem:[%s4256] sm:$0xf]
  %v4258 = vld [vmem:[%s4256 + $0x4] sm:$0xf]
  %v4259 = vld [vmem:[%s4256 + $0x8] sm:$0xf]
  %v4260 = vld [vmem:[%s4256 + $0xc] sm:$0xf]
  %v4261 = vld [vmem:[%s4256 + $0x10] sm:$0xf]
  %v4262 = vld [vmem:[%s4256 + $0x14] sm:$0xf]
  %v4263 = vld [vmem:[%s4256 + $0x18] sm:$0xf]
  %v4264 = vld [vmem:[%s4256 + $0x1c] sm:$0xf]
  %v4265 = vld [vmem:[%s4256 + $0x20] sm:$0xf]
  %v4266 = vld [vmem:[%s4256 + $0x24] sm:$0xf]
  %v4267 = vld [vmem:[%s4256 + $0x28] sm:$0xf]
  %v4268 = vld [vmem:[%s4256 + $0x2c] sm:$0xf]
  %v4269 = vld [vmem:[%s4256 + $0x30] sm:$0xf]
  %v4270 = vld [vmem:[%s4256 + $0x34] sm:$0xf]
  %v4271 = vld [vmem:[%s4256 + $0x38] sm:$0xf]
  %v4272 = vld [vmem:[%s4256 + $0x3c] sm:$0xf]
  %v4273 = vld [vmem:[%s4256 + $0x40] sm:$0xf]
  %v4274 = vld [vmem:[%s4256 + $0x44] sm:$0xf]
  %v4275 = vld [vmem:[%s4256 + $0x48] sm:$0xf]
  %v4276 = vld [vmem:[%s4256 + $0x4c] sm:$0xf]
  %v4277 = vld [vmem:[%s4256 + $0x50] sm:$0xf]
  %v4278 = vld [vmem:[%s4256 + $0x54] sm:$0xf]
  %v4279 = vld [vmem:[%s4256 + $0x58] sm:$0xf]
  %v4280 = vld [vmem:[%s4256 + $0x5c] sm:$0xf]
  %v4281 = vld [vmem:[%s4256 + $0x60] sm:$0xf]
  %v4282 = vld [vmem:[%s4256 + $0x64] sm:$0xf]
  %v4283 = vld [vmem:[%s4256 + $0x68] sm:$0xf]
  %v4284 = vld [vmem:[%s4256 + $0x6c] sm:$0xf]
  %v4285 = vld [vmem:[%s4256 + $0x70] sm:$0xf]
  %v4286 = vld [vmem:[%s4256 + $0x74] sm:$0xf]
  %v4287 = vld [vmem:[%s4256 + $0x78] sm:$0xf]
  %v4288 = vld [vmem:[%s4256 + $0x7c] sm:$0xf]
  %v4289 = vld [vmem:[%s4256 + $0x80] sm:$0xf]
  %v4290 = vld [vmem:[%s4256 + $0x84] sm:$0xf]
  %v4291 = vld [vmem:[%s4256 + $0x88] sm:$0xf]
  %v4292 = vld [vmem:[%s4256 + $0x8c] sm:$0xf]
  %v4297 = vunpack.c.l.b16 %v3436
  %v4298 = vunpack.c.h.b16 %v3436
  %v4299 = vunpack.c.l.b16 %v3437
  %v4300 = vunpack.c.l.b16 %v3438
  %v4301 = vunpack.c.h.b16 %v3438
  %v4302 = vunpack.c.l.b16 %v3439
  %v4303 = vpack.c.b16 %v4300, %v4297
  %v4304 = vpack.c.b16 %v4301, %v4298
  %v4305 = vpack.c.b16 %v4302, %v4299
  %v4344 = vunpack.c.l.b16 %v4257
  %v4345 = vunpack.c.l.b16 %v4258
  %v4346 = vunpack.c.l.b16 %v4259
  %v4347 = vunpack.c.l.b16 %v4260
  %v4348 = vunpack.c.l.b16 %v4261
  %v4349 = vunpack.c.l.b16 %v4262
  %v4350 = vunpack.c.l.b16 %v4263
  %v4351 = vunpack.c.l.b16 %v4264
  %v4352 = vunpack.c.l.b16 %v4265
  %v4353 = vunpack.c.l.b16 %v4266
  %v4354 = vunpack.c.l.b16 %v4267
  %v4355 = vunpack.c.l.b16 %v4268
  %v4356 = vunpack.c.l.b16 %v4269
  %v4357 = vunpack.c.l.b16 %v4270
  %v4358 = vunpack.c.l.b16 %v4271
  %v4359 = vunpack.c.l.b16 %v4272
  %v4360 = vunpack.c.l.b16 %v4273
  %v4361 = vunpack.c.l.b16 %v4274
  %v4362 = vunpack.c.l.b16 %v4275
  %v4363 = vunpack.c.l.b16 %v4276
  %v4364 = vunpack.c.l.b16 %v4277
  %v4365 = vunpack.c.l.b16 %v4278
  %v4366 = vunpack.c.l.b16 %v4279
  %v4367 = vunpack.c.l.b16 %v4280
  %v4368 = vunpack.c.l.b16 %v4281
  %v4369 = vunpack.c.l.b16 %v4282
  %v4370 = vunpack.c.l.b16 %v4283
  %v4371 = vunpack.c.l.b16 %v4284
  %v4372 = vunpack.c.l.b16 %v4285
  %v4373 = vunpack.c.l.b16 %v4286
  %v4374 = vunpack.c.l.b16 %v4287
  %v4375 = vunpack.c.l.b16 %v4288
  %v4376 = vunpack.c.l.b16 %v4289
  %v4377 = vunpack.c.l.b16 %v4290
  %v4378 = vunpack.c.l.b16 %v4291
  %v4379 = vunpack.c.l.b16 %v4292
  %v4380 = vpack.c.b16 %v4345, %v4344
  %v4381 = vpack.c.b16 %v4347, %v4346
  %v4382 = vpack.c.b16 %v4349, %v4348
  %v4383 = vpack.c.b16 %v4351, %v4350
  %v4384 = vpack.c.b16 %v4353, %v4352
  %v4385 = vpack.c.b16 %v4355, %v4354
  %v4386 = vpack.c.b16 %v4357, %v4356
  %v4387 = vpack.c.b16 %v4359, %v4358
  %v4388 = vpack.c.b16 %v4361, %v4360
  %v4389 = vpack.c.b16 %v4363, %v4362
  %v4390 = vpack.c.b16 %v4365, %v4364
  %v4391 = vpack.c.b16 %v4367, %v4366
  %v4392 = vpack.c.b16 %v4369, %v4368
  %v4393 = vpack.c.b16 %v4371, %v4370
  %v4394 = vpack.c.b16 %v4373, %v4372
  %v4395 = vpack.c.b16 %v4375, %v4374
  %v4396 = vpack.c.b16 %v4377, %v4376
  %v4397 = vpack.c.b16 %v4379, %v4378
  %v4417 = vsel %vm3685, %v4305, 0
  %4419 = vmatpush.bf16.msra.mxu0 %v4387
  %4420 = vmatpush.bf16.msra.mxu0 %v4386
  %4421 = vmatpush.bf16.msra.mxu0 %v4385
  %4422 = vmatpush.bf16.msra.mxu0 %v4384
  %4423 = vmatpush.bf16.msra.mxu0 %v4383
  %4424 = vmatpush.bf16.msra.mxu0 %v4382
  %4425 = vmatpush.bf16.msra.mxu0 %v4381
  %4426 = vmatpush.bf16.msra.mxu0 %v4380
  %4427 = vmatmul.bf16.gmra.mxu0 %v3563
  %v4428 = vpop.f32.mrf.mxu0
  %v4429 = vadd.f32 0.0, %v4428
  %v4430 = vpop.f32.mrf.mxu0
  %v4431 = vadd.f32 0.0, %v4430
  %4432 = vmatmul.bf16.gmra.mxu0 %v3566
  %v4433 = vpop.f32.mrf.mxu0
  %v4434 = vadd.f32 0.0, %v4433
  %v4435 = vpop.f32.mrf.mxu0
  %v4436 = vadd.f32 0.0, %v4435
  %4437 = vmatmul.bf16.gmra.mxu0 %v4045
  %v4438 = vpop.f32.mrf.mxu0
  %v4439 = vadd.f32 0.0, %v4438
  %v4440 = vpop.f32.mrf.mxu0
  %v4441 = vadd.f32 0.0, %v4440
  %4442 = vmatmul.bf16.gmra.mxu0 %v4303
  %v4443 = vpop.f32.mrf.mxu0
  %v4444 = vadd.f32 0.0, %v4443
  %v4445 = vpop.f32.mrf.mxu0
  %v4446 = vadd.f32 0.0, %v4445
  %4447 = vdwg.mxu0
  %4448 = vmatpush.bf16.msra.mxu0 %v4395
  %4449 = vmatpush.bf16.msra.mxu0 %v4394
  %4450 = vmatpush.bf16.msra.mxu0 %v4393
  %4451 = vmatpush.bf16.msra.mxu0 %v4392
  %4452 = vmatpush.bf16.msra.mxu0 %v4391
  %4453 = vmatpush.bf16.msra.mxu0 %v4390
  %4454 = vmatpush.bf16.msra.mxu0 %v4389
  %4455 = vmatpush.bf16.msra.mxu0 %v4388
  %4456 = vmatmul.bf16.gmra.mxu0 %v3564
  %v4457 = vpop.f32.mrf.mxu0
  %v4458 = vadd.f32 %v4429, %v4457
  %v4459 = vpop.f32.mrf.mxu0
  %v4460 = vadd.f32 %v4431, %v4459
  %4461 = vmatmul.bf16.gmra.mxu0 %v3567
  %v4462 = vpop.f32.mrf.mxu0
  %v4463 = vadd.f32 %v4434, %v4462
  %v4464 = vpop.f32.mrf.mxu0
  %v4465 = vadd.f32 %v4436, %v4464
  %4466 = vmatmul.bf16.gmra.mxu0 %v4046
  %v4467 = vpop.f32.mrf.mxu0
  %v4468 = vadd.f32 %v4439, %v4467
  %v4469 = vpop.f32.mrf.mxu0
  %v4470 = vadd.f32 %v4441, %v4469
  %4471 = vmatmul.bf16.gmra.mxu0 %v4304
  %v4472 = vpop.f32.mrf.mxu0
  %v4473 = vadd.f32 %v4444, %v4472
  %v4474 = vpop.f32.mrf.mxu0
  %v4475 = vadd.f32 %v4446, %v4474
  %4476 = vdwg.mxu0
  %4477 = vmatpush.bf16.msra.mxu0 0
  %4478 = vmatpush.bf16.msra.mxu0 0
  %4479 = vmatpush.bf16.msra.mxu0 0
  %4480 = vmatpush.bf16.msra.mxu0 0
  %4481 = vmatpush.bf16.msra.mxu0 0
  %4482 = vmatpush.bf16.msra.mxu0 0
  %4483 = vmatpush.bf16.msra.mxu0 %v4397
  %4484 = vmatpush.bf16.msra.mxu0 %v4396
  %4485 = vmatmul.bf16.gmra.mxu0 %v3693
  %v4486 = vpop.f32.mrf.mxu0
  %v4487 = vadd.f32 %v4458, %v4486
  %v4488 = vpop.f32.mrf.mxu0
  %v4489 = vadd.f32 %v4460, %v4488
  %4490 = vmatmul.bf16.gmra.mxu0 %v3696
  %v4491 = vpop.f32.mrf.mxu0
  %v4492 = vadd.f32 %v4463, %v4491
  %v4493 = vpop.f32.mrf.mxu0
  %v4494 = vadd.f32 %v4465, %v4493
  %4495 = vmatmul.bf16.gmra.mxu0 %v4159
  %v4496 = vpop.f32.mrf.mxu0
  %v4497 = vadd.f32 %v4468, %v4496
  %v4498 = vpop.f32.mrf.mxu0
  %v4499 = vadd.f32 %v4470, %v4498
  %4500 = vmatmul.bf16.gmra.mxu0 %v4417
  %v4501 = vpop.f32.mrf.mxu0
  %v4502 = vadd.f32 %v4473, %v4501
  %v4503 = vpop.f32.mrf.mxu0
  %v4504 = vadd.f32 %v4475, %v4503
  %4505 = vdwg.mxu0
  %v4506 = vadd.f32 %v4248, %v4487
  %v4507 = vadd.f32 %v4249, %v4489
  %v4508 = vadd.f32 %v4250, %v4492
  %v4509 = vadd.f32 %v4251, %v4494
  %v4510 = vadd.f32 %v4252, %v4497
  %v4511 = vadd.f32 %v4253, %v4499
  %v4512 = vadd.f32 %v4254, %v4502
  %v4513 = vadd.f32 %v4255, %v4504
  %s4514 = scalar_lea.vmem %s3, 576
  %v4515 = vld [vmem:[%s4514] sm:$0xf]
  %v4516 = vld [vmem:[%s4514 + $0x4] sm:$0xf]
  %v4517 = vld [vmem:[%s4514 + $0x8] sm:$0xf]
  %v4518 = vld [vmem:[%s4514 + $0xc] sm:$0xf]
  %v4519 = vld [vmem:[%s4514 + $0x10] sm:$0xf]
  %v4520 = vld [vmem:[%s4514 + $0x14] sm:$0xf]
  %v4521 = vld [vmem:[%s4514 + $0x18] sm:$0xf]
  %v4522 = vld [vmem:[%s4514 + $0x1c] sm:$0xf]
  %v4523 = vld [vmem:[%s4514 + $0x20] sm:$0xf]
  %v4524 = vld [vmem:[%s4514 + $0x24] sm:$0xf]
  %v4525 = vld [vmem:[%s4514 + $0x28] sm:$0xf]
  %v4526 = vld [vmem:[%s4514 + $0x2c] sm:$0xf]
  %v4527 = vld [vmem:[%s4514 + $0x30] sm:$0xf]
  %v4528 = vld [vmem:[%s4514 + $0x34] sm:$0xf]
  %v4529 = vld [vmem:[%s4514 + $0x38] sm:$0xf]
  %v4530 = vld [vmem:[%s4514 + $0x3c] sm:$0xf]
  %v4531 = vld [vmem:[%s4514 + $0x40] sm:$0xf]
  %v4532 = vld [vmem:[%s4514 + $0x44] sm:$0xf]
  %v4533 = vld [vmem:[%s4514 + $0x48] sm:$0xf]
  %v4534 = vld [vmem:[%s4514 + $0x4c] sm:$0xf]
  %v4535 = vld [vmem:[%s4514 + $0x50] sm:$0xf]
  %v4536 = vld [vmem:[%s4514 + $0x54] sm:$0xf]
  %v4537 = vld [vmem:[%s4514 + $0x58] sm:$0xf]
  %v4538 = vld [vmem:[%s4514 + $0x5c] sm:$0xf]
  %v4539 = vld [vmem:[%s4514 + $0x60] sm:$0xf]
  %v4540 = vld [vmem:[%s4514 + $0x64] sm:$0xf]
  %v4541 = vld [vmem:[%s4514 + $0x68] sm:$0xf]
  %v4542 = vld [vmem:[%s4514 + $0x6c] sm:$0xf]
  %v4543 = vld [vmem:[%s4514 + $0x70] sm:$0xf]
  %v4544 = vld [vmem:[%s4514 + $0x74] sm:$0xf]
  %v4545 = vld [vmem:[%s4514 + $0x78] sm:$0xf]
  %v4546 = vld [vmem:[%s4514 + $0x7c] sm:$0xf]
  %v4547 = vld [vmem:[%s4514 + $0x80] sm:$0xf]
  %v4548 = vld [vmem:[%s4514 + $0x84] sm:$0xf]
  %v4549 = vld [vmem:[%s4514 + $0x88] sm:$0xf]
  %v4550 = vld [vmem:[%s4514 + $0x8c] sm:$0xf]
  %v4555 = vunpack.c.l.b16 %v3440
  %v4556 = vunpack.c.h.b16 %v3440
  %v4557 = vunpack.c.l.b16 %v3441
  %v4558 = vunpack.c.l.b16 %v3442
  %v4559 = vunpack.c.h.b16 %v3442
  %v4560 = vunpack.c.l.b16 %v3443
  %v4561 = vpack.c.b16 %v4558, %v4555
  %v4562 = vpack.c.b16 %v4559, %v4556
  %v4563 = vpack.c.b16 %v4560, %v4557
  %v4602 = vunpack.c.l.b16 %v4515
  %v4603 = vunpack.c.l.b16 %v4516
  %v4604 = vunpack.c.l.b16 %v4517
  %v4605 = vunpack.c.l.b16 %v4518
  %v4606 = vunpack.c.l.b16 %v4519
  %v4607 = vunpack.c.l.b16 %v4520
  %v4608 = vunpack.c.l.b16 %v4521
  %v4609 = vunpack.c.l.b16 %v4522
  %v4610 = vunpack.c.l.b16 %v4523
  %v4611 = vunpack.c.l.b16 %v4524
  %v4612 = vunpack.c.l.b16 %v4525
  %v4613 = vunpack.c.l.b16 %v4526
  %v4614 = vunpack.c.l.b16 %v4527
  %v4615 = vunpack.c.l.b16 %v4528
  %v4616 = vunpack.c.l.b16 %v4529
  %v4617 = vunpack.c.l.b16 %v4530
  %v4618 = vunpack.c.l.b16 %v4531
  %v4619 = vunpack.c.l.b16 %v4532
  %v4620 = vunpack.c.l.b16 %v4533
  %v4621 = vunpack.c.l.b16 %v4534
  %v4622 = vunpack.c.l.b16 %v4535
  %v4623 = vunpack.c.l.b16 %v4536
  %v4624 = vunpack.c.l.b16 %v4537
  %v4625 = vunpack.c.l.b16 %v4538
  %v4626 = vunpack.c.l.b16 %v4539
  %v4627 = vunpack.c.l.b16 %v4540
  %v4628 = vunpack.c.l.b16 %v4541
  %v4629 = vunpack.c.l.b16 %v4542
  %v4630 = vunpack.c.l.b16 %v4543
  %v4631 = vunpack.c.l.b16 %v4544
  %v4632 = vunpack.c.l.b16 %v4545
  %v4633 = vunpack.c.l.b16 %v4546
  %v4634 = vunpack.c.l.b16 %v4547
  %v4635 = vunpack.c.l.b16 %v4548
  %v4636 = vunpack.c.l.b16 %v4549
  %v4637 = vunpack.c.l.b16 %v4550
  %v4638 = vpack.c.b16 %v4603, %v4602
  %v4639 = vpack.c.b16 %v4605, %v4604
  %v4640 = vpack.c.b16 %v4607, %v4606
  %v4641 = vpack.c.b16 %v4609, %v4608
  %v4642 = vpack.c.b16 %v4611, %v4610
  %v4643 = vpack.c.b16 %v4613, %v4612
  %v4644 = vpack.c.b16 %v4615, %v4614
  %v4645 = vpack.c.b16 %v4617, %v4616
  %v4646 = vpack.c.b16 %v4619, %v4618
  %v4647 = vpack.c.b16 %v4621, %v4620
  %v4648 = vpack.c.b16 %v4623, %v4622
  %v4649 = vpack.c.b16 %v4625, %v4624
  %v4650 = vpack.c.b16 %v4627, %v4626
  %v4651 = vpack.c.b16 %v4629, %v4628
  %v4652 = vpack.c.b16 %v4631, %v4630
  %v4653 = vpack.c.b16 %v4633, %v4632
  %v4654 = vpack.c.b16 %v4635, %v4634
  %v4655 = vpack.c.b16 %v4637, %v4636
  %v4675 = vsel %vm3685, %v4563, 0
  %4677 = vmatpush.bf16.msra.mxu0 %v4645
  %4678 = vmatpush.bf16.msra.mxu0 %v4644
  %4679 = vmatpush.bf16.msra.mxu0 %v4643
  %4680 = vmatpush.bf16.msra.mxu0 %v4642
  %4681 = vmatpush.bf16.msra.mxu0 %v4641
  %4682 = vmatpush.bf16.msra.mxu0 %v4640
  %4683 = vmatpush.bf16.msra.mxu0 %v4639
  %4684 = vmatpush.bf16.msra.mxu0 %v4638
  %4685 = vmatmul.bf16.gmra.mxu0 %v3566
  %v4686 = vpop.f32.mrf.mxu0
  %v4687 = vadd.f32 0.0, %v4686
  %v4688 = vpop.f32.mrf.mxu0
  %v4689 = vadd.f32 0.0, %v4688
  %4690 = vmatmul.bf16.gmra.mxu0 %v4045
  %v4691 = vpop.f32.mrf.mxu0
  %v4692 = vadd.f32 0.0, %v4691
  %v4693 = vpop.f32.mrf.mxu0
  %v4694 = vadd.f32 0.0, %v4693
  %4695 = vmatmul.bf16.gmra.mxu0 %v4303
  %v4696 = vpop.f32.mrf.mxu0
  %v4697 = vadd.f32 0.0, %v4696
  %v4698 = vpop.f32.mrf.mxu0
  %v4699 = vadd.f32 0.0, %v4698
  %4700 = vmatmul.bf16.gmra.mxu0 %v4561
  %v4701 = vpop.f32.mrf.mxu0
  %v4702 = vadd.f32 0.0, %v4701
  %v4703 = vpop.f32.mrf.mxu0
  %v4704 = vadd.f32 0.0, %v4703
  %4705 = vdwg.mxu0
  %4706 = vmatpush.bf16.msra.mxu0 %v4653
  %4707 = vmatpush.bf16.msra.mxu0 %v4652
  %4708 = vmatpush.bf16.msra.mxu0 %v4651
  %4709 = vmatpush.bf16.msra.mxu0 %v4650
  %4710 = vmatpush.bf16.msra.mxu0 %v4649
  %4711 = vmatpush.bf16.msra.mxu0 %v4648
  %4712 = vmatpush.bf16.msra.mxu0 %v4647
  %4713 = vmatpush.bf16.msra.mxu0 %v4646
  %4714 = vmatmul.bf16.gmra.mxu0 %v3567
  %v4715 = vpop.f32.mrf.mxu0
  %v4716 = vadd.f32 %v4687, %v4715
  %v4717 = vpop.f32.mrf.mxu0
  %v4718 = vadd.f32 %v4689, %v4717
  %4719 = vmatmul.bf16.gmra.mxu0 %v4046
  %v4720 = vpop.f32.mrf.mxu0
  %v4721 = vadd.f32 %v4692, %v4720
  %v4722 = vpop.f32.mrf.mxu0
  %v4723 = vadd.f32 %v4694, %v4722
  %4724 = vmatmul.bf16.gmra.mxu0 %v4304
  %v4725 = vpop.f32.mrf.mxu0
  %v4726 = vadd.f32 %v4697, %v4725
  %v4727 = vpop.f32.mrf.mxu0
  %v4728 = vadd.f32 %v4699, %v4727
  %4729 = vmatmul.bf16.gmra.mxu0 %v4562
  %v4730 = vpop.f32.mrf.mxu0
  %v4731 = vadd.f32 %v4702, %v4730
  %v4732 = vpop.f32.mrf.mxu0
  %v4733 = vadd.f32 %v4704, %v4732
  %4734 = vdwg.mxu0
  %4735 = vmatpush.bf16.msra.mxu0 0
  %4736 = vmatpush.bf16.msra.mxu0 0
  %4737 = vmatpush.bf16.msra.mxu0 0
  %4738 = vmatpush.bf16.msra.mxu0 0
  %4739 = vmatpush.bf16.msra.mxu0 0
  %4740 = vmatpush.bf16.msra.mxu0 0
  %4741 = vmatpush.bf16.msra.mxu0 %v4655
  %4742 = vmatpush.bf16.msra.mxu0 %v4654
  %4743 = vmatmul.bf16.gmra.mxu0 %v3696
  %v4744 = vpop.f32.mrf.mxu0
  %v4745 = vadd.f32 %v4716, %v4744
  %v4746 = vpop.f32.mrf.mxu0
  %v4747 = vadd.f32 %v4718, %v4746
  %4748 = vmatmul.bf16.gmra.mxu0 %v4159
  %v4749 = vpop.f32.mrf.mxu0
  %v4750 = vadd.f32 %v4721, %v4749
  %v4751 = vpop.f32.mrf.mxu0
  %v4752 = vadd.f32 %v4723, %v4751
  %4753 = vmatmul.bf16.gmra.mxu0 %v4417
  %v4754 = vpop.f32.mrf.mxu0
  %v4755 = vadd.f32 %v4726, %v4754
  %v4756 = vpop.f32.mrf.mxu0
  %v4757 = vadd.f32 %v4728, %v4756
  %4758 = vmatmul.bf16.gmra.mxu0 %v4675
  %v4759 = vpop.f32.mrf.mxu0
  %v4760 = vadd.f32 %v4731, %v4759
  %v4761 = vpop.f32.mrf.mxu0
  %v4762 = vadd.f32 %v4733, %v4761
  %4763 = vdwg.mxu0
  %v4764 = vadd.f32 %v4506, %v4745
  %v4765 = vadd.f32 %v4507, %v4747
  %v4766 = vadd.f32 %v4508, %v4750
  %v4767 = vadd.f32 %v4509, %v4752
  %v4768 = vadd.f32 %v4510, %v4755
  %v4769 = vadd.f32 %v4511, %v4757
  %v4770 = vadd.f32 %v4512, %v4760
  %v4771 = vadd.f32 %v4513, %v4762
  %v4772 = vld [vmem:[%s4] sm:$0x1]
  %v4774 = vperm.slane %v4772, 0
  %v4776 = vadd.f32 %v4764, %v4774
  %v4777 = vadd.f32 %v4765, %v4774
  %v4778 = vadd.f32 %v4766, %v4774
  %v4779 = vadd.f32 %v4767, %v4774
  %v4780 = vadd.f32 %v4768, %v4774
  %v4781 = vadd.f32 %v4769, %v4774
  %v4782 = vadd.f32 %v4770, %v4774
  %v4783 = vadd.f32 %v4771, %v4774
  %v4784 = vmax.f32 %v4776, 0.0
  %v4785 = vmax.f32 %v4777, 0.0
  %v4786 = vmax.f32 %v4778, 0.0
  %v4787 = vmax.f32 %v4779, 0.0
  %v4788 = vmax.f32 %v4780, 0.0
  %v4789 = vmax.f32 %v4781, 0.0
  %v4790 = vmax.f32 %v4782, 0.0
  %v4791 = vmax.f32 %v4783, 0.0
  %v4792 = vpack.c.bf16 %v4784, %v4784
  %v4793 = vpack.c.bf16 %v4785, %v4785
  %v4794 = vpack.c.bf16 %v4786, %v4786
  %v4795 = vpack.c.bf16 %v4787, %v4787
  %v4796 = vpack.c.bf16 %v4788, %v4788
  %v4797 = vpack.c.bf16 %v4789, %v4789
  %v4798 = vpack.c.bf16 %v4790, %v4790
  %v4799 = vpack.c.bf16 %v4791, %v4791
  %v4800 = vld [vmem:[%s5] sm:$0xf]
  %v4801 = vld [vmem:[%s5 + $0x4] sm:$0xf]
  %v4802 = vld [vmem:[%s5 + $0x8] sm:$0xf]
  %v4803 = vld [vmem:[%s5 + $0xc] sm:$0xf]
  %v4804 = vld [vmem:[%s5 + $0x10] sm:$0xf]
  %v4805 = vld [vmem:[%s5 + $0x14] sm:$0xf]
  %v4806 = vld [vmem:[%s5 + $0x18] sm:$0xf]
  %v4807 = vld [vmem:[%s5 + $0x1c] sm:$0xf]
  %v4808 = vld [vmem:[%s5 + $0x20] sm:$0xf]
  %v4809 = vld [vmem:[%s5 + $0x24] sm:$0xf]
  %v4810 = vld [vmem:[%s5 + $0x28] sm:$0xf]
  %v4811 = vld [vmem:[%s5 + $0x2c] sm:$0xf]
  %s4812 = scalar_lea.vmem %s5, 48
  %v4813 = vld [vmem:[%s4812] sm:$0xf]
  %v4814 = vld [vmem:[%s4812 + $0x4] sm:$0xf]
  %v4815 = vld [vmem:[%s4812 + $0x8] sm:$0xf]
  %v4816 = vld [vmem:[%s4812 + $0xc] sm:$0xf]
  %v4817 = vld [vmem:[%s4812 + $0x10] sm:$0xf]
  %v4818 = vld [vmem:[%s4812 + $0x14] sm:$0xf]
  %v4819 = vld [vmem:[%s4812 + $0x18] sm:$0xf]
  %v4820 = vld [vmem:[%s4812 + $0x1c] sm:$0xf]
  %v4821 = vld [vmem:[%s4812 + $0x20] sm:$0xf]
  %v4822 = vld [vmem:[%s4812 + $0x24] sm:$0xf]
  %v4823 = vld [vmem:[%s4812 + $0x28] sm:$0xf]
  %v4824 = vld [vmem:[%s4812 + $0x2c] sm:$0xf]
  %v4827 = vunpack.c.l.b16 %v4794
  %v4828 = vunpack.c.l.b16 %v4795
  %v4829 = vpack.c.b16 %v4828, %v4827
  %v4842 = vunpack.c.l.b16 %v4813
  %v4843 = vunpack.c.l.b16 %v4814
  %v4844 = vunpack.c.l.b16 %v4815
  %v4845 = vunpack.c.l.b16 %v4816
  %v4846 = vunpack.c.l.b16 %v4817
  %v4847 = vunpack.c.l.b16 %v4818
  %v4848 = vunpack.c.l.b16 %v4819
  %v4849 = vunpack.c.l.b16 %v4820
  %v4850 = vunpack.c.l.b16 %v4821
  %v4851 = vunpack.c.l.b16 %v4822
  %v4852 = vunpack.c.l.b16 %v4823
  %v4853 = vunpack.c.l.b16 %v4824
  %v4854 = vpack.c.b16 %v4843, %v4842
  %v4855 = vpack.c.b16 %v4845, %v4844
  %v4856 = vpack.c.b16 %v4847, %v4846
  %v4857 = vpack.c.b16 %v4849, %v4848
  %v4858 = vpack.c.b16 %v4851, %v4850
  %v4859 = vpack.c.b16 %v4853, %v4852
  %vm4866 = vcmask 785408
  %v4868 = vsel %vm4866, %v4829, 0
  %4870 = vmatpush.bf16.msra.mxu0 0
  %4871 = vmatpush.bf16.msra.mxu0 0
  %4872 = vmatpush.bf16.msra.mxu0 %v4859
  %4873 = vmatpush.bf16.msra.mxu0 %v4858
  %4874 = vmatpush.bf16.msra.mxu0 %v4857
  %4875 = vmatpush.bf16.msra.mxu0 %v4856
  %4876 = vmatpush.bf16.msra.mxu0 %v4855
  %4877 = vmatpush.bf16.msra.mxu0 %v4854
  %4878 = vmatmul.bf16.gmra.mxu0 %v4868
  %v4879 = vpop.f32.mrf.mxu0
  %v4880 = vadd.f32 0.0, %v4879
  %v4881 = vpop.f32.mrf.mxu0
  %v4882 = vadd.f32 0.0, %v4881
  %4883 = vdwg.mxu0
  %v4886 = vunpack.c.l.b16 %v4792
  %v4887 = vunpack.c.l.b16 %v4793
  %v4888 = vpack.c.b16 %v4887, %v4886
  %v4901 = vunpack.c.l.b16 %v4800
  %v4902 = vunpack.c.l.b16 %v4801
  %v4903 = vunpack.c.l.b16 %v4802
  %v4904 = vunpack.c.l.b16 %v4803
  %v4905 = vunpack.c.l.b16 %v4804
  %v4906 = vunpack.c.l.b16 %v4805
  %v4907 = vunpack.c.l.b16 %v4806
  %v4908 = vunpack.c.l.b16 %v4807
  %v4909 = vunpack.c.l.b16 %v4808
  %v4910 = vunpack.c.l.b16 %v4809
  %v4911 = vunpack.c.l.b16 %v4810
  %v4912 = vunpack.c.l.b16 %v4811
  %v4913 = vpack.c.b16 %v4902, %v4901
  %v4914 = vpack.c.b16 %v4904, %v4903
  %v4915 = vpack.c.b16 %v4906, %v4905
  %v4916 = vpack.c.b16 %v4908, %v4907
  %v4917 = vpack.c.b16 %v4910, %v4909
  %v4918 = vpack.c.b16 %v4912, %v4911
  %v4926 = vsel %vm4866, %v4888, 0
  %4928 = vmatpush.bf16.msra.mxu0 0
  %4929 = vmatpush.bf16.msra.mxu0 0
  %4930 = vmatpush.bf16.msra.mxu0 %v4918
  %4931 = vmatpush.bf16.msra.mxu0 %v4917
  %4932 = vmatpush.bf16.msra.mxu0 %v4916
  %4933 = vmatpush.bf16.msra.mxu0 %v4915
  %4934 = vmatpush.bf16.msra.mxu0 %v4914
  %4935 = vmatpush.bf16.msra.mxu0 %v4913
  %4936 = vmatmul.bf16.gmra.mxu0 %v4926
  %v4937 = vpop.f32.mrf.mxu0
  %v4938 = vadd.f32 %v4880, %v4937
  %v4939 = vpop.f32.mrf.mxu0
  %v4940 = vadd.f32 %v4882, %v4939
  %4941 = vdwg.mxu0
  %s4942 = scalar_lea.vmem %s5, 96
  %v4943 = vld [vmem:[%s4942] sm:$0xf]
  %v4944 = vld [vmem:[%s4942 + $0x4] sm:$0xf]
  %v4945 = vld [vmem:[%s4942 + $0x8] sm:$0xf]
  %v4946 = vld [vmem:[%s4942 + $0xc] sm:$0xf]
  %v4947 = vld [vmem:[%s4942 + $0x10] sm:$0xf]
  %v4948 = vld [vmem:[%s4942 + $0x14] sm:$0xf]
  %v4949 = vld [vmem:[%s4942 + $0x18] sm:$0xf]
  %v4950 = vld [vmem:[%s4942 + $0x1c] sm:$0xf]
  %v4951 = vld [vmem:[%s4942 + $0x20] sm:$0xf]
  %v4952 = vld [vmem:[%s4942 + $0x24] sm:$0xf]
  %v4953 = vld [vmem:[%s4942 + $0x28] sm:$0xf]
  %v4954 = vld [vmem:[%s4942 + $0x2c] sm:$0xf]
  %v4957 = vunpack.c.l.b16 %v4796
  %v4958 = vunpack.c.l.b16 %v4797
  %v4959 = vpack.c.b16 %v4958, %v4957
  %v4972 = vunpack.c.l.b16 %v4943
  %v4973 = vunpack.c.l.b16 %v4944
  %v4974 = vunpack.c.l.b16 %v4945
  %v4975 = vunpack.c.l.b16 %v4946
  %v4976 = vunpack.c.l.b16 %v4947
  %v4977 = vunpack.c.l.b16 %v4948
  %v4978 = vunpack.c.l.b16 %v4949
  %v4979 = vunpack.c.l.b16 %v4950
  %v4980 = vunpack.c.l.b16 %v4951
  %v4981 = vunpack.c.l.b16 %v4952
  %v4982 = vunpack.c.l.b16 %v4953
  %v4983 = vunpack.c.l.b16 %v4954
  %v4984 = vpack.c.b16 %v4973, %v4972
  %v4985 = vpack.c.b16 %v4975, %v4974
  %v4986 = vpack.c.b16 %v4977, %v4976
  %v4987 = vpack.c.b16 %v4979, %v4978
  %v4988 = vpack.c.b16 %v4981, %v4980
  %v4989 = vpack.c.b16 %v4983, %v4982
  %v4997 = vsel %vm4866, %v4959, 0
  %4999 = vmatpush.bf16.msra.mxu0 0
  %5000 = vmatpush.bf16.msra.mxu0 0
  %5001 = vmatpush.bf16.msra.mxu0 %v4989
  %5002 = vmatpush.bf16.msra.mxu0 %v4988
  %5003 = vmatpush.bf16.msra.mxu0 %v4987
  %5004 = vmatpush.bf16.msra.mxu0 %v4986
  %5005 = vmatpush.bf16.msra.mxu0 %v4985
  %5006 = vmatpush.bf16.msra.mxu0 %v4984
  %5007 = vmatmul.bf16.gmra.mxu0 %v4997
  %v5008 = vpop.f32.mrf.mxu0
  %v5009 = vadd.f32 0.0, %v5008
  %v5010 = vpop.f32.mrf.mxu0
  %v5011 = vadd.f32 0.0, %v5010
  %5012 = vdwg.mxu0
  %v5013 = vadd.f32 %v4938, %v5009
  %v5014 = vadd.f32 %v4940, %v5011
  %s5015 = scalar_lea.vmem %s5, 144
  %v5016 = vld [vmem:[%s5015] sm:$0xf]
  %v5017 = vld [vmem:[%s5015 + $0x4] sm:$0xf]
  %v5018 = vld [vmem:[%s5015 + $0x8] sm:$0xf]
  %v5019 = vld [vmem:[%s5015 + $0xc] sm:$0xf]
  %v5020 = vld [vmem:[%s5015 + $0x10] sm:$0xf]
  %v5021 = vld [vmem:[%s5015 + $0x14] sm:$0xf]
  %v5022 = vld [vmem:[%s5015 + $0x18] sm:$0xf]
  %v5023 = vld [vmem:[%s5015 + $0x1c] sm:$0xf]
  %v5024 = vld [vmem:[%s5015 + $0x20] sm:$0xf]
  %v5025 = vld [vmem:[%s5015 + $0x24] sm:$0xf]
  %v5026 = vld [vmem:[%s5015 + $0x28] sm:$0xf]
  %v5027 = vld [vmem:[%s5015 + $0x2c] sm:$0xf]
  %v5030 = vunpack.c.l.b16 %v4798
  %v5031 = vunpack.c.l.b16 %v4799
  %v5032 = vpack.c.b16 %v5031, %v5030
  %v5045 = vunpack.c.l.b16 %v5016
  %v5046 = vunpack.c.l.b16 %v5017
  %v5047 = vunpack.c.l.b16 %v5018
  %v5048 = vunpack.c.l.b16 %v5019
  %v5049 = vunpack.c.l.b16 %v5020
  %v5050 = vunpack.c.l.b16 %v5021
  %v5051 = vunpack.c.l.b16 %v5022
  %v5052 = vunpack.c.l.b16 %v5023
  %v5053 = vunpack.c.l.b16 %v5024
  %v5054 = vunpack.c.l.b16 %v5025
  %v5055 = vunpack.c.l.b16 %v5026
  %v5056 = vunpack.c.l.b16 %v5027
  %v5057 = vpack.c.b16 %v5046, %v5045
  %v5058 = vpack.c.b16 %v5048, %v5047
  %v5059 = vpack.c.b16 %v5050, %v5049
  %v5060 = vpack.c.b16 %v5052, %v5051
  %v5061 = vpack.c.b16 %v5054, %v5053
  %v5062 = vpack.c.b16 %v5056, %v5055
  %v5070 = vsel %vm4866, %v5032, 0
  %5072 = vmatpush.bf16.msra.mxu0 0
  %5073 = vmatpush.bf16.msra.mxu0 0
  %5074 = vmatpush.bf16.msra.mxu0 %v5062
  %5075 = vmatpush.bf16.msra.mxu0 %v5061
  %5076 = vmatpush.bf16.msra.mxu0 %v5060
  %5077 = vmatpush.bf16.msra.mxu0 %v5059
  %5078 = vmatpush.bf16.msra.mxu0 %v5058
  %5079 = vmatpush.bf16.msra.mxu0 %v5057
  %5080 = vmatmul.bf16.gmra.mxu0 %v5070
  %v5081 = vpop.f32.mrf.mxu0
  %v5082 = vadd.f32 0.0, %v5081
  %v5083 = vpop.f32.mrf.mxu0
  %v5084 = vadd.f32 0.0, %v5083
  %5085 = vdwg.mxu0
  %v5086 = vadd.f32 %v5013, %v5082
  %v5087 = vadd.f32 %v5014, %v5084
  %v5088 = vld [vmem:[%s6] sm:$0x1]
  %v5090 = vperm.slane %v5088, 0
  %v5092 = vadd.f32 %v5086, %v5090
  %v5093 = vadd.f32 %v5087, %v5090
  %v5094 = vsub.f32 0.0, %v5092
  %v5095 = vsub.f32 0.0, %v5093
  %v5096 = vmul.f32 %v5094, 1.442695
  %v5097 = vpow.pop %v5096
  %v5098 = vmul.f32 %v5095, 1.442695
  %v5099 = vpow.pop %v5098
  %v5100 = vadd.f32 %v5097, 1.0
  %v5101 = vadd.f32 %v5099, 1.0
  %v5102 = vrcp.pop %v5100
  %v5103 = vrcp.pop %v5101
  %v5104 = vpack.c.bf16 %v5103, %v5102
  %v5105 = vld [vmem:[%s7] sm:$0xf]
  %v5106 = vld [vmem:[%s7 + $0x4] sm:$0xf]
  %v5107 = vld [vmem:[%s7 + $0x8] sm:$0xf]
  %v5108 = vld [vmem:[%s7 + $0xc] sm:$0xf]
  %v5109 = vld [vmem:[%s7 + $0x10] sm:$0xf]
  %v5110 = vld [vmem:[%s7 + $0x14] sm:$0xf]
  %v5111 = vld [vmem:[%s8] sm:$0x1]
  %v5113 = vperm.slane %v5111, 0
  %v5121 = vunpack.c.l.b16 %v5105
  %v5122 = vunpack.c.l.b16 %v5106
  %v5123 = vunpack.c.l.b16 %v5107
  %v5124 = vunpack.c.l.b16 %v5108
  %v5125 = vunpack.c.l.b16 %v5109
  %v5126 = vunpack.c.l.b16 %v5110
  %v5127 = vpack.c.b16 %v5122, %v5121
  %v5128 = vpack.c.b16 %v5124, %v5123
  %v5129 = vpack.c.b16 %v5126, %v5125
  %vm5133 = vcmask 392192
  %v5135 = vsel %vm5133, %v5104, 0
  %5137 = vmatpush.bf16.msra.mxu0 0
  %5138 = vmatpush.bf16.msra.mxu0 0
  %5139 = vmatpush.bf16.msra.mxu0 0
  %5140 = vmatpush.bf16.msra.mxu0 0
  %5141 = vmatpush.bf16.msra.mxu0 0
  %5142 = vmatpush.bf16.msra.mxu0 %v5129
  %5143 = vmatpush.bf16.msra.mxu0 %v5128
  %5144 = vmatpush.bf16.msra.mxu0 %v5127
  %5145 = vmatmul.bf16.gmra.mxu0 %v5135
  %v5146 = vpop.f32.mrf.mxu0
  %v5147 = vadd.f32 %v5113, %v5146
  %v5148 = vpop.f32.mrf.mxu0
  %v5149 = vadd.f32 %v5113, %v5148
  %5150 = vdwg.mxu0
  %5151 = vmax.xlane.f32.xlu0 %v5147
  %v5152 = vpop.xlane.xlu0 %5151
  %5153 = vmax.xlane.f32.xlu0 %v5149
  %v5154 = vpop.xlane.xlu0 %5153
  %v5155 = vsub.f32 %v5147, %v5152
  %v5156 = vsub.f32 %v5149, %v5154
  %v5157 = vmul.f32 %v5155, 1.442695
  %v5158 = vpow.pop %v5157
  %v5159 = vmul.f32 %v5156, 1.442695
  %v5160 = vpow.pop %v5159
  %5161 = vadd.xlane.f32.xlu0 %v5158
  %v5162 = vpop.xlane.xlu0 %5161
  %5163 = vadd.xlane.f32.xlu0 %v5160
  %v5164 = vpop.xlane.xlu0 %5163
  %v5165 = vlog2.pop %v5162
  %v5166 = vmul.f32 %v5165, 0.6931472
  %v5167 = vlog2.pop %v5164
  %v5168 = vmul.f32 %v5167, 0.6931472
  %v5169 = vsub.f32 %v5155, %v5166
  %v5170 = vsub.f32 %v5156, %v5168
  %5171 = vst [vmem:[%s9] sm:$0xff] %v5169
  %5172 = vst [vmem:[%s9 + $0x8] sm:$0xff] %v5170
  // Predicated region
  $region38: #{convnet_forward.1} parent=0 // pred_check
    _
  $region39: #{convnet_forward.1} parent=0 // pred_check_branch
    %5174 = sbr.rel (0) target = $region41
  $region40: #{convnet_forward.1} parent=0 // pred_region
    _
  $region41: #{convnet_forward.1} parent=0 // pred_fallthru
    _
  // Predicated region
  $region42: #{convnet_forward.1} parent=0 // pred_check
    _
  $region43: #{convnet_forward.1} parent=0 // pred_check_branch
    %5176 = sbr.rel (0) target = $region45
  $region44: #{convnet_forward.1} parent=0 // pred_region
    _
  $region45: #{convnet_forward.1} parent=0 // pred_fallthru
    _

</llo_original>
